<compile_context>
chip_gen: v7x
topology: tpu7x:2x2x1
jax: 0.10.0
libtpu: 0.0.40
codegen_flags: <defaults>
</compile_context>

<pallas_src>
import jax
import jax.numpy as jnp
from jax.experimental import pallas as pl
from jax.experimental.pallas import tpu as pltpu


def _nonlin(x):
    # relu(tanh(x))
    return jnp.maximum(jnp.tanh(x), 0.0)


def ctrnn_kernel(oma_ref, h0_ref, v_ref, w_cat_ref, out_ref):
    """Single invocation: unrolled recurrence over T, everything VMEM-resident.

    oma_ref:   (1,)       SMEM   -- (1 - alpha)
    h0_ref:    (N, H)     VMEM   -- fc(h0_data) initial hidden state
    v_ref:     (T, N, H)  VMEM   -- alpha * (input_ts[t] @ W_in + b_rec); v[0] unused
    w_cat_ref: (H, H+O)   VMEM   -- [alpha * W_rec | W_out]
    out_ref:   (T, N, O)  VMEM   -- nonlin(h[t]) @ W_out
    """
    T = out_ref.shape[0]
    H = h0_ref.shape[1]

    one_minus_alpha = oma_ref[0]          # scalar, loaded once from SMEM
    w_cat = w_cat_ref[...]                # (H, H+O), loaded once
    h = h0_ref[...]                       # (N, H) loop-carried value

    # Statically unrolled timestep loop (T is small and compile-time constant).
    for t in range(T):
        nh = _nonlin(h)                   # computed once per step, shared below
        z = jnp.dot(nh, w_cat, preferred_element_type=jnp.float32)  # (N, H+O)
        out_ref[t] = z[:, H:]             # output for timestep t
        if t + 1 < T:
            # h[t+1] = (1-a)*h[t] + nonlin(h[t]) @ (a*W_rec) + a*(u[t+1] + b_rec)
            h = one_minus_alpha * h + z[:, :H] + v_ref[t + 1]


def ctrnn_forward(h0_data, input_ts, params):
    """h0_data: (1, N, h0_data_dim); input_ts: (T, N, input_dim) -> (T, N, output_dim)."""
    T, N, _ = input_ts.shape
    H = params["W_rec"].shape[0]
    O = params["W_out"].shape[1]

    alpha = params["alpha"].astype(jnp.float32)[0]

    # Glue: tiny input-side projections + loop-invariant precomputation.
    h0 = (h0_data[0] @ params["fc_w"].T + params["fc_b"]).astype(jnp.float32)  # (N, H)
    u = jnp.einsum("tnd,dh->tnh", input_ts, params["W_in"])                    # (T, N, H)
    v = (alpha * (u + params["b_rec"])).astype(jnp.float32)                    # (T, N, H)
    w_cat = jnp.concatenate(
        [alpha * params["W_rec"], params["W_out"]], axis=1).astype(jnp.float32)  # (H, H+O)
    one_minus_alpha = jnp.reshape(1.0 - alpha, (1,)).astype(jnp.float32)

    out = pl.pallas_call(
        ctrnn_kernel,
        out_shape=jax.ShapeDtypeStruct((T, N, O), jnp.float32),
        in_specs=[
            pl.BlockSpec(memory_space=pltpu.MemorySpace.SMEM),   # (1 - alpha) scalar
            pl.BlockSpec(memory_space=pltpu.MemorySpace.VMEM),   # h0
            pl.BlockSpec(memory_space=pltpu.MemorySpace.VMEM),   # v
            pl.BlockSpec(memory_space=pltpu.MemorySpace.VMEM),   # W_cat
        ],
        out_specs=pl.BlockSpec(memory_space=pltpu.MemorySpace.VMEM),
    )(one_minus_alpha, h0, v, w_cat)
    return out


def ctrnn_reference(h0_data, input_ts, params):
    """Pure-JAX reference mirroring the PyTorch forward."""
    alpha = params["alpha"][0]
    h0 = h0_data[0] @ params["fc_w"].T + params["fc_b"]

    def step(h, x):
        h_new = (1.0 - alpha) * h + alpha * (
            _nonlin(h) @ params["W_rec"] + x @ params["W_in"] + params["b_rec"])
        return h_new, h_new

    _, hs = jax.lax.scan(step, h0, input_ts[1:])
    h_all = jnp.concatenate([h0[None], hs], axis=0)
    return _nonlin(h_all) @ params["W_out"]


def init_params(key, input_dim, h0_data_dim, hidden_dim, output_dim, g_init=1.3):
    sig = g_init / hidden_dim ** 0.5
    ks = jax.random.split(key, 6)
    # W_h0 / b_h0 exist in the torch module but are unused in forward; omitted.
    params = {
        "W_in": jnp.zeros((input_dim, hidden_dim), jnp.float32),          # constant_(0)
        "W_rec": sig * jax.random.normal(ks[0], (hidden_dim, hidden_dim), jnp.float32),
        "b_rec": sig * jax.random.normal(ks[1], (hidden_dim,), jnp.float32),
        "W_out": sig * jax.random.normal(ks[2], (hidden_dim, output_dim), jnp.float32),
        "alpha": jnp.full((1,), 0.05, jnp.float32),
        "fc_w": sig * jax.random.normal(ks[3], (hidden_dim, h0_data_dim), jnp.float32),
        # nn.Linear default bias init: U(-1/sqrt(fan_in), 1/sqrt(fan_in))
        "fc_b": jax.random.uniform(ks[4], (hidden_dim,), jnp.float32,
                                   minval=-1.0 / h0_data_dim ** 0.5,
                                   maxval=1.0 / h0_data_dim ** 0.5),
    }
    return params


if __name__ == "__main__":
    # Make the pure-JAX reference use true f32 matmuls so the tolerance check
    # measures kernel error, not XLA default-precision error.
    jax.config.update("jax_default_matmul_precision", "highest")

    input_dim, h0_data_dim, hidden_dim, output_dim = 1, 2, 32, 2
    T, N = 8, 8

    key = jax.random.PRNGKey(0)
    k_p, k_h0, k_x = jax.random.split(key, 3)

    params = init_params(k_p, input_dim, h0_data_dim, hidden_dim, output_dim)
    h0_data = jax.random.normal(k_h0, (1, N, h0_data_dim), jnp.float32)
    input_ts = jax.random.normal(k_x, (T, N, input_dim), jnp.float32)

    out = ctrnn_forward(h0_data, input_ts, params)
    out = jax.block_until_ready(out)

    ref = ctrnn_reference(h0_data, input_ts, params)
    assert out.shape == (T, N, output_dim)
    assert jnp.allclose(out, ref, rtol=1e-4, atol=1e-4), "mismatch vs reference"

    print("KERNEL_OK")
</pallas_src>

<mosaic_0001>
module attributes {stable_mosaic.version = 11 : i64} {
  func.func @ctrnn_kernel(%arg0: memref<1xf32, #tpu.memory_space<smem>>, %arg1: memref<8x32xf32, #tpu.memory_space<vmem>>, %arg2: memref<8x8x32xf32, #tpu.memory_space<vmem>>, %arg3: memref<32x34xf32, #tpu.memory_space<vmem>>, %arg4: memref<8x8x2xf32, #tpu.memory_space<vmem>>) attributes {dimension_semantics = [], scalar_prefetch = 0 : i64, scratch_operands = 0 : i64, tpu.core_type = #tpu.core_type<tc>} {
    %c0 = arith.constant 0 : index
    %0 = memref.load %arg0[%c0] : memref<1xf32, #tpu.memory_space<smem>>
    %c0_0 = arith.constant 0 : index
    %c0_1 = arith.constant 0 : index
    %1 = vector.load %arg3[%c0_0, %c0_1] : memref<32x34xf32, #tpu.memory_space<vmem>>, vector<32x34xf32>
    %c0_2 = arith.constant 0 : index
    %c0_3 = arith.constant 0 : index
    %2 = vector.load %arg1[%c0_2, %c0_3] : memref<8x32xf32, #tpu.memory_space<vmem>>, vector<8x32xf32>
    %3 = math.tanh %2 : vector<8x32xf32>
    %cst = arith.constant 0.000000e+00 : f32
    %4 = vector.broadcast %cst : f32 to vector<8x32xf32>
    %5 = arith.maximumf %3, %4 : vector<8x32xf32>
    %cst_4 = arith.constant dense<0.000000e+00> : vector<8x34xf32>
    %6 = tpu.matmul %5, %1, %cst_4 {dimension_numbers = #tpu.dot_dimension_numbers<[1], [0], [0], [1], [0, 0, 1, 1], [], []>, precision = #tpu.contract_precision<fp32>} : vector<8x32xf32>, vector<32x34xf32>, vector<8x34xf32> -> vector<8x34xf32>
    %7 = vector.extract_strided_slice %6 {offsets = [0, 32], sizes = [8, 2], strides = [1, 1]} : vector<8x34xf32> to vector<8x2xf32>
    %c0_5 = arith.constant 0 : index
    %c0_6 = arith.constant 0 : index
    %c0_7 = arith.constant 0 : index
    %8 = vector.load %arg4[%c0_5, %c0_6, %c0_7] : memref<8x8x2xf32, #tpu.memory_space<vmem>>, vector<1x8x2xf32>
    %9 = vector.shape_cast %8 : vector<1x8x2xf32> to vector<8x2xf32>
    %10 = vector.shape_cast %7 : vector<8x2xf32> to vector<1x8x2xf32>
    tpu.vector_store %arg4[%c0_5, %c0_6, %c0_7], %10 {strides = array<i32>} : memref<8x8x2xf32, #tpu.memory_space<vmem>>, vector<1x8x2xf32>,
    %11 = vector.broadcast %0 : f32 to vector<8x32xf32>
    %12 = arith.mulf %11, %2 : vector<8x32xf32>
    %13 = vector.extract_strided_slice %6 {offsets = [0, 0], sizes = [8, 32], strides = [1, 1]} : vector<8x34xf32> to vector<8x32xf32>
    %14 = arith.addf %12, %13 : vector<8x32xf32>
    %c1 = arith.constant 1 : index
    %c0_8 = arith.constant 0 : index
    %c0_9 = arith.constant 0 : index
    %15 = vector.load %arg2[%c1, %c0_8, %c0_9] : memref<8x8x32xf32, #tpu.memory_space<vmem>>, vector<1x8x32xf32>
    %16 = vector.shape_cast %15 : vector<1x8x32xf32> to vector<8x32xf32>
    %17 = arith.addf %14, %16 : vector<8x32xf32>
    %18 = math.tanh %17 : vector<8x32xf32>
    %cst_10 = arith.constant 0.000000e+00 : f32
    %19 = vector.broadcast %cst_10 : f32 to vector<8x32xf32>
    %20 = arith.maximumf %18, %19 : vector<8x32xf32>
    %cst_11 = arith.constant dense<0.000000e+00> : vector<8x34xf32>
    %21 = tpu.matmul %20, %1, %cst_11 {dimension_numbers = #tpu.dot_dimension_numbers<[1], [0], [0], [1], [0, 0, 1, 1], [], []>, precision = #tpu.contract_precision<fp32>} : vector<8x32xf32>, vector<32x34xf32>, vector<8x34xf32> -> vector<8x34xf32>
    %22 = vector.extract_strided_slice %21 {offsets = [0, 32], sizes = [8, 2], strides = [1, 1]} : vector<8x34xf32> to vector<8x2xf32>
    %c1_12 = arith.constant 1 : index
    %c0_13 = arith.constant 0 : index
    %c0_14 = arith.constant 0 : index
    %23 = vector.load %arg4[%c1_12, %c0_13, %c0_14] : memref<8x8x2xf32, #tpu.memory_space<vmem>>, vector<1x8x2xf32>
    %24 = vector.shape_cast %23 : vector<1x8x2xf32> to vector<8x2xf32>
    %25 = vector.shape_cast %22 : vector<8x2xf32> to vector<1x8x2xf32>
    tpu.vector_store %arg4[%c1_12, %c0_13, %c0_14], %25 {strides = array<i32>} : memref<8x8x2xf32, #tpu.memory_space<vmem>>, vector<1x8x2xf32>,
    %26 = vector.broadcast %0 : f32 to vector<8x32xf32>
    %27 = arith.mulf %26, %17 : vector<8x32xf32>
    %28 = vector.extract_strided_slice %21 {offsets = [0, 0], sizes = [8, 32], strides = [1, 1]} : vector<8x34xf32> to vector<8x32xf32>
    %29 = arith.addf %27, %28 : vector<8x32xf32>
    %c2 = arith.constant 2 : index
    %c0_15 = arith.constant 0 : index
    %c0_16 = arith.constant 0 : index
    %30 = vector.load %arg2[%c2, %c0_15, %c0_16] : memref<8x8x32xf32, #tpu.memory_space<vmem>>, vector<1x8x32xf32>
    %31 = vector.shape_cast %30 : vector<1x8x32xf32> to vector<8x32xf32>
    %32 = arith.addf %29, %31 : vector<8x32xf32>
    %33 = math.tanh %32 : vector<8x32xf32>
    %cst_17 = arith.constant 0.000000e+00 : f32
    %34 = vector.broadcast %cst_17 : f32 to vector<8x32xf32>
    %35 = arith.maximumf %33, %34 : vector<8x32xf32>
    %cst_18 = arith.constant dense<0.000000e+00> : vector<8x34xf32>
    %36 = tpu.matmul %35, %1, %cst_18 {dimension_numbers = #tpu.dot_dimension_numbers<[1], [0], [0], [1], [0, 0, 1, 1], [], []>, precision = #tpu.contract_precision<fp32>} : vector<8x32xf32>, vector<32x34xf32>, vector<8x34xf32> -> vector<8x34xf32>
    %37 = vector.extract_strided_slice %36 {offsets = [0, 32], sizes = [8, 2], strides = [1, 1]} : vector<8x34xf32> to vector<8x2xf32>
    %c2_19 = arith.constant 2 : index
    %c0_20 = arith.constant 0 : index
    %c0_21 = arith.constant 0 : index
    %38 = vector.load %arg4[%c2_19, %c0_20, %c0_21] : memref<8x8x2xf32, #tpu.memory_space<vmem>>, vector<1x8x2xf32>
    %39 = vector.shape_cast %38 : vector<1x8x2xf32> to vector<8x2xf32>
    %40 = vector.shape_cast %37 : vector<8x2xf32> to vector<1x8x2xf32>
    tpu.vector_store %arg4[%c2_19, %c0_20, %c0_21], %40 {strides = array<i32>} : memref<8x8x2xf32, #tpu.memory_space<vmem>>, vector<1x8x2xf32>,
    %41 = vector.broadcast %0 : f32 to vector<8x32xf32>
    %42 = arith.mulf %41, %32 : vector<8x32xf32>
    %43 = vector.extract_strided_slice %36 {offsets = [0, 0], sizes = [8, 32], strides = [1, 1]} : vector<8x34xf32> to vector<8x32xf32>
    %44 = arith.addf %42, %43 : vector<8x32xf32>
    %c3 = arith.constant 3 : index
    %c0_22 = arith.constant 0 : index
    %c0_23 = arith.constant 0 : index
    %45 = vector.load %arg2[%c3, %c0_22, %c0_23] : memref<8x8x32xf32, #tpu.memory_space<vmem>>, vector<1x8x32xf32>
    %46 = vector.shape_cast %45 : vector<1x8x32xf32> to vector<8x32xf32>
    %47 = arith.addf %44, %46 : vector<8x32xf32>
    %48 = math.tanh %47 : vector<8x32xf32>
    %cst_24 = arith.constant 0.000000e+00 : f32
    %49 = vector.broadcast %cst_24 : f32 to vector<8x32xf32>
    %50 = arith.maximumf %48, %49 : vector<8x32xf32>
    %cst_25 = arith.constant dense<0.000000e+00> : vector<8x34xf32>
    %51 = tpu.matmul %50, %1, %cst_25 {dimension_numbers = #tpu.dot_dimension_numbers<[1], [0], [0], [1], [0, 0, 1, 1], [], []>, precision = #tpu.contract_precision<fp32>} : vector<8x32xf32>, vector<32x34xf32>, vector<8x34xf32> -> vector<8x34xf32>
    %52 = vector.extract_strided_slice %51 {offsets = [0, 32], sizes = [8, 2], strides = [1, 1]} : vector<8x34xf32> to vector<8x2xf32>
    %c3_26 = arith.constant 3 : index
    %c0_27 = arith.constant 0 : index
    %c0_28 = arith.constant 0 : index
    %53 = vector.load %arg4[%c3_26, %c0_27, %c0_28] : memref<8x8x2xf32, #tpu.memory_space<vmem>>, vector<1x8x2xf32>
    %54 = vector.shape_cast %53 : vector<1x8x2xf32> to vector<8x2xf32>
    %55 = vector.shape_cast %52 : vector<8x2xf32> to vector<1x8x2xf32>
    tpu.vector_store %arg4[%c3_26, %c0_27, %c0_28], %55 {strides = array<i32>} : memref<8x8x2xf32, #tpu.memory_space<vmem>>, vector<1x8x2xf32>,
    %56 = vector.broadcast %0 : f32 to vector<8x32xf32>
    %57 = arith.mulf %56, %47 : vector<8x32xf32>
    %58 = vector.extract_strided_slice %51 {offsets = [0, 0], sizes = [8, 32], strides = [1, 1]} : vector<8x34xf32> to vector<8x32xf32>
    %59 = arith.addf %57, %58 : vector<8x32xf32>
    %c4 = arith.constant 4 : index
    %c0_29 = arith.constant 0 : index
    %c0_30 = arith.constant 0 : index
    %60 = vector.load %arg2[%c4, %c0_29, %c0_30] : memref<8x8x32xf32, #tpu.memory_space<vmem>>, vector<1x8x32xf32>
    %61 = vector.shape_cast %60 : vector<1x8x32xf32> to vector<8x32xf32>
    %62 = arith.addf %59, %61 : vector<8x32xf32>
    %63 = math.tanh %62 : vector<8x32xf32>
    %cst_31 = arith.constant 0.000000e+00 : f32
    %64 = vector.broadcast %cst_31 : f32 to vector<8x32xf32>
    %65 = arith.maximumf %63, %64 : vector<8x32xf32>
    %cst_32 = arith.constant dense<0.000000e+00> : vector<8x34xf32>
    %66 = tpu.matmul %65, %1, %cst_32 {dimension_numbers = #tpu.dot_dimension_numbers<[1], [0], [0], [1], [0, 0, 1, 1], [], []>, precision = #tpu.contract_precision<fp32>} : vector<8x32xf32>, vector<32x34xf32>, vector<8x34xf32> -> vector<8x34xf32>
    %67 = vector.extract_strided_slice %66 {offsets = [0, 32], sizes = [8, 2], strides = [1, 1]} : vector<8x34xf32> to vector<8x2xf32>
    %c4_33 = arith.constant 4 : index
    %c0_34 = arith.constant 0 : index
    %c0_35 = arith.constant 0 : index
    %68 = vector.load %arg4[%c4_33, %c0_34, %c0_35] : memref<8x8x2xf32, #tpu.memory_space<vmem>>, vector<1x8x2xf32>
    %69 = vector.shape_cast %68 : vector<1x8x2xf32> to vector<8x2xf32>
    %70 = vector.shape_cast %67 : vector<8x2xf32> to vector<1x8x2xf32>
    tpu.vector_store %arg4[%c4_33, %c0_34, %c0_35], %70 {strides = array<i32>} : memref<8x8x2xf32, #tpu.memory_space<vmem>>, vector<1x8x2xf32>,
    %71 = vector.broadcast %0 : f32 to vector<8x32xf32>
    %72 = arith.mulf %71, %62 : vector<8x32xf32>
    %73 = vector.extract_strided_slice %66 {offsets = [0, 0], sizes = [8, 32], strides = [1, 1]} : vector<8x34xf32> to vector<8x32xf32>
    %74 = arith.addf %72, %73 : vector<8x32xf32>
    %c5 = arith.constant 5 : index
    %c0_36 = arith.constant 0 : index
    %c0_37 = arith.constant 0 : index
    %75 = vector.load %arg2[%c5, %c0_36, %c0_37] : memref<8x8x32xf32, #tpu.memory_space<vmem>>, vector<1x8x32xf32>
    %76 = vector.shape_cast %75 : vector<1x8x32xf32> to vector<8x32xf32>
    %77 = arith.addf %74, %76 : vector<8x32xf32>
    %78 = math.tanh %77 : vector<8x32xf32>
    %cst_38 = arith.constant 0.000000e+00 : f32
    %79 = vector.broadcast %cst_38 : f32 to vector<8x32xf32>
    %80 = arith.maximumf %78, %79 : vector<8x32xf32>
    %cst_39 = arith.constant dense<0.000000e+00> : vector<8x34xf32>
    %81 = tpu.matmul %80, %1, %cst_39 {dimension_numbers = #tpu.dot_dimension_numbers<[1], [0], [0], [1], [0, 0, 1, 1], [], []>, precision = #tpu.contract_precision<fp32>} : vector<8x32xf32>, vector<32x34xf32>, vector<8x34xf32> -> vector<8x34xf32>
    %82 = vector.extract_strided_slice %81 {offsets = [0, 32], sizes = [8, 2], strides = [1, 1]} : vector<8x34xf32> to vector<8x2xf32>
    %c5_40 = arith.constant 5 : index
    %c0_41 = arith.constant 0 : index
    %c0_42 = arith.constant 0 : index
    %83 = vector.load %arg4[%c5_40, %c0_41, %c0_42] : memref<8x8x2xf32, #tpu.memory_space<vmem>>, vector<1x8x2xf32>
    %84 = vector.shape_cast %83 : vector<1x8x2xf32> to vector<8x2xf32>
    %85 = vector.shape_cast %82 : vector<8x2xf32> to vector<1x8x2xf32>
    tpu.vector_store %arg4[%c5_40, %c0_41, %c0_42], %85 {strides = array<i32>} : memref<8x8x2xf32, #tpu.memory_space<vmem>>, vector<1x8x2xf32>,
    %86 = vector.broadcast %0 : f32 to vector<8x32xf32>
    %87 = arith.mulf %86, %77 : vector<8x32xf32>
    %88 = vector.extract_strided_slice %81 {offsets = [0, 0], sizes = [8, 32], strides = [1, 1]} : vector<8x34xf32> to vector<8x32xf32>
    %89 = arith.addf %87, %88 : vector<8x32xf32>
    %c6 = arith.constant 6 : index
    %c0_43 = arith.constant 0 : index
    %c0_44 = arith.constant 0 : index
    %90 = vector.load %arg2[%c6, %c0_43, %c0_44] : memref<8x8x32xf32, #tpu.memory_space<vmem>>, vector<1x8x32xf32>
    %91 = vector.shape_cast %90 : vector<1x8x32xf32> to vector<8x32xf32>
    %92 = arith.addf %89, %91 : vector<8x32xf32>
    %93 = math.tanh %92 : vector<8x32xf32>
    %cst_45 = arith.constant 0.000000e+00 : f32
    %94 = vector.broadcast %cst_45 : f32 to vector<8x32xf32>
    %95 = arith.maximumf %93, %94 : vector<8x32xf32>
    %cst_46 = arith.constant dense<0.000000e+00> : vector<8x34xf32>
    %96 = tpu.matmul %95, %1, %cst_46 {dimension_numbers = #tpu.dot_dimension_numbers<[1], [0], [0], [1], [0, 0, 1, 1], [], []>, precision = #tpu.contract_precision<fp32>} : vector<8x32xf32>, vector<32x34xf32>, vector<8x34xf32> -> vector<8x34xf32>
    %97 = vector.extract_strided_slice %96 {offsets = [0, 32], sizes = [8, 2], strides = [1, 1]} : vector<8x34xf32> to vector<8x2xf32>
    %c6_47 = arith.constant 6 : index
    %c0_48 = arith.constant 0 : index
    %c0_49 = arith.constant 0 : index
    %98 = vector.load %arg4[%c6_47, %c0_48, %c0_49] : memref<8x8x2xf32, #tpu.memory_space<vmem>>, vector<1x8x2xf32>
    %99 = vector.shape_cast %98 : vector<1x8x2xf32> to vector<8x2xf32>
    %100 = vector.shape_cast %97 : vector<8x2xf32> to vector<1x8x2xf32>
    tpu.vector_store %arg4[%c6_47, %c0_48, %c0_49], %100 {strides = array<i32>} : memref<8x8x2xf32, #tpu.memory_space<vmem>>, vector<1x8x2xf32>,
    %101 = vector.broadcast %0 : f32 to vector<8x32xf32>
    %102 = arith.mulf %101, %92 : vector<8x32xf32>
    %103 = vector.extract_strided_slice %96 {offsets = [0, 0], sizes = [8, 32], strides = [1, 1]} : vector<8x34xf32> to vector<8x32xf32>
    %104 = arith.addf %102, %103 : vector<8x32xf32>
    %c7 = arith.constant 7 : index
    %c0_50 = arith.constant 0 : index
    %c0_51 = arith.constant 0 : index
    %105 = vector.load %arg2[%c7, %c0_50, %c0_51] : memref<8x8x32xf32, #tpu.memory_space<vmem>>, vector<1x8x32xf32>
    %106 = vector.shape_cast %105 : vector<1x8x32xf32> to vector<8x32xf32>
    %107 = arith.addf %104, %106 : vector<8x32xf32>
    %108 = math.tanh %107 : vector<8x32xf32>
    %cst_52 = arith.constant 0.000000e+00 : f32
    %109 = vector.broadcast %cst_52 : f32 to vector<8x32xf32>
    %110 = arith.maximumf %108, %109 : vector<8x32xf32>
    %cst_53 = arith.constant dense<0.000000e+00> : vector<8x34xf32>
    %111 = tpu.matmul %110, %1, %cst_53 {dimension_numbers = #tpu.dot_dimension_numbers<[1], [0], [0], [1], [0, 0, 1, 1], [], []>, precision = #tpu.contract_precision<fp32>} : vector<8x32xf32>, vector<32x34xf32>, vector<8x34xf32> -> vector<8x34xf32>
    %112 = vector.extract_strided_slice %111 {offsets = [0, 32], sizes = [8, 2], strides = [1, 1]} : vector<8x34xf32> to vector<8x2xf32>
    %c7_54 = arith.constant 7 : index
    %c0_55 = arith.constant 0 : index
    %c0_56 = arith.constant 0 : index
    %113 = vector.load %arg4[%c7_54, %c0_55, %c0_56] : memref<8x8x2xf32, #tpu.memory_space<vmem>>, vector<1x8x2xf32>
    %114 = vector.shape_cast %113 : vector<1x8x2xf32> to vector<8x2xf32>
    %115 = vector.shape_cast %112 : vector<8x2xf32> to vector<1x8x2xf32>
    tpu.vector_store %arg4[%c7_54, %c0_55, %c0_56], %115 {strides = array<i32>} : memref<8x8x2xf32, #tpu.memory_space<vmem>>, vector<1x8x2xf32>,
    return
  }
}

</mosaic_0001>

<llo_original>
// kernel: tpu_custom_call.1
$region0: #{tpu_custom_call.1}
  #allocation0 [shape = 'u32[]', space=smem, size = 0x4, offset = 0x4, fixed_abs, tag = 'smem constant byte address 0x4 - core index']
  #allocation1 [shape = 'u32[144,128]{1,0:T(1,128)}', space=vmem, size = 0x12000, scoped, tag = 'internal scratch']
  #allocation2 [shape = 'f32[1]{0:T(128)S(6)}', space=smem, size = 0x200, scoped, tag = 'scoped memory for tpu_custom_call.1']
  %s0 = inlined_call_operand.<no memory space> [shape: f32[1], index: 0, kind: input, shape index: {}]
  %s1 = inlined_call_operand.hbm [shape: f32[8,32], index: 1, kind: input, shape index: {}]
  %s2 = inlined_call_operand.hbm [shape: f32[8,8,32], index: 2, kind: input, shape index: {}]
  %s3 = inlined_call_operand.hbm [shape: f32[32,34], index: 3, kind: input, shape index: {}]
  %s4 = inlined_call_operand.vmem [shape: f32[8,8,2], index: 4, kind: output, shape index: {}]
  %s5 = sld [smem:[#allocation0]]
  $region38: #{tpu_custom_call.1} parent=0
    _
  %s7 = ssub.s32 1, %s5
  %s8 = scalar_select 0, %s7, %s5
  %9 = sst [smem:[#allocation2]] %s0
  $region1: #{tpu_custom_call.1} parent=0
    #allocation3 [shape = 'u8[4096]{0}', space=vmem, size = 0x1000, scoped, tag = 'input window, operand 1, single buffered']
    #allocation4 [shape = 's32[1]{0}', space=sflag, size = 0x4, scoped, tag = 'scoped memory for tpu_custom_call.1']
    #allocation5 [shape = 'u8[32768]{0}', space=vmem, size = 0x8000, scoped, tag = 'input window, operand 2, single buffered']
    #allocation6 [shape = 's32[1]{0}', space=sflag, size = 0x4, scoped, tag = 'scoped memory for tpu_custom_call.1']
    #allocation7 [shape = 'u8[16384]{0}', space=vmem, size = 0x4000, scoped, tag = 'input window, operand 3, single buffered']
    %10 = vsyncpa [#allocation4], 0
    %11 = vsyncpa [#allocation6], 0
    // Predicated region
    $region2: #{tpu_custom_call.1} parent=1 // pred_check
      _
    $region3: #{tpu_custom_call.1} parent=1 // pred_check_branch
      %13 = sbr.rel (0) target = $region5
    $region4: #{tpu_custom_call.1} parent=1 // pred_region
      _
    $region5: #{tpu_custom_call.1} parent=1 // pred_fallthru
      _
    // Predicated region
    $region6: #{tpu_custom_call.1} parent=1 // pred_check
      _
    $region7: #{tpu_custom_call.1} parent=1 // pred_check_branch
      %15 = sbr.rel (0) target = $region9
    $region8: #{tpu_custom_call.1} parent=1 // pred_region
      %s17 = ssub.s32 128, 128
      %18 = vsyncadd [#allocation4], %s17
      %s20 = sshll.u32 [#allocation3], 4
      %s21 = int_to_ptr.vmem [resolvable:$true] %s20
      %23 = dma.hbm_to_vmem [thread:$0]  %s1, 128, %s21, [#allocation4]
    $region9: #{tpu_custom_call.1} parent=1 // pred_fallthru
      _
    // Predicated region
    $region10: #{tpu_custom_call.1} parent=1 // pred_check
      _
    $region11: #{tpu_custom_call.1} parent=1 // pred_check_branch
      %25 = sbr.rel (0) target = $region13
    $region12: #{tpu_custom_call.1} parent=1 // pred_region
      %s27 = ssub.s32 1024, 1024
      %28 = vsyncadd [#allocation6], %s27
      %s29 = sshll.u32 [#allocation5], 4
      %s30 = int_to_ptr.vmem [resolvable:$true] %s29
      %35 = dma.hbm_to_vmem [thread:$0]  %s2, 1024, %s30, [#allocation6], 128, 128, 8
    $region13: #{tpu_custom_call.1} parent=1 // pred_fallthru
      _
    // Predicated region
    $region14: #{tpu_custom_call.1} parent=1 // pred_check
      _
    $region15: #{tpu_custom_call.1} parent=1 // pred_check_branch
      %37 = sbr.rel (0) target = $region17
    $region16: #{tpu_custom_call.1} parent=1 // pred_region
      %s39 = ssub.s32 512, 512
      %40 = vsyncadd [#allocation6], %s39
      %s41 = sshll.u32 [#allocation7], 4
      %s42 = int_to_ptr.vmem [resolvable:$true] %s41
      %47 = dma.hbm_to_vmem [thread:$0]  %s3, 512, %s42, [#allocation6], 128, 128, 8
    $region17: #{tpu_custom_call.1} parent=1 // pred_fallthru
      _
    // Predicated region
    $region18: #{tpu_custom_call.1} parent=1 // pred_check
      _
    $region19: #{tpu_custom_call.1} parent=1 // pred_check_branch
      %49 = sbr.rel (0) target = $region21
    $region20: #{tpu_custom_call.1} parent=1 // pred_region
      %50 = dma.done [#allocation4], 128
    $region21: #{tpu_custom_call.1} parent=1 // pred_fallthru
      _
    // Predicated region
    $region22: #{tpu_custom_call.1} parent=1 // pred_check
      _
    $region23: #{tpu_custom_call.1} parent=1 // pred_check_branch
      %52 = sbr.rel (0) target = $region25
    $region24: #{tpu_custom_call.1} parent=1 // pred_region
      %53 = dma.done [#allocation6], 1024
    $region25: #{tpu_custom_call.1} parent=1 // pred_fallthru
      _
    // Predicated region
    $region26: #{tpu_custom_call.1} parent=1 // pred_check
      _
    $region27: #{tpu_custom_call.1} parent=1 // pred_check_branch
      %55 = sbr.rel (0) target = $region29
    $region28: #{tpu_custom_call.1} parent=1 // pred_region
      %56 = dma.done [#allocation6], 512
    $region29: #{tpu_custom_call.1} parent=1 // pred_fallthru
      _
    %s57 = sld [smem:[#allocation2]]
    %v58 = vld [vmem:[#allocation7] sm:$0xff]
    %v59 = vld [vmem:[#allocation7 + $0x8] sm:$0xff]
    %v60 = vld [vmem:[#allocation7 + $0x10] sm:$0xff]
    %v61 = vld [vmem:[#allocation7 + $0x18] sm:$0xff]
    %v62 = vld [vmem:[#allocation3] sm:$0xff]
    %v63 = vtanh.pop %v62
    %v64 = vmax.f32 %v63, 0.0
    %vm65 = vcmask 261120
    %v67 = vsel %vm65, %v64, 0
    %69 = vmatprep.subr.mxu0 0.0
    %v70 = vand.u32 %v58, 4294901760
    %71 = vmatpush1.msra.mxu0 %v70
    %72 = vmatprep.subr.mxu0 0.0
    %v73 = vand.u32 %v59, 4294901760
    %74 = vmatpush1.msra.mxu0 %v73
    %75 = vmatprep.subr.mxu0 0.0
    %v76 = vand.u32 %v60, 4294901760
    %77 = vmatpush1.msra.mxu0 %v76
    %78 = vmatprep.subr.mxu0 0.0
    %v79 = vand.u32 %v61, 4294901760
    %80 = vmatpush1.msra.mxu0 %v79
    %81 = vmatprep.subr.mxu0 0.0
    %82 = vmatpush1.msra.mxu0 0.0
    %83 = vmatprep.subr.mxu0 0.0
    %84 = vmatpush1.msra.mxu0 0.0
    %85 = vmatprep.subr.mxu0 0.0
    %86 = vmatpush1.msra.mxu0 0.0
    %87 = vmatprep.subr.mxu0 0.0
    %88 = vmatpush1.msra.mxu0 0.0
    %89 = vmatprep.subr.mxu0 0.0
    %90 = vmatpush1.msra.mxu0 0.0
    %91 = vmatprep.subr.mxu0 0.0
    %92 = vmatpush1.msra.mxu0 0.0
    %93 = vmatprep.subr.mxu0 0.0
    %94 = vmatpush1.msra.mxu0 0.0
    %95 = vmatprep.subr.mxu0 0.0
    %96 = vmatpush1.msra.mxu0 0.0
    %97 = vmatprep.subr.mxu0 0.0
    %98 = vmatpush1.msra.mxu0 0.0
    %99 = vmatprep.subr.mxu0 0.0
    %100 = vmatpush1.msra.mxu0 0.0
    %101 = vmatprep.subr.mxu0 0.0
    %102 = vmatpush1.msra.mxu0 0.0
    %103 = vmatprep.subr.mxu0 0.0
    %104 = vmatpush1.msra.mxu0 0.0
    %105 = vmatprep.subr.mxu0 0.0
    %106 = vmatpush1.msra.mxu0 0.0
    %107 = vmatprep.subr.mxu0 0.0
    %108 = vmatpush1.msra.mxu0 0.0
    %109 = vmatprep.subr.mxu0 0.0
    %110 = vmatpush1.msra.mxu0 0.0
    %111 = vmatprep.subr.mxu0 0.0
    %112 = vmatpush1.msra.mxu0 0.0
    %113 = vmatprep.subr.mxu0 0.0
    %114 = vmatpush1.msra.mxu0 0.0
    %115 = vmatprep.subr.mxu0 0.0
    %116 = vmatpush1.msra.mxu0 0.0
    %117 = vmatprep.subr.mxu0 0.0
    %118 = vmatpush1.msra.mxu0 0.0
    %119 = vmatprep.subr.mxu0 0.0
    %120 = vmatpush1.msra.mxu0 0.0
    %121 = vmatprep.subr.mxu0 0.0
    %122 = vmatpush1.msra.mxu0 0.0
    %123 = vmatprep.subr.mxu0 0.0
    %124 = vmatpush1.msra.mxu0 0.0
    %125 = vmatprep.subr.mxu0 0.0
    %126 = vmatpush1.msra.mxu0 0.0
    %127 = vmatprep.subr.mxu0 0.0
    %128 = vmatpush1.msra.mxu0 0.0
    %129 = vmatprep.subr.mxu0 0.0
    %130 = vmatpush1.msra.mxu0 0.0
    %131 = vmatprep.subr.mxu0 0.0
    %132 = vmatpush1.msra.mxu0 0.0
    %133 = vmatprep.subr.mxu0 0.0
    %134 = vmatpush1.msra.mxu0 0.0
    %135 = vmatprep.subr.mxu0 0.0
    %136 = vmatpush1.msra.mxu0 0.0
    %137 = vmatprep.mubr.f32.mxu0 0.0
    %v138 = vand.u32 %v67, 4294901760
    %v139 = vsub.f32 %v67, %v138
    %v140 = vand.u32 %v139, 4294901760
    %v141 = vsub.f32 %v139, %v140
    %v142 = vand.u32 %v141, 4294901760
    %143 = vmatmul.mubr.f32.gmra.mrb[0].mxu0 %v142
    %v144 = vpop.f32.mrb[0].mxu0
    %v145 = vadd.f32 0.0, %v144
    %v146 = vpop.f32.mrb[0].mxu0
    %147 = vdwg.mxu0
    %148 = vmatprep.subr.mxu0 0.0
    %v149 = vand.u32 %v58, 4294901760
    %v150 = vsub.f32 %v58, %v149
    %v151 = vand.u32 %v150, 4294901760
    %v152 = vsub.f32 %v150, %v151
    %v153 = vand.u32 %v152, 4294901760
    %154 = vmatpush1.msra.mxu0 %v153
    %155 = vmatprep.subr.mxu0 0.0
    %v156 = vand.u32 %v59, 4294901760
    %v157 = vsub.f32 %v59, %v156
    %v158 = vand.u32 %v157, 4294901760
    %v159 = vsub.f32 %v157, %v158
    %v160 = vand.u32 %v159, 4294901760
    %161 = vmatpush1.msra.mxu0 %v160
    %162 = vmatprep.subr.mxu0 0.0
    %v163 = vand.u32 %v60, 4294901760
    %v164 = vsub.f32 %v60, %v163
    %v165 = vand.u32 %v164, 4294901760
    %v166 = vsub.f32 %v164, %v165
    %v167 = vand.u32 %v166, 4294901760
    %168 = vmatpush1.msra.mxu0 %v167
    %169 = vmatprep.subr.mxu0 0.0
    %v170 = vand.u32 %v61, 4294901760
    %v171 = vsub.f32 %v61, %v170
    %v172 = vand.u32 %v171, 4294901760
    %v173 = vsub.f32 %v171, %v172
    %v174 = vand.u32 %v173, 4294901760
    %175 = vmatpush1.msra.mxu0 %v174
    %176 = vmatprep.subr.mxu0 0.0
    %177 = vmatpush1.msra.mxu0 0.0
    %178 = vmatprep.subr.mxu0 0.0
    %179 = vmatpush1.msra.mxu0 0.0
    %180 = vmatprep.subr.mxu0 0.0
    %181 = vmatpush1.msra.mxu0 0.0
    %182 = vmatprep.subr.mxu0 0.0
    %183 = vmatpush1.msra.mxu0 0.0
    %184 = vmatprep.subr.mxu0 0.0
    %185 = vmatpush1.msra.mxu0 0.0
    %186 = vmatprep.subr.mxu0 0.0
    %187 = vmatpush1.msra.mxu0 0.0
    %188 = vmatprep.subr.mxu0 0.0
    %189 = vmatpush1.msra.mxu0 0.0
    %190 = vmatprep.subr.mxu0 0.0
    %191 = vmatpush1.msra.mxu0 0.0
    %192 = vmatprep.subr.mxu0 0.0
    %193 = vmatpush1.msra.mxu0 0.0
    %194 = vmatprep.subr.mxu0 0.0
    %195 = vmatpush1.msra.mxu0 0.0
    %196 = vmatprep.subr.mxu0 0.0
    %197 = vmatpush1.msra.mxu0 0.0
    %198 = vmatprep.subr.mxu0 0.0
    %199 = vmatpush1.msra.mxu0 0.0
    %200 = vmatprep.subr.mxu0 0.0
    %201 = vmatpush1.msra.mxu0 0.0
    %202 = vmatprep.subr.mxu0 0.0
    %203 = vmatpush1.msra.mxu0 0.0
    %204 = vmatprep.subr.mxu0 0.0
    %205 = vmatpush1.msra.mxu0 0.0
    %206 = vmatprep.subr.mxu0 0.0
    %207 = vmatpush1.msra.mxu0 0.0
    %208 = vmatprep.subr.mxu0 0.0
    %209 = vmatpush1.msra.mxu0 0.0
    %210 = vmatprep.subr.mxu0 0.0
    %211 = vmatpush1.msra.mxu0 0.0
    %212 = vmatprep.subr.mxu0 0.0
    %213 = vmatpush1.msra.mxu0 0.0
    %214 = vmatprep.subr.mxu0 0.0
    %215 = vmatpush1.msra.mxu0 0.0
    %216 = vmatprep.subr.mxu0 0.0
    %217 = vmatpush1.msra.mxu0 0.0
    %218 = vmatprep.subr.mxu0 0.0
    %219 = vmatpush1.msra.mxu0 0.0
    %220 = vmatprep.subr.mxu0 0.0
    %221 = vmatpush1.msra.mxu0 0.0
    %222 = vmatprep.subr.mxu0 0.0
    %223 = vmatpush1.msra.mxu0 0.0
    %224 = vmatprep.subr.mxu0 0.0
    %225 = vmatpush1.msra.mxu0 0.0
    %226 = vmatprep.subr.mxu0 0.0
    %227 = vmatpush1.msra.mxu0 0.0
    %228 = vmatprep.subr.mxu0 0.0
    %229 = vmatpush1.msra.mxu0 0.0
    %230 = vmatprep.subr.mxu0 0.0
    %231 = vmatpush1.msra.mxu0 0.0
    %232 = vmatprep.mubr.f32.mxu0 0.0
    %v233 = vand.u32 %v67, 4294901760
    %234 = vmatmul.mubr.f32.gmra.mrb[0].mxu0 %v233
    %v235 = vpop.f32.mrb[0].mxu0
    %v236 = vadd.f32 %v145, %v235
    %v237 = vpop.f32.mrb[0].mxu0
    %238 = vdwg.mxu0
    %239 = vmatprep.subr.mxu0 0.0
    %v240 = vand.u32 %v58, 4294901760
    %v241 = vsub.f32 %v58, %v240
    %242 = vmatpush1.msra.mxu0 %v241
    %243 = vmatprep.subr.mxu0 0.0
    %v244 = vand.u32 %v59, 4294901760
    %v245 = vsub.f32 %v59, %v244
    %246 = vmatpush1.msra.mxu0 %v245
    %247 = vmatprep.subr.mxu0 0.0
    %v248 = vand.u32 %v60, 4294901760
    %v249 = vsub.f32 %v60, %v248
    %250 = vmatpush1.msra.mxu0 %v249
    %251 = vmatprep.subr.mxu0 0.0
    %v252 = vand.u32 %v61, 4294901760
    %v253 = vsub.f32 %v61, %v252
    %254 = vmatpush1.msra.mxu0 %v253
    %255 = vmatprep.subr.mxu0 0.0
    %256 = vmatpush1.msra.mxu0 0.0
    %257 = vmatprep.subr.mxu0 0.0
    %258 = vmatpush1.msra.mxu0 0.0
    %259 = vmatprep.subr.mxu0 0.0
    %260 = vmatpush1.msra.mxu0 0.0
    %261 = vmatprep.subr.mxu0 0.0
    %262 = vmatpush1.msra.mxu0 0.0
    %263 = vmatprep.subr.mxu0 0.0
    %264 = vmatpush1.msra.mxu0 0.0
    %265 = vmatprep.subr.mxu0 0.0
    %266 = vmatpush1.msra.mxu0 0.0
    %267 = vmatprep.subr.mxu0 0.0
    %268 = vmatpush1.msra.mxu0 0.0
    %269 = vmatprep.subr.mxu0 0.0
    %270 = vmatpush1.msra.mxu0 0.0
    %271 = vmatprep.subr.mxu0 0.0
    %272 = vmatpush1.msra.mxu0 0.0
    %273 = vmatprep.subr.mxu0 0.0
    %274 = vmatpush1.msra.mxu0 0.0
    %275 = vmatprep.subr.mxu0 0.0
    %276 = vmatpush1.msra.mxu0 0.0
    %277 = vmatprep.subr.mxu0 0.0
    %278 = vmatpush1.msra.mxu0 0.0
    %279 = vmatprep.subr.mxu0 0.0
    %280 = vmatpush1.msra.mxu0 0.0
    %281 = vmatprep.subr.mxu0 0.0
    %282 = vmatpush1.msra.mxu0 0.0
    %283 = vmatprep.subr.mxu0 0.0
    %284 = vmatpush1.msra.mxu0 0.0
    %285 = vmatprep.subr.mxu0 0.0
    %286 = vmatpush1.msra.mxu0 0.0
    %287 = vmatprep.subr.mxu0 0.0
    %288 = vmatpush1.msra.mxu0 0.0
    %289 = vmatprep.subr.mxu0 0.0
    %290 = vmatpush1.msra.mxu0 0.0
    %291 = vmatprep.subr.mxu0 0.0
    %292 = vmatpush1.msra.mxu0 0.0
    %293 = vmatprep.subr.mxu0 0.0
    %294 = vmatpush1.msra.mxu0 0.0
    %295 = vmatprep.subr.mxu0 0.0
    %296 = vmatpush1.msra.mxu0 0.0
    %297 = vmatprep.subr.mxu0 0.0
    %298 = vmatpush1.msra.mxu0 0.0
    %299 = vmatprep.subr.mxu0 0.0
    %300 = vmatpush1.msra.mxu0 0.0
    %301 = vmatprep.subr.mxu0 0.0
    %302 = vmatpush1.msra.mxu0 0.0
    %303 = vmatprep.subr.mxu0 0.0
    %304 = vmatpush1.msra.mxu0 0.0
    %305 = vmatprep.subr.mxu0 0.0
    %306 = vmatpush1.msra.mxu0 0.0
    %307 = vmatprep.subr.mxu0 0.0
    %308 = vmatpush1.msra.mxu0 0.0
    %309 = vmatprep.subr.mxu0 0.0
    %310 = vmatpush1.msra.mxu0 0.0
    %311 = vmatprep.mubr.f32.mxu0 0.0
    %v312 = vand.u32 %v67, 4294901760
    %v313 = vsub.f32 %v67, %v312
    %314 = vmatmul.mubr.f32.gmra.mrb[0].mxu0 %v313
    %v315 = vpop.f32.mrb[0].mxu0
    %v316 = vadd.f32 %v236, %v315
    %v317 = vpop.f32.mrb[0].mxu0
    %318 = vdwg.mxu0
    %319 = vmatprep.subr.mxu0 0.0
    %v320 = vand.u32 %v58, 4294901760
    %321 = vmatpush1.msra.mxu0 %v320
    %322 = vmatprep.subr.mxu0 0.0
    %v323 = vand.u32 %v59, 4294901760
    %324 = vmatpush1.msra.mxu0 %v323
    %325 = vmatprep.subr.mxu0 0.0
    %v326 = vand.u32 %v60, 4294901760
    %327 = vmatpush1.msra.mxu0 %v326
    %328 = vmatprep.subr.mxu0 0.0
    %v329 = vand.u32 %v61, 4294901760
    %330 = vmatpush1.msra.mxu0 %v329
    %331 = vmatprep.subr.mxu0 0.0
    %332 = vmatpush1.msra.mxu0 0.0
    %333 = vmatprep.subr.mxu0 0.0
    %334 = vmatpush1.msra.mxu0 0.0
    %335 = vmatprep.subr.mxu0 0.0
    %336 = vmatpush1.msra.mxu0 0.0
    %337 = vmatprep.subr.mxu0 0.0
    %338 = vmatpush1.msra.mxu0 0.0
    %339 = vmatprep.subr.mxu0 0.0
    %340 = vmatpush1.msra.mxu0 0.0
    %341 = vmatprep.subr.mxu0 0.0
    %342 = vmatpush1.msra.mxu0 0.0
    %343 = vmatprep.subr.mxu0 0.0
    %344 = vmatpush1.msra.mxu0 0.0
    %345 = vmatprep.subr.mxu0 0.0
    %346 = vmatpush1.msra.mxu0 0.0
    %347 = vmatprep.subr.mxu0 0.0
    %348 = vmatpush1.msra.mxu0 0.0
    %349 = vmatprep.subr.mxu0 0.0
    %350 = vmatpush1.msra.mxu0 0.0
    %351 = vmatprep.subr.mxu0 0.0
    %352 = vmatpush1.msra.mxu0 0.0
    %353 = vmatprep.subr.mxu0 0.0
    %354 = vmatpush1.msra.mxu0 0.0
    %355 = vmatprep.subr.mxu0 0.0
    %356 = vmatpush1.msra.mxu0 0.0
    %357 = vmatprep.subr.mxu0 0.0
    %358 = vmatpush1.msra.mxu0 0.0
    %359 = vmatprep.subr.mxu0 0.0
    %360 = vmatpush1.msra.mxu0 0.0
    %361 = vmatprep.subr.mxu0 0.0
    %362 = vmatpush1.msra.mxu0 0.0
    %363 = vmatprep.subr.mxu0 0.0
    %364 = vmatpush1.msra.mxu0 0.0
    %365 = vmatprep.subr.mxu0 0.0
    %366 = vmatpush1.msra.mxu0 0.0
    %367 = vmatprep.subr.mxu0 0.0
    %368 = vmatpush1.msra.mxu0 0.0
    %369 = vmatprep.subr.mxu0 0.0
    %370 = vmatpush1.msra.mxu0 0.0
    %371 = vmatprep.subr.mxu0 0.0
    %372 = vmatpush1.msra.mxu0 0.0
    %373 = vmatprep.subr.mxu0 0.0
    %374 = vmatpush1.msra.mxu0 0.0
    %375 = vmatprep.subr.mxu0 0.0
    %376 = vmatpush1.msra.mxu0 0.0
    %377 = vmatprep.subr.mxu0 0.0
    %378 = vmatpush1.msra.mxu0 0.0
    %379 = vmatprep.subr.mxu0 0.0
    %380 = vmatpush1.msra.mxu0 0.0
    %381 = vmatprep.subr.mxu0 0.0
    %382 = vmatpush1.msra.mxu0 0.0
    %383 = vmatprep.subr.mxu0 0.0
    %384 = vmatpush1.msra.mxu0 0.0
    %385 = vmatprep.subr.mxu0 0.0
    %386 = vmatpush1.msra.mxu0 0.0
    %387 = vmatprep.mubr.f32.mxu0 0.0
    %v388 = vand.u32 %v67, 4294901760
    %v389 = vsub.f32 %v67, %v388
    %v390 = vand.u32 %v389, 4294901760
    %391 = vmatmul.mubr.f32.gmra.mrb[0].mxu0 %v390
    %v392 = vpop.f32.mrb[0].mxu0
    %v393 = vadd.f32 %v316, %v392
    %v394 = vpop.f32.mrb[0].mxu0
    %395 = vdwg.mxu0
    %396 = vmatprep.subr.mxu0 0.0
    %v397 = vand.u32 %v58, 4294901760
    %v398 = vsub.f32 %v58, %v397
    %v399 = vand.u32 %v398, 4294901760
    %400 = vmatpush1.msra.mxu0 %v399
    %401 = vmatprep.subr.mxu0 0.0
    %v402 = vand.u32 %v59, 4294901760
    %v403 = vsub.f32 %v59, %v402
    %v404 = vand.u32 %v403, 4294901760
    %405 = vmatpush1.msra.mxu0 %v404
    %406 = vmatprep.subr.mxu0 0.0
    %v407 = vand.u32 %v60, 4294901760
    %v408 = vsub.f32 %v60, %v407
    %v409 = vand.u32 %v408, 4294901760
    %410 = vmatpush1.msra.mxu0 %v409
    %411 = vmatprep.subr.mxu0 0.0
    %v412 = vand.u32 %v61, 4294901760
    %v413 = vsub.f32 %v61, %v412
    %v414 = vand.u32 %v413, 4294901760
    %415 = vmatpush1.msra.mxu0 %v414
    %416 = vmatprep.subr.mxu0 0.0
    %417 = vmatpush1.msra.mxu0 0.0
    %418 = vmatprep.subr.mxu0 0.0
    %419 = vmatpush1.msra.mxu0 0.0
    %420 = vmatprep.subr.mxu0 0.0
    %421 = vmatpush1.msra.mxu0 0.0
    %422 = vmatprep.subr.mxu0 0.0
    %423 = vmatpush1.msra.mxu0 0.0
    %424 = vmatprep.subr.mxu0 0.0
    %425 = vmatpush1.msra.mxu0 0.0
    %426 = vmatprep.subr.mxu0 0.0
    %427 = vmatpush1.msra.mxu0 0.0
    %428 = vmatprep.subr.mxu0 0.0
    %429 = vmatpush1.msra.mxu0 0.0
    %430 = vmatprep.subr.mxu0 0.0
    %431 = vmatpush1.msra.mxu0 0.0
    %432 = vmatprep.subr.mxu0 0.0
    %433 = vmatpush1.msra.mxu0 0.0
    %434 = vmatprep.subr.mxu0 0.0
    %435 = vmatpush1.msra.mxu0 0.0
    %436 = vmatprep.subr.mxu0 0.0
    %437 = vmatpush1.msra.mxu0 0.0
    %438 = vmatprep.subr.mxu0 0.0
    %439 = vmatpush1.msra.mxu0 0.0
    %440 = vmatprep.subr.mxu0 0.0
    %441 = vmatpush1.msra.mxu0 0.0
    %442 = vmatprep.subr.mxu0 0.0
    %443 = vmatpush1.msra.mxu0 0.0
    %444 = vmatprep.subr.mxu0 0.0
    %445 = vmatpush1.msra.mxu0 0.0
    %446 = vmatprep.subr.mxu0 0.0
    %447 = vmatpush1.msra.mxu0 0.0
    %448 = vmatprep.subr.mxu0 0.0
    %449 = vmatpush1.msra.mxu0 0.0
    %450 = vmatprep.subr.mxu0 0.0
    %451 = vmatpush1.msra.mxu0 0.0
    %452 = vmatprep.subr.mxu0 0.0
    %453 = vmatpush1.msra.mxu0 0.0
    %454 = vmatprep.subr.mxu0 0.0
    %455 = vmatpush1.msra.mxu0 0.0
    %456 = vmatprep.subr.mxu0 0.0
    %457 = vmatpush1.msra.mxu0 0.0
    %458 = vmatprep.subr.mxu0 0.0
    %459 = vmatpush1.msra.mxu0 0.0
    %460 = vmatprep.subr.mxu0 0.0
    %461 = vmatpush1.msra.mxu0 0.0
    %462 = vmatprep.subr.mxu0 0.0
    %463 = vmatpush1.msra.mxu0 0.0
    %464 = vmatprep.subr.mxu0 0.0
    %465 = vmatpush1.msra.mxu0 0.0
    %466 = vmatprep.subr.mxu0 0.0
    %467 = vmatpush1.msra.mxu0 0.0
    %468 = vmatprep.subr.mxu0 0.0
    %469 = vmatpush1.msra.mxu0 0.0
    %470 = vmatprep.subr.mxu0 0.0
    %471 = vmatpush1.msra.mxu0 0.0
    %472 = vmatprep.mubr.f32.mxu0 0.0
    %v473 = vand.u32 %v67, 4294901760
    %474 = vmatmul.mubr.f32.gmra.mrb[0].mxu0 %v473
    %v475 = vpop.f32.mrb[0].mxu0
    %v476 = vadd.f32 %v393, %v475
    %v477 = vpop.f32.mrb[0].mxu0
    %478 = vdwg.mxu0
    %479 = vmatprep.subr.mxu0 0.0
    %v480 = vand.u32 %v58, 4294901760
    %481 = vmatpush1.msra.mxu0 %v480
    %482 = vmatprep.subr.mxu0 0.0
    %v483 = vand.u32 %v59, 4294901760
    %484 = vmatpush1.msra.mxu0 %v483
    %485 = vmatprep.subr.mxu0 0.0
    %v486 = vand.u32 %v60, 4294901760
    %487 = vmatpush1.msra.mxu0 %v486
    %488 = vmatprep.subr.mxu0 0.0
    %v489 = vand.u32 %v61, 4294901760
    %490 = vmatpush1.msra.mxu0 %v489
    %491 = vmatprep.subr.mxu0 0.0
    %492 = vmatpush1.msra.mxu0 0.0
    %493 = vmatprep.subr.mxu0 0.0
    %494 = vmatpush1.msra.mxu0 0.0
    %495 = vmatprep.subr.mxu0 0.0
    %496 = vmatpush1.msra.mxu0 0.0
    %497 = vmatprep.subr.mxu0 0.0
    %498 = vmatpush1.msra.mxu0 0.0
    %499 = vmatprep.subr.mxu0 0.0
    %500 = vmatpush1.msra.mxu0 0.0
    %501 = vmatprep.subr.mxu0 0.0
    %502 = vmatpush1.msra.mxu0 0.0
    %503 = vmatprep.subr.mxu0 0.0
    %504 = vmatpush1.msra.mxu0 0.0
    %505 = vmatprep.subr.mxu0 0.0
    %506 = vmatpush1.msra.mxu0 0.0
    %507 = vmatprep.subr.mxu0 0.0
    %508 = vmatpush1.msra.mxu0 0.0
    %509 = vmatprep.subr.mxu0 0.0
    %510 = vmatpush1.msra.mxu0 0.0
    %511 = vmatprep.subr.mxu0 0.0
    %512 = vmatpush1.msra.mxu0 0.0
    %513 = vmatprep.subr.mxu0 0.0
    %514 = vmatpush1.msra.mxu0 0.0
    %515 = vmatprep.subr.mxu0 0.0
    %516 = vmatpush1.msra.mxu0 0.0
    %517 = vmatprep.subr.mxu0 0.0
    %518 = vmatpush1.msra.mxu0 0.0
    %519 = vmatprep.subr.mxu0 0.0
    %520 = vmatpush1.msra.mxu0 0.0
    %521 = vmatprep.subr.mxu0 0.0
    %522 = vmatpush1.msra.mxu0 0.0
    %523 = vmatprep.subr.mxu0 0.0
    %524 = vmatpush1.msra.mxu0 0.0
    %525 = vmatprep.subr.mxu0 0.0
    %526 = vmatpush1.msra.mxu0 0.0
    %527 = vmatprep.subr.mxu0 0.0
    %528 = vmatpush1.msra.mxu0 0.0
    %529 = vmatprep.subr.mxu0 0.0
    %530 = vmatpush1.msra.mxu0 0.0
    %531 = vmatprep.subr.mxu0 0.0
    %532 = vmatpush1.msra.mxu0 0.0
    %533 = vmatprep.subr.mxu0 0.0
    %534 = vmatpush1.msra.mxu0 0.0
    %535 = vmatprep.subr.mxu0 0.0
    %536 = vmatpush1.msra.mxu0 0.0
    %537 = vmatprep.subr.mxu0 0.0
    %538 = vmatpush1.msra.mxu0 0.0
    %539 = vmatprep.subr.mxu0 0.0
    %540 = vmatpush1.msra.mxu0 0.0
    %541 = vmatprep.subr.mxu0 0.0
    %542 = vmatpush1.msra.mxu0 0.0
    %543 = vmatprep.subr.mxu0 0.0
    %544 = vmatpush1.msra.mxu0 0.0
    %545 = vmatprep.subr.mxu0 0.0
    %546 = vmatpush1.msra.mxu0 0.0
    %547 = vmatprep.mubr.f32.mxu0 0.0
    %v548 = vand.u32 %v67, 4294901760
    %549 = vmatmul.mubr.f32.gmra.mrb[0].mxu0 %v548
    %v550 = vpop.f32.mrb[0].mxu0
    %v551 = vadd.f32 %v476, %v550
    %v552 = vpop.f32.mrb[0].mxu0
    %553 = vdwg.mxu0
    %555 = vrot.lane.b32.xlu0 %v551, 96
    %v556 = vpop.permute.xlu0 %555
    %vm558 = vcmask 15360
    %559 = vst.msk [vmem:[%s4] sm:$0xff] %vm558, %v556
    %v560 = vstv %s57
    %v561 = vmul.f32 %v560, %v62
    %v562 = vadd.f32 %v561, %v551
    %s563 = scalar_lea.vmem [#allocation5], 8
    %v564 = vld [vmem:[%s563] sm:$0xff]
    %v565 = vadd.f32 %v562, %v564
    %v566 = vtanh.pop %v565
    %v567 = vmax.f32 %v566, 0.0
    %v569 = vsel %vm65, %v567, 0
    %571 = vmatprep.subr.mxu0 0.0
    %v572 = vand.u32 %v58, 4294901760
    %573 = vmatpush1.msra.mxu0 %v572
    %574 = vmatprep.subr.mxu0 0.0
    %v575 = vand.u32 %v59, 4294901760
    %576 = vmatpush1.msra.mxu0 %v575
    %577 = vmatprep.subr.mxu0 0.0
    %v578 = vand.u32 %v60, 4294901760
    %579 = vmatpush1.msra.mxu0 %v578
    %580 = vmatprep.subr.mxu0 0.0
    %v581 = vand.u32 %v61, 4294901760
    %582 = vmatpush1.msra.mxu0 %v581
    %583 = vmatprep.subr.mxu0 0.0
    %584 = vmatpush1.msra.mxu0 0.0
    %585 = vmatprep.subr.mxu0 0.0
    %586 = vmatpush1.msra.mxu0 0.0
    %587 = vmatprep.subr.mxu0 0.0
    %588 = vmatpush1.msra.mxu0 0.0
    %589 = vmatprep.subr.mxu0 0.0
    %590 = vmatpush1.msra.mxu0 0.0
    %591 = vmatprep.subr.mxu0 0.0
    %592 = vmatpush1.msra.mxu0 0.0
    %593 = vmatprep.subr.mxu0 0.0
    %594 = vmatpush1.msra.mxu0 0.0
    %595 = vmatprep.subr.mxu0 0.0
    %596 = vmatpush1.msra.mxu0 0.0
    %597 = vmatprep.subr.mxu0 0.0
    %598 = vmatpush1.msra.mxu0 0.0
    %599 = vmatprep.subr.mxu0 0.0
    %600 = vmatpush1.msra.mxu0 0.0
    %601 = vmatprep.subr.mxu0 0.0
    %602 = vmatpush1.msra.mxu0 0.0
    %603 = vmatprep.subr.mxu0 0.0
    %604 = vmatpush1.msra.mxu0 0.0
    %605 = vmatprep.subr.mxu0 0.0
    %606 = vmatpush1.msra.mxu0 0.0
    %607 = vmatprep.subr.mxu0 0.0
    %608 = vmatpush1.msra.mxu0 0.0
    %609 = vmatprep.subr.mxu0 0.0
    %610 = vmatpush1.msra.mxu0 0.0
    %611 = vmatprep.subr.mxu0 0.0
    %612 = vmatpush1.msra.mxu0 0.0
    %613 = vmatprep.subr.mxu0 0.0
    %614 = vmatpush1.msra.mxu0 0.0
    %615 = vmatprep.subr.mxu0 0.0
    %616 = vmatpush1.msra.mxu0 0.0
    %617 = vmatprep.subr.mxu0 0.0
    %618 = vmatpush1.msra.mxu0 0.0
    %619 = vmatprep.subr.mxu0 0.0
    %620 = vmatpush1.msra.mxu0 0.0
    %621 = vmatprep.subr.mxu0 0.0
    %622 = vmatpush1.msra.mxu0 0.0
    %623 = vmatprep.subr.mxu0 0.0
    %624 = vmatpush1.msra.mxu0 0.0
    %625 = vmatprep.subr.mxu0 0.0
    %626 = vmatpush1.msra.mxu0 0.0
    %627 = vmatprep.subr.mxu0 0.0
    %628 = vmatpush1.msra.mxu0 0.0
    %629 = vmatprep.subr.mxu0 0.0
    %630 = vmatpush1.msra.mxu0 0.0
    %631 = vmatprep.subr.mxu0 0.0
    %632 = vmatpush1.msra.mxu0 0.0
    %633 = vmatprep.subr.mxu0 0.0
    %634 = vmatpush1.msra.mxu0 0.0
    %635 = vmatprep.subr.mxu0 0.0
    %636 = vmatpush1.msra.mxu0 0.0
    %637 = vmatprep.subr.mxu0 0.0
    %638 = vmatpush1.msra.mxu0 0.0
    %639 = vmatprep.mubr.f32.mxu0 0.0
    %v640 = vand.u32 %v569, 4294901760
    %v641 = vsub.f32 %v569, %v640
    %v642 = vand.u32 %v641, 4294901760
    %v643 = vsub.f32 %v641, %v642
    %v644 = vand.u32 %v643, 4294901760
    %645 = vmatmul.mubr.f32.gmra.mrb[0].mxu0 %v644
    %v646 = vpop.f32.mrb[0].mxu0
    %v647 = vadd.f32 0.0, %v646
    %v648 = vpop.f32.mrb[0].mxu0
    %649 = vdwg.mxu0
    %650 = vmatprep.subr.mxu0 0.0
    %v651 = vand.u32 %v58, 4294901760
    %v652 = vsub.f32 %v58, %v651
    %v653 = vand.u32 %v652, 4294901760
    %v654 = vsub.f32 %v652, %v653
    %v655 = vand.u32 %v654, 4294901760
    %656 = vmatpush1.msra.mxu0 %v655
    %657 = vmatprep.subr.mxu0 0.0
    %v658 = vand.u32 %v59, 4294901760
    %v659 = vsub.f32 %v59, %v658
    %v660 = vand.u32 %v659, 4294901760
    %v661 = vsub.f32 %v659, %v660
    %v662 = vand.u32 %v661, 4294901760
    %663 = vmatpush1.msra.mxu0 %v662
    %664 = vmatprep.subr.mxu0 0.0
    %v665 = vand.u32 %v60, 4294901760
    %v666 = vsub.f32 %v60, %v665
    %v667 = vand.u32 %v666, 4294901760
    %v668 = vsub.f32 %v666, %v667
    %v669 = vand.u32 %v668, 4294901760
    %670 = vmatpush1.msra.mxu0 %v669
    %671 = vmatprep.subr.mxu0 0.0
    %v672 = vand.u32 %v61, 4294901760
    %v673 = vsub.f32 %v61, %v672
    %v674 = vand.u32 %v673, 4294901760
    %v675 = vsub.f32 %v673, %v674
    %v676 = vand.u32 %v675, 4294901760
    %677 = vmatpush1.msra.mxu0 %v676
    %678 = vmatprep.subr.mxu0 0.0
    %679 = vmatpush1.msra.mxu0 0.0
    %680 = vmatprep.subr.mxu0 0.0
    %681 = vmatpush1.msra.mxu0 0.0
    %682 = vmatprep.subr.mxu0 0.0
    %683 = vmatpush1.msra.mxu0 0.0
    %684 = vmatprep.subr.mxu0 0.0
    %685 = vmatpush1.msra.mxu0 0.0
    %686 = vmatprep.subr.mxu0 0.0
    %687 = vmatpush1.msra.mxu0 0.0
    %688 = vmatprep.subr.mxu0 0.0
    %689 = vmatpush1.msra.mxu0 0.0
    %690 = vmatprep.subr.mxu0 0.0
    %691 = vmatpush1.msra.mxu0 0.0
    %692 = vmatprep.subr.mxu0 0.0
    %693 = vmatpush1.msra.mxu0 0.0
    %694 = vmatprep.subr.mxu0 0.0
    %695 = vmatpush1.msra.mxu0 0.0
    %696 = vmatprep.subr.mxu0 0.0
    %697 = vmatpush1.msra.mxu0 0.0
    %698 = vmatprep.subr.mxu0 0.0
    %699 = vmatpush1.msra.mxu0 0.0
    %700 = vmatprep.subr.mxu0 0.0
    %701 = vmatpush1.msra.mxu0 0.0
    %702 = vmatprep.subr.mxu0 0.0
    %703 = vmatpush1.msra.mxu0 0.0
    %704 = vmatprep.subr.mxu0 0.0
    %705 = vmatpush1.msra.mxu0 0.0
    %706 = vmatprep.subr.mxu0 0.0
    %707 = vmatpush1.msra.mxu0 0.0
    %708 = vmatprep.subr.mxu0 0.0
    %709 = vmatpush1.msra.mxu0 0.0
    %710 = vmatprep.subr.mxu0 0.0
    %711 = vmatpush1.msra.mxu0 0.0
    %712 = vmatprep.subr.mxu0 0.0
    %713 = vmatpush1.msra.mxu0 0.0
    %714 = vmatprep.subr.mxu0 0.0
    %715 = vmatpush1.msra.mxu0 0.0
    %716 = vmatprep.subr.mxu0 0.0
    %717 = vmatpush1.msra.mxu0 0.0
    %718 = vmatprep.subr.mxu0 0.0
    %719 = vmatpush1.msra.mxu0 0.0
    %720 = vmatprep.subr.mxu0 0.0
    %721 = vmatpush1.msra.mxu0 0.0
    %722 = vmatprep.subr.mxu0 0.0
    %723 = vmatpush1.msra.mxu0 0.0
    %724 = vmatprep.subr.mxu0 0.0
    %725 = vmatpush1.msra.mxu0 0.0
    %726 = vmatprep.subr.mxu0 0.0
    %727 = vmatpush1.msra.mxu0 0.0
    %728 = vmatprep.subr.mxu0 0.0
    %729 = vmatpush1.msra.mxu0 0.0
    %730 = vmatprep.subr.mxu0 0.0
    %731 = vmatpush1.msra.mxu0 0.0
    %732 = vmatprep.subr.mxu0 0.0
    %733 = vmatpush1.msra.mxu0 0.0
    %734 = vmatprep.mubr.f32.mxu0 0.0
    %v735 = vand.u32 %v569, 4294901760
    %736 = vmatmul.mubr.f32.gmra.mrb[0].mxu0 %v735
    %v737 = vpop.f32.mrb[0].mxu0
    %v738 = vadd.f32 %v647, %v737
    %v739 = vpop.f32.mrb[0].mxu0
    %740 = vdwg.mxu0
    %741 = vmatprep.subr.mxu0 0.0
    %v742 = vand.u32 %v58, 4294901760
    %v743 = vsub.f32 %v58, %v742
    %744 = vmatpush1.msra.mxu0 %v743
    %745 = vmatprep.subr.mxu0 0.0
    %v746 = vand.u32 %v59, 4294901760
    %v747 = vsub.f32 %v59, %v746
    %748 = vmatpush1.msra.mxu0 %v747
    %749 = vmatprep.subr.mxu0 0.0
    %v750 = vand.u32 %v60, 4294901760
    %v751 = vsub.f32 %v60, %v750
    %752 = vmatpush1.msra.mxu0 %v751
    %753 = vmatprep.subr.mxu0 0.0
    %v754 = vand.u32 %v61, 4294901760
    %v755 = vsub.f32 %v61, %v754
    %756 = vmatpush1.msra.mxu0 %v755
    %757 = vmatprep.subr.mxu0 0.0
    %758 = vmatpush1.msra.mxu0 0.0
    %759 = vmatprep.subr.mxu0 0.0
    %760 = vmatpush1.msra.mxu0 0.0
    %761 = vmatprep.subr.mxu0 0.0
    %762 = vmatpush1.msra.mxu0 0.0
    %763 = vmatprep.subr.mxu0 0.0
    %764 = vmatpush1.msra.mxu0 0.0
    %765 = vmatprep.subr.mxu0 0.0
    %766 = vmatpush1.msra.mxu0 0.0
    %767 = vmatprep.subr.mxu0 0.0
    %768 = vmatpush1.msra.mxu0 0.0
    %769 = vmatprep.subr.mxu0 0.0
    %770 = vmatpush1.msra.mxu0 0.0
    %771 = vmatprep.subr.mxu0 0.0
    %772 = vmatpush1.msra.mxu0 0.0
    %773 = vmatprep.subr.mxu0 0.0
    %774 = vmatpush1.msra.mxu0 0.0
    %775 = vmatprep.subr.mxu0 0.0
    %776 = vmatpush1.msra.mxu0 0.0
    %777 = vmatprep.subr.mxu0 0.0
    %778 = vmatpush1.msra.mxu0 0.0
    %779 = vmatprep.subr.mxu0 0.0
    %780 = vmatpush1.msra.mxu0 0.0
    %781 = vmatprep.subr.mxu0 0.0
    %782 = vmatpush1.msra.mxu0 0.0
    %783 = vmatprep.subr.mxu0 0.0
    %784 = vmatpush1.msra.mxu0 0.0
    %785 = vmatprep.subr.mxu0 0.0
    %786 = vmatpush1.msra.mxu0 0.0
    %787 = vmatprep.subr.mxu0 0.0
    %788 = vmatpush1.msra.mxu0 0.0
    %789 = vmatprep.subr.mxu0 0.0
    %790 = vmatpush1.msra.mxu0 0.0
    %791 = vmatprep.subr.mxu0 0.0
    %792 = vmatpush1.msra.mxu0 0.0
    %793 = vmatprep.subr.mxu0 0.0
    %794 = vmatpush1.msra.mxu0 0.0
    %795 = vmatprep.subr.mxu0 0.0
    %796 = vmatpush1.msra.mxu0 0.0
    %797 = vmatprep.subr.mxu0 0.0
    %798 = vmatpush1.msra.mxu0 0.0
    %799 = vmatprep.subr.mxu0 0.0
    %800 = vmatpush1.msra.mxu0 0.0
    %801 = vmatprep.subr.mxu0 0.0
    %802 = vmatpush1.msra.mxu0 0.0
    %803 = vmatprep.subr.mxu0 0.0
    %804 = vmatpush1.msra.mxu0 0.0
    %805 = vmatprep.subr.mxu0 0.0
    %806 = vmatpush1.msra.mxu0 0.0
    %807 = vmatprep.subr.mxu0 0.0
    %808 = vmatpush1.msra.mxu0 0.0
    %809 = vmatprep.subr.mxu0 0.0
    %810 = vmatpush1.msra.mxu0 0.0
    %811 = vmatprep.subr.mxu0 0.0
    %812 = vmatpush1.msra.mxu0 0.0
    %813 = vmatprep.mubr.f32.mxu0 0.0
    %v814 = vand.u32 %v569, 4294901760
    %v815 = vsub.f32 %v569, %v814
    %816 = vmatmul.mubr.f32.gmra.mrb[0].mxu0 %v815
    %v817 = vpop.f32.mrb[0].mxu0
    %v818 = vadd.f32 %v738, %v817
    %v819 = vpop.f32.mrb[0].mxu0
    %820 = vdwg.mxu0
    %821 = vmatprep.subr.mxu0 0.0
    %v822 = vand.u32 %v58, 4294901760
    %823 = vmatpush1.msra.mxu0 %v822
    %824 = vmatprep.subr.mxu0 0.0
    %v825 = vand.u32 %v59, 4294901760
    %826 = vmatpush1.msra.mxu0 %v825
    %827 = vmatprep.subr.mxu0 0.0
    %v828 = vand.u32 %v60, 4294901760
    %829 = vmatpush1.msra.mxu0 %v828
    %830 = vmatprep.subr.mxu0 0.0
    %v831 = vand.u32 %v61, 4294901760
    %832 = vmatpush1.msra.mxu0 %v831
    %833 = vmatprep.subr.mxu0 0.0
    %834 = vmatpush1.msra.mxu0 0.0
    %835 = vmatprep.subr.mxu0 0.0
    %836 = vmatpush1.msra.mxu0 0.0
    %837 = vmatprep.subr.mxu0 0.0
    %838 = vmatpush1.msra.mxu0 0.0
    %839 = vmatprep.subr.mxu0 0.0
    %840 = vmatpush1.msra.mxu0 0.0
    %841 = vmatprep.subr.mxu0 0.0
    %842 = vmatpush1.msra.mxu0 0.0
    %843 = vmatprep.subr.mxu0 0.0
    %844 = vmatpush1.msra.mxu0 0.0
    %845 = vmatprep.subr.mxu0 0.0
    %846 = vmatpush1.msra.mxu0 0.0
    %847 = vmatprep.subr.mxu0 0.0
    %848 = vmatpush1.msra.mxu0 0.0
    %849 = vmatprep.subr.mxu0 0.0
    %850 = vmatpush1.msra.mxu0 0.0
    %851 = vmatprep.subr.mxu0 0.0
    %852 = vmatpush1.msra.mxu0 0.0
    %853 = vmatprep.subr.mxu0 0.0
    %854 = vmatpush1.msra.mxu0 0.0
    %855 = vmatprep.subr.mxu0 0.0
    %856 = vmatpush1.msra.mxu0 0.0
    %857 = vmatprep.subr.mxu0 0.0
    %858 = vmatpush1.msra.mxu0 0.0
    %859 = vmatprep.subr.mxu0 0.0
    %860 = vmatpush1.msra.mxu0 0.0
    %861 = vmatprep.subr.mxu0 0.0
    %862 = vmatpush1.msra.mxu0 0.0
    %863 = vmatprep.subr.mxu0 0.0
    %864 = vmatpush1.msra.mxu0 0.0
    %865 = vmatprep.subr.mxu0 0.0
    %866 = vmatpush1.msra.mxu0 0.0
    %867 = vmatprep.subr.mxu0 0.0
    %868 = vmatpush1.msra.mxu0 0.0
    %869 = vmatprep.subr.mxu0 0.0
    %870 = vmatpush1.msra.mxu0 0.0
    %871 = vmatprep.subr.mxu0 0.0
    %872 = vmatpush1.msra.mxu0 0.0
    %873 = vmatprep.subr.mxu0 0.0
    %874 = vmatpush1.msra.mxu0 0.0
    %875 = vmatprep.subr.mxu0 0.0
    %876 = vmatpush1.msra.mxu0 0.0
    %877 = vmatprep.subr.mxu0 0.0
    %878 = vmatpush1.msra.mxu0 0.0
    %879 = vmatprep.subr.mxu0 0.0
    %880 = vmatpush1.msra.mxu0 0.0
    %881 = vmatprep.subr.mxu0 0.0
    %882 = vmatpush1.msra.mxu0 0.0
    %883 = vmatprep.subr.mxu0 0.0
    %884 = vmatpush1.msra.mxu0 0.0
    %885 = vmatprep.subr.mxu0 0.0
    %886 = vmatpush1.msra.mxu0 0.0
    %887 = vmatprep.subr.mxu0 0.0
    %888 = vmatpush1.msra.mxu0 0.0
    %889 = vmatprep.mubr.f32.mxu0 0.0
    %v890 = vand.u32 %v569, 4294901760
    %v891 = vsub.f32 %v569, %v890
    %v892 = vand.u32 %v891, 4294901760
    %893 = vmatmul.mubr.f32.gmra.mrb[0].mxu0 %v892
    %v894 = vpop.f32.mrb[0].mxu0
    %v895 = vadd.f32 %v818, %v894
    %v896 = vpop.f32.mrb[0].mxu0
    %897 = vdwg.mxu0
    %898 = vmatprep.subr.mxu0 0.0
    %v899 = vand.u32 %v58, 4294901760
    %v900 = vsub.f32 %v58, %v899
    %v901 = vand.u32 %v900, 4294901760
    %902 = vmatpush1.msra.mxu0 %v901
    %903 = vmatprep.subr.mxu0 0.0
    %v904 = vand.u32 %v59, 4294901760
    %v905 = vsub.f32 %v59, %v904
    %v906 = vand.u32 %v905, 4294901760
    %907 = vmatpush1.msra.mxu0 %v906
    %908 = vmatprep.subr.mxu0 0.0
    %v909 = vand.u32 %v60, 4294901760
    %v910 = vsub.f32 %v60, %v909
    %v911 = vand.u32 %v910, 4294901760
    %912 = vmatpush1.msra.mxu0 %v911
    %913 = vmatprep.subr.mxu0 0.0
    %v914 = vand.u32 %v61, 4294901760
    %v915 = vsub.f32 %v61, %v914
    %v916 = vand.u32 %v915, 4294901760
    %917 = vmatpush1.msra.mxu0 %v916
    %918 = vmatprep.subr.mxu0 0.0
    %919 = vmatpush1.msra.mxu0 0.0
    %920 = vmatprep.subr.mxu0 0.0
    %921 = vmatpush1.msra.mxu0 0.0
    %922 = vmatprep.subr.mxu0 0.0
    %923 = vmatpush1.msra.mxu0 0.0
    %924 = vmatprep.subr.mxu0 0.0
    %925 = vmatpush1.msra.mxu0 0.0
    %926 = vmatprep.subr.mxu0 0.0
    %927 = vmatpush1.msra.mxu0 0.0
    %928 = vmatprep.subr.mxu0 0.0
    %929 = vmatpush1.msra.mxu0 0.0
    %930 = vmatprep.subr.mxu0 0.0
    %931 = vmatpush1.msra.mxu0 0.0
    %932 = vmatprep.subr.mxu0 0.0
    %933 = vmatpush1.msra.mxu0 0.0
    %934 = vmatprep.subr.mxu0 0.0
    %935 = vmatpush1.msra.mxu0 0.0
    %936 = vmatprep.subr.mxu0 0.0
    %937 = vmatpush1.msra.mxu0 0.0
    %938 = vmatprep.subr.mxu0 0.0
    %939 = vmatpush1.msra.mxu0 0.0
    %940 = vmatprep.subr.mxu0 0.0
    %941 = vmatpush1.msra.mxu0 0.0
    %942 = vmatprep.subr.mxu0 0.0
    %943 = vmatpush1.msra.mxu0 0.0
    %944 = vmatprep.subr.mxu0 0.0
    %945 = vmatpush1.msra.mxu0 0.0
    %946 = vmatprep.subr.mxu0 0.0
    %947 = vmatpush1.msra.mxu0 0.0
    %948 = vmatprep.subr.mxu0 0.0
    %949 = vmatpush1.msra.mxu0 0.0
    %950 = vmatprep.subr.mxu0 0.0
    %951 = vmatpush1.msra.mxu0 0.0
    %952 = vmatprep.subr.mxu0 0.0
    %953 = vmatpush1.msra.mxu0 0.0
    %954 = vmatprep.subr.mxu0 0.0
    %955 = vmatpush1.msra.mxu0 0.0
    %956 = vmatprep.subr.mxu0 0.0
    %957 = vmatpush1.msra.mxu0 0.0
    %958 = vmatprep.subr.mxu0 0.0
    %959 = vmatpush1.msra.mxu0 0.0
    %960 = vmatprep.subr.mxu0 0.0
    %961 = vmatpush1.msra.mxu0 0.0
    %962 = vmatprep.subr.mxu0 0.0
    %963 = vmatpush1.msra.mxu0 0.0
    %964 = vmatprep.subr.mxu0 0.0
    %965 = vmatpush1.msra.mxu0 0.0
    %966 = vmatprep.subr.mxu0 0.0
    %967 = vmatpush1.msra.mxu0 0.0
    %968 = vmatprep.subr.mxu0 0.0
    %969 = vmatpush1.msra.mxu0 0.0
    %970 = vmatprep.subr.mxu0 0.0
    %971 = vmatpush1.msra.mxu0 0.0
    %972 = vmatprep.subr.mxu0 0.0
    %973 = vmatpush1.msra.mxu0 0.0
    %974 = vmatprep.mubr.f32.mxu0 0.0
    %v975 = vand.u32 %v569, 4294901760
    %976 = vmatmul.mubr.f32.gmra.mrb[0].mxu0 %v975
    %v977 = vpop.f32.mrb[0].mxu0
    %v978 = vadd.f32 %v895, %v977
    %v979 = vpop.f32.mrb[0].mxu0
    %980 = vdwg.mxu0
    %981 = vmatprep.subr.mxu0 0.0
    %v982 = vand.u32 %v58, 4294901760
    %983 = vmatpush1.msra.mxu0 %v982
    %984 = vmatprep.subr.mxu0 0.0
    %v985 = vand.u32 %v59, 4294901760
    %986 = vmatpush1.msra.mxu0 %v985
    %987 = vmatprep.subr.mxu0 0.0
    %v988 = vand.u32 %v60, 4294901760
    %989 = vmatpush1.msra.mxu0 %v988
    %990 = vmatprep.subr.mxu0 0.0
    %v991 = vand.u32 %v61, 4294901760
    %992 = vmatpush1.msra.mxu0 %v991
    %993 = vmatprep.subr.mxu0 0.0
    %994 = vmatpush1.msra.mxu0 0.0
    %995 = vmatprep.subr.mxu0 0.0
    %996 = vmatpush1.msra.mxu0 0.0
    %997 = vmatprep.subr.mxu0 0.0
    %998 = vmatpush1.msra.mxu0 0.0
    %999 = vmatprep.subr.mxu0 0.0
    %1000 = vmatpush1.msra.mxu0 0.0
    %1001 = vmatprep.subr.mxu0 0.0
    %1002 = vmatpush1.msra.mxu0 0.0
    %1003 = vmatprep.subr.mxu0 0.0
    %1004 = vmatpush1.msra.mxu0 0.0
    %1005 = vmatprep.subr.mxu0 0.0
    %1006 = vmatpush1.msra.mxu0 0.0
    %1007 = vmatprep.subr.mxu0 0.0
    %1008 = vmatpush1.msra.mxu0 0.0
    %1009 = vmatprep.subr.mxu0 0.0
    %1010 = vmatpush1.msra.mxu0 0.0
    %1011 = vmatprep.subr.mxu0 0.0
    %1012 = vmatpush1.msra.mxu0 0.0
    %1013 = vmatprep.subr.mxu0 0.0
    %1014 = vmatpush1.msra.mxu0 0.0
    %1015 = vmatprep.subr.mxu0 0.0
    %1016 = vmatpush1.msra.mxu0 0.0
    %1017 = vmatprep.subr.mxu0 0.0
    %1018 = vmatpush1.msra.mxu0 0.0
    %1019 = vmatprep.subr.mxu0 0.0
    %1020 = vmatpush1.msra.mxu0 0.0
    %1021 = vmatprep.subr.mxu0 0.0
    %1022 = vmatpush1.msra.mxu0 0.0
    %1023 = vmatprep.subr.mxu0 0.0
    %1024 = vmatpush1.msra.mxu0 0.0
    %1025 = vmatprep.subr.mxu0 0.0
    %1026 = vmatpush1.msra.mxu0 0.0
    %1027 = vmatprep.subr.mxu0 0.0
    %1028 = vmatpush1.msra.mxu0 0.0
    %1029 = vmatprep.subr.mxu0 0.0
    %1030 = vmatpush1.msra.mxu0 0.0
    %1031 = vmatprep.subr.mxu0 0.0
    %1032 = vmatpush1.msra.mxu0 0.0
    %1033 = vmatprep.subr.mxu0 0.0
    %1034 = vmatpush1.msra.mxu0 0.0
    %1035 = vmatprep.subr.mxu0 0.0
    %1036 = vmatpush1.msra.mxu0 0.0
    %1037 = vmatprep.subr.mxu0 0.0
    %1038 = vmatpush1.msra.mxu0 0.0
    %1039 = vmatprep.subr.mxu0 0.0
    %1040 = vmatpush1.msra.mxu0 0.0
    %1041 = vmatprep.subr.mxu0 0.0
    %1042 = vmatpush1.msra.mxu0 0.0
    %1043 = vmatprep.subr.mxu0 0.0
    %1044 = vmatpush1.msra.mxu0 0.0
    %1045 = vmatprep.subr.mxu0 0.0
    %1046 = vmatpush1.msra.mxu0 0.0
    %1047 = vmatprep.subr.mxu0 0.0
    %1048 = vmatpush1.msra.mxu0 0.0
    %1049 = vmatprep.mubr.f32.mxu0 0.0
    %v1050 = vand.u32 %v569, 4294901760
    %1051 = vmatmul.mubr.f32.gmra.mrb[0].mxu0 %v1050
    %v1052 = vpop.f32.mrb[0].mxu0
    %v1053 = vadd.f32 %v978, %v1052
    %v1054 = vpop.f32.mrb[0].mxu0
    %1055 = vdwg.mxu0
    %1057 = vrot.lane.b32.xlu0 %v1053, 96
    %v1058 = vpop.permute.xlu0 %1057
    %s1060 = scalar_lea.vmem %s4, 8
    %1061 = vst.msk [vmem:[%s1060] sm:$0xff] %vm558, %v1058
    %v1062 = vmul.f32 %v560, %v565
    %v1063 = vadd.f32 %v1062, %v1053
    %s1064 = scalar_lea.vmem [#allocation5], 16
    %v1065 = vld [vmem:[%s1064] sm:$0xff]
    %v1066 = vadd.f32 %v1063, %v1065
    %v1067 = vtanh.pop %v1066
    %v1068 = vmax.f32 %v1067, 0.0
    %v1070 = vsel %vm65, %v1068, 0
    %1072 = vmatprep.subr.mxu0 0.0
    %v1073 = vand.u32 %v58, 4294901760
    %1074 = vmatpush1.msra.mxu0 %v1073
    %1075 = vmatprep.subr.mxu0 0.0
    %v1076 = vand.u32 %v59, 4294901760
    %1077 = vmatpush1.msra.mxu0 %v1076
    %1078 = vmatprep.subr.mxu0 0.0
    %v1079 = vand.u32 %v60, 4294901760
    %1080 = vmatpush1.msra.mxu0 %v1079
    %1081 = vmatprep.subr.mxu0 0.0
    %v1082 = vand.u32 %v61, 4294901760
    %1083 = vmatpush1.msra.mxu0 %v1082
    %1084 = vmatprep.subr.mxu0 0.0
    %1085 = vmatpush1.msra.mxu0 0.0
    %1086 = vmatprep.subr.mxu0 0.0
    %1087 = vmatpush1.msra.mxu0 0.0
    %1088 = vmatprep.subr.mxu0 0.0
    %1089 = vmatpush1.msra.mxu0 0.0
    %1090 = vmatprep.subr.mxu0 0.0
    %1091 = vmatpush1.msra.mxu0 0.0
    %1092 = vmatprep.subr.mxu0 0.0
    %1093 = vmatpush1.msra.mxu0 0.0
    %1094 = vmatprep.subr.mxu0 0.0
    %1095 = vmatpush1.msra.mxu0 0.0
    %1096 = vmatprep.subr.mxu0 0.0
    %1097 = vmatpush1.msra.mxu0 0.0
    %1098 = vmatprep.subr.mxu0 0.0
    %1099 = vmatpush1.msra.mxu0 0.0
    %1100 = vmatprep.subr.mxu0 0.0
    %1101 = vmatpush1.msra.mxu0 0.0
    %1102 = vmatprep.subr.mxu0 0.0
    %1103 = vmatpush1.msra.mxu0 0.0
    %1104 = vmatprep.subr.mxu0 0.0
    %1105 = vmatpush1.msra.mxu0 0.0
    %1106 = vmatprep.subr.mxu0 0.0
    %1107 = vmatpush1.msra.mxu0 0.0
    %1108 = vmatprep.subr.mxu0 0.0
    %1109 = vmatpush1.msra.mxu0 0.0
    %1110 = vmatprep.subr.mxu0 0.0
    %1111 = vmatpush1.msra.mxu0 0.0
    %1112 = vmatprep.subr.mxu0 0.0
    %1113 = vmatpush1.msra.mxu0 0.0
    %1114 = vmatprep.subr.mxu0 0.0
    %1115 = vmatpush1.msra.mxu0 0.0
    %1116 = vmatprep.subr.mxu0 0.0
    %1117 = vmatpush1.msra.mxu0 0.0
    %1118 = vmatprep.subr.mxu0 0.0
    %1119 = vmatpush1.msra.mxu0 0.0
    %1120 = vmatprep.subr.mxu0 0.0
    %1121 = vmatpush1.msra.mxu0 0.0
    %1122 = vmatprep.subr.mxu0 0.0
    %1123 = vmatpush1.msra.mxu0 0.0
    %1124 = vmatprep.subr.mxu0 0.0
    %1125 = vmatpush1.msra.mxu0 0.0
    %1126 = vmatprep.subr.mxu0 0.0
    %1127 = vmatpush1.msra.mxu0 0.0
    %1128 = vmatprep.subr.mxu0 0.0
    %1129 = vmatpush1.msra.mxu0 0.0
    %1130 = vmatprep.subr.mxu0 0.0
    %1131 = vmatpush1.msra.mxu0 0.0
    %1132 = vmatprep.subr.mxu0 0.0
    %1133 = vmatpush1.msra.mxu0 0.0
    %1134 = vmatprep.subr.mxu0 0.0
    %1135 = vmatpush1.msra.mxu0 0.0
    %1136 = vmatprep.subr.mxu0 0.0
    %1137 = vmatpush1.msra.mxu0 0.0
    %1138 = vmatprep.subr.mxu0 0.0
    %1139 = vmatpush1.msra.mxu0 0.0
    %1140 = vmatprep.mubr.f32.mxu0 0.0
    %v1141 = vand.u32 %v1070, 4294901760
    %v1142 = vsub.f32 %v1070, %v1141
    %v1143 = vand.u32 %v1142, 4294901760
    %v1144 = vsub.f32 %v1142, %v1143
    %v1145 = vand.u32 %v1144, 4294901760
    %1146 = vmatmul.mubr.f32.gmra.mrb[0].mxu0 %v1145
    %v1147 = vpop.f32.mrb[0].mxu0
    %v1148 = vadd.f32 0.0, %v1147
    %v1149 = vpop.f32.mrb[0].mxu0
    %1150 = vdwg.mxu0
    %1151 = vmatprep.subr.mxu0 0.0
    %v1152 = vand.u32 %v58, 4294901760
    %v1153 = vsub.f32 %v58, %v1152
    %v1154 = vand.u32 %v1153, 4294901760
    %v1155 = vsub.f32 %v1153, %v1154
    %v1156 = vand.u32 %v1155, 4294901760
    %1157 = vmatpush1.msra.mxu0 %v1156
    %1158 = vmatprep.subr.mxu0 0.0
    %v1159 = vand.u32 %v59, 4294901760
    %v1160 = vsub.f32 %v59, %v1159
    %v1161 = vand.u32 %v1160, 4294901760
    %v1162 = vsub.f32 %v1160, %v1161
    %v1163 = vand.u32 %v1162, 4294901760
    %1164 = vmatpush1.msra.mxu0 %v1163
    %1165 = vmatprep.subr.mxu0 0.0
    %v1166 = vand.u32 %v60, 4294901760
    %v1167 = vsub.f32 %v60, %v1166
    %v1168 = vand.u32 %v1167, 4294901760
    %v1169 = vsub.f32 %v1167, %v1168
    %v1170 = vand.u32 %v1169, 4294901760
    %1171 = vmatpush1.msra.mxu0 %v1170
    %1172 = vmatprep.subr.mxu0 0.0
    %v1173 = vand.u32 %v61, 4294901760
    %v1174 = vsub.f32 %v61, %v1173
    %v1175 = vand.u32 %v1174, 4294901760
    %v1176 = vsub.f32 %v1174, %v1175
    %v1177 = vand.u32 %v1176, 4294901760
    %1178 = vmatpush1.msra.mxu0 %v1177
    %1179 = vmatprep.subr.mxu0 0.0
    %1180 = vmatpush1.msra.mxu0 0.0
    %1181 = vmatprep.subr.mxu0 0.0
    %1182 = vmatpush1.msra.mxu0 0.0
    %1183 = vmatprep.subr.mxu0 0.0
    %1184 = vmatpush1.msra.mxu0 0.0
    %1185 = vmatprep.subr.mxu0 0.0
    %1186 = vmatpush1.msra.mxu0 0.0
    %1187 = vmatprep.subr.mxu0 0.0
    %1188 = vmatpush1.msra.mxu0 0.0
    %1189 = vmatprep.subr.mxu0 0.0
    %1190 = vmatpush1.msra.mxu0 0.0
    %1191 = vmatprep.subr.mxu0 0.0
    %1192 = vmatpush1.msra.mxu0 0.0
    %1193 = vmatprep.subr.mxu0 0.0
    %1194 = vmatpush1.msra.mxu0 0.0
    %1195 = vmatprep.subr.mxu0 0.0
    %1196 = vmatpush1.msra.mxu0 0.0
    %1197 = vmatprep.subr.mxu0 0.0
    %1198 = vmatpush1.msra.mxu0 0.0
    %1199 = vmatprep.subr.mxu0 0.0
    %1200 = vmatpush1.msra.mxu0 0.0
    %1201 = vmatprep.subr.mxu0 0.0
    %1202 = vmatpush1.msra.mxu0 0.0
    %1203 = vmatprep.subr.mxu0 0.0
    %1204 = vmatpush1.msra.mxu0 0.0
    %1205 = vmatprep.subr.mxu0 0.0
    %1206 = vmatpush1.msra.mxu0 0.0
    %1207 = vmatprep.subr.mxu0 0.0
    %1208 = vmatpush1.msra.mxu0 0.0
    %1209 = vmatprep.subr.mxu0 0.0
    %1210 = vmatpush1.msra.mxu0 0.0
    %1211 = vmatprep.subr.mxu0 0.0
    %1212 = vmatpush1.msra.mxu0 0.0
    %1213 = vmatprep.subr.mxu0 0.0
    %1214 = vmatpush1.msra.mxu0 0.0
    %1215 = vmatprep.subr.mxu0 0.0
    %1216 = vmatpush1.msra.mxu0 0.0
    %1217 = vmatprep.subr.mxu0 0.0
    %1218 = vmatpush1.msra.mxu0 0.0
    %1219 = vmatprep.subr.mxu0 0.0
    %1220 = vmatpush1.msra.mxu0 0.0
    %1221 = vmatprep.subr.mxu0 0.0
    %1222 = vmatpush1.msra.mxu0 0.0
    %1223 = vmatprep.subr.mxu0 0.0
    %1224 = vmatpush1.msra.mxu0 0.0
    %1225 = vmatprep.subr.mxu0 0.0
    %1226 = vmatpush1.msra.mxu0 0.0
    %1227 = vmatprep.subr.mxu0 0.0
    %1228 = vmatpush1.msra.mxu0 0.0
    %1229 = vmatprep.subr.mxu0 0.0
    %1230 = vmatpush1.msra.mxu0 0.0
    %1231 = vmatprep.subr.mxu0 0.0
    %1232 = vmatpush1.msra.mxu0 0.0
    %1233 = vmatprep.subr.mxu0 0.0
    %1234 = vmatpush1.msra.mxu0 0.0
    %1235 = vmatprep.mubr.f32.mxu0 0.0
    %v1236 = vand.u32 %v1070, 4294901760
    %1237 = vmatmul.mubr.f32.gmra.mrb[0].mxu0 %v1236
    %v1238 = vpop.f32.mrb[0].mxu0
    %v1239 = vadd.f32 %v1148, %v1238
    %v1240 = vpop.f32.mrb[0].mxu0
    %1241 = vdwg.mxu0
    %1242 = vmatprep.subr.mxu0 0.0
    %v1243 = vand.u32 %v58, 4294901760
    %v1244 = vsub.f32 %v58, %v1243
    %1245 = vmatpush1.msra.mxu0 %v1244
    %1246 = vmatprep.subr.mxu0 0.0
    %v1247 = vand.u32 %v59, 4294901760
    %v1248 = vsub.f32 %v59, %v1247
    %1249 = vmatpush1.msra.mxu0 %v1248
    %1250 = vmatprep.subr.mxu0 0.0
    %v1251 = vand.u32 %v60, 4294901760
    %v1252 = vsub.f32 %v60, %v1251
    %1253 = vmatpush1.msra.mxu0 %v1252
    %1254 = vmatprep.subr.mxu0 0.0
    %v1255 = vand.u32 %v61, 4294901760
    %v1256 = vsub.f32 %v61, %v1255
    %1257 = vmatpush1.msra.mxu0 %v1256
    %1258 = vmatprep.subr.mxu0 0.0
    %1259 = vmatpush1.msra.mxu0 0.0
    %1260 = vmatprep.subr.mxu0 0.0
    %1261 = vmatpush1.msra.mxu0 0.0
    %1262 = vmatprep.subr.mxu0 0.0
    %1263 = vmatpush1.msra.mxu0 0.0
    %1264 = vmatprep.subr.mxu0 0.0
    %1265 = vmatpush1.msra.mxu0 0.0
    %1266 = vmatprep.subr.mxu0 0.0
    %1267 = vmatpush1.msra.mxu0 0.0
    %1268 = vmatprep.subr.mxu0 0.0
    %1269 = vmatpush1.msra.mxu0 0.0
    %1270 = vmatprep.subr.mxu0 0.0
    %1271 = vmatpush1.msra.mxu0 0.0
    %1272 = vmatprep.subr.mxu0 0.0
    %1273 = vmatpush1.msra.mxu0 0.0
    %1274 = vmatprep.subr.mxu0 0.0
    %1275 = vmatpush1.msra.mxu0 0.0
    %1276 = vmatprep.subr.mxu0 0.0
    %1277 = vmatpush1.msra.mxu0 0.0
    %1278 = vmatprep.subr.mxu0 0.0
    %1279 = vmatpush1.msra.mxu0 0.0
    %1280 = vmatprep.subr.mxu0 0.0
    %1281 = vmatpush1.msra.mxu0 0.0
    %1282 = vmatprep.subr.mxu0 0.0
    %1283 = vmatpush1.msra.mxu0 0.0
    %1284 = vmatprep.subr.mxu0 0.0
    %1285 = vmatpush1.msra.mxu0 0.0
    %1286 = vmatprep.subr.mxu0 0.0
    %1287 = vmatpush1.msra.mxu0 0.0
    %1288 = vmatprep.subr.mxu0 0.0
    %1289 = vmatpush1.msra.mxu0 0.0
    %1290 = vmatprep.subr.mxu0 0.0
    %1291 = vmatpush1.msra.mxu0 0.0
    %1292 = vmatprep.subr.mxu0 0.0
    %1293 = vmatpush1.msra.mxu0 0.0
    %1294 = vmatprep.subr.mxu0 0.0
    %1295 = vmatpush1.msra.mxu0 0.0
    %1296 = vmatprep.subr.mxu0 0.0
    %1297 = vmatpush1.msra.mxu0 0.0
    %1298 = vmatprep.subr.mxu0 0.0
    %1299 = vmatpush1.msra.mxu0 0.0
    %1300 = vmatprep.subr.mxu0 0.0
    %1301 = vmatpush1.msra.mxu0 0.0
    %1302 = vmatprep.subr.mxu0 0.0
    %1303 = vmatpush1.msra.mxu0 0.0
    %1304 = vmatprep.subr.mxu0 0.0
    %1305 = vmatpush1.msra.mxu0 0.0
    %1306 = vmatprep.subr.mxu0 0.0
    %1307 = vmatpush1.msra.mxu0 0.0
    %1308 = vmatprep.subr.mxu0 0.0
    %1309 = vmatpush1.msra.mxu0 0.0
    %1310 = vmatprep.subr.mxu0 0.0
    %1311 = vmatpush1.msra.mxu0 0.0
    %1312 = vmatprep.subr.mxu0 0.0
    %1313 = vmatpush1.msra.mxu0 0.0
    %1314 = vmatprep.mubr.f32.mxu0 0.0
    %v1315 = vand.u32 %v1070, 4294901760
    %v1316 = vsub.f32 %v1070, %v1315
    %1317 = vmatmul.mubr.f32.gmra.mrb[0].mxu0 %v1316
    %v1318 = vpop.f32.mrb[0].mxu0
    %v1319 = vadd.f32 %v1239, %v1318
    %v1320 = vpop.f32.mrb[0].mxu0
    %1321 = vdwg.mxu0
    %1322 = vmatprep.subr.mxu0 0.0
    %v1323 = vand.u32 %v58, 4294901760
    %1324 = vmatpush1.msra.mxu0 %v1323
    %1325 = vmatprep.subr.mxu0 0.0
    %v1326 = vand.u32 %v59, 4294901760
    %1327 = vmatpush1.msra.mxu0 %v1326
    %1328 = vmatprep.subr.mxu0 0.0
    %v1329 = vand.u32 %v60, 4294901760
    %1330 = vmatpush1.msra.mxu0 %v1329
    %1331 = vmatprep.subr.mxu0 0.0
    %v1332 = vand.u32 %v61, 4294901760
    %1333 = vmatpush1.msra.mxu0 %v1332
    %1334 = vmatprep.subr.mxu0 0.0
    %1335 = vmatpush1.msra.mxu0 0.0
    %1336 = vmatprep.subr.mxu0 0.0
    %1337 = vmatpush1.msra.mxu0 0.0
    %1338 = vmatprep.subr.mxu0 0.0
    %1339 = vmatpush1.msra.mxu0 0.0
    %1340 = vmatprep.subr.mxu0 0.0
    %1341 = vmatpush1.msra.mxu0 0.0
    %1342 = vmatprep.subr.mxu0 0.0
    %1343 = vmatpush1.msra.mxu0 0.0
    %1344 = vmatprep.subr.mxu0 0.0
    %1345 = vmatpush1.msra.mxu0 0.0
    %1346 = vmatprep.subr.mxu0 0.0
    %1347 = vmatpush1.msra.mxu0 0.0
    %1348 = vmatprep.subr.mxu0 0.0
    %1349 = vmatpush1.msra.mxu0 0.0
    %1350 = vmatprep.subr.mxu0 0.0
    %1351 = vmatpush1.msra.mxu0 0.0
    %1352 = vmatprep.subr.mxu0 0.0
    %1353 = vmatpush1.msra.mxu0 0.0
    %1354 = vmatprep.subr.mxu0 0.0
    %1355 = vmatpush1.msra.mxu0 0.0
    %1356 = vmatprep.subr.mxu0 0.0
    %1357 = vmatpush1.msra.mxu0 0.0
    %1358 = vmatprep.subr.mxu0 0.0
    %1359 = vmatpush1.msra.mxu0 0.0
    %1360 = vmatprep.subr.mxu0 0.0
    %1361 = vmatpush1.msra.mxu0 0.0
    %1362 = vmatprep.subr.mxu0 0.0
    %1363 = vmatpush1.msra.mxu0 0.0
    %1364 = vmatprep.subr.mxu0 0.0
    %1365 = vmatpush1.msra.mxu0 0.0
    %1366 = vmatprep.subr.mxu0 0.0
    %1367 = vmatpush1.msra.mxu0 0.0
    %1368 = vmatprep.subr.mxu0 0.0
    %1369 = vmatpush1.msra.mxu0 0.0
    %1370 = vmatprep.subr.mxu0 0.0
    %1371 = vmatpush1.msra.mxu0 0.0
    %1372 = vmatprep.subr.mxu0 0.0
    %1373 = vmatpush1.msra.mxu0 0.0
    %1374 = vmatprep.subr.mxu0 0.0
    %1375 = vmatpush1.msra.mxu0 0.0
    %1376 = vmatprep.subr.mxu0 0.0
    %1377 = vmatpush1.msra.mxu0 0.0
    %1378 = vmatprep.subr.mxu0 0.0
    %1379 = vmatpush1.msra.mxu0 0.0
    %1380 = vmatprep.subr.mxu0 0.0
    %1381 = vmatpush1.msra.mxu0 0.0
    %1382 = vmatprep.subr.mxu0 0.0
    %1383 = vmatpush1.msra.mxu0 0.0
    %1384 = vmatprep.subr.mxu0 0.0
    %1385 = vmatpush1.msra.mxu0 0.0
    %1386 = vmatprep.subr.mxu0 0.0
    %1387 = vmatpush1.msra.mxu0 0.0
    %1388 = vmatprep.subr.mxu0 0.0
    %1389 = vmatpush1.msra.mxu0 0.0
    %1390 = vmatprep.mubr.f32.mxu0 0.0
    %v1391 = vand.u32 %v1070, 4294901760
    %v1392 = vsub.f32 %v1070, %v1391
    %v1393 = vand.u32 %v1392, 4294901760
    %1394 = vmatmul.mubr.f32.gmra.mrb[0].mxu0 %v1393
    %v1395 = vpop.f32.mrb[0].mxu0
    %v1396 = vadd.f32 %v1319, %v1395
    %v1397 = vpop.f32.mrb[0].mxu0
    %1398 = vdwg.mxu0
    %1399 = vmatprep.subr.mxu0 0.0
    %v1400 = vand.u32 %v58, 4294901760
    %v1401 = vsub.f32 %v58, %v1400
    %v1402 = vand.u32 %v1401, 4294901760
    %1403 = vmatpush1.msra.mxu0 %v1402
    %1404 = vmatprep.subr.mxu0 0.0
    %v1405 = vand.u32 %v59, 4294901760
    %v1406 = vsub.f32 %v59, %v1405
    %v1407 = vand.u32 %v1406, 4294901760
    %1408 = vmatpush1.msra.mxu0 %v1407
    %1409 = vmatprep.subr.mxu0 0.0
    %v1410 = vand.u32 %v60, 4294901760
    %v1411 = vsub.f32 %v60, %v1410
    %v1412 = vand.u32 %v1411, 4294901760
    %1413 = vmatpush1.msra.mxu0 %v1412
    %1414 = vmatprep.subr.mxu0 0.0
    %v1415 = vand.u32 %v61, 4294901760
    %v1416 = vsub.f32 %v61, %v1415
    %v1417 = vand.u32 %v1416, 4294901760
    %1418 = vmatpush1.msra.mxu0 %v1417
    %1419 = vmatprep.subr.mxu0 0.0
    %1420 = vmatpush1.msra.mxu0 0.0
    %1421 = vmatprep.subr.mxu0 0.0
    %1422 = vmatpush1.msra.mxu0 0.0
    %1423 = vmatprep.subr.mxu0 0.0
    %1424 = vmatpush1.msra.mxu0 0.0
    %1425 = vmatprep.subr.mxu0 0.0
    %1426 = vmatpush1.msra.mxu0 0.0
    %1427 = vmatprep.subr.mxu0 0.0
    %1428 = vmatpush1.msra.mxu0 0.0
    %1429 = vmatprep.subr.mxu0 0.0
    %1430 = vmatpush1.msra.mxu0 0.0
    %1431 = vmatprep.subr.mxu0 0.0
    %1432 = vmatpush1.msra.mxu0 0.0
    %1433 = vmatprep.subr.mxu0 0.0
    %1434 = vmatpush1.msra.mxu0 0.0
    %1435 = vmatprep.subr.mxu0 0.0
    %1436 = vmatpush1.msra.mxu0 0.0
    %1437 = vmatprep.subr.mxu0 0.0
    %1438 = vmatpush1.msra.mxu0 0.0
    %1439 = vmatprep.subr.mxu0 0.0
    %1440 = vmatpush1.msra.mxu0 0.0
    %1441 = vmatprep.subr.mxu0 0.0
    %1442 = vmatpush1.msra.mxu0 0.0
    %1443 = vmatprep.subr.mxu0 0.0
    %1444 = vmatpush1.msra.mxu0 0.0
    %1445 = vmatprep.subr.mxu0 0.0
    %1446 = vmatpush1.msra.mxu0 0.0
    %1447 = vmatprep.subr.mxu0 0.0
    %1448 = vmatpush1.msra.mxu0 0.0
    %1449 = vmatprep.subr.mxu0 0.0
    %1450 = vmatpush1.msra.mxu0 0.0
    %1451 = vmatprep.subr.mxu0 0.0
    %1452 = vmatpush1.msra.mxu0 0.0
    %1453 = vmatprep.subr.mxu0 0.0
    %1454 = vmatpush1.msra.mxu0 0.0
    %1455 = vmatprep.subr.mxu0 0.0
    %1456 = vmatpush1.msra.mxu0 0.0
    %1457 = vmatprep.subr.mxu0 0.0
    %1458 = vmatpush1.msra.mxu0 0.0
    %1459 = vmatprep.subr.mxu0 0.0
    %1460 = vmatpush1.msra.mxu0 0.0
    %1461 = vmatprep.subr.mxu0 0.0
    %1462 = vmatpush1.msra.mxu0 0.0
    %1463 = vmatprep.subr.mxu0 0.0
    %1464 = vmatpush1.msra.mxu0 0.0
    %1465 = vmatprep.subr.mxu0 0.0
    %1466 = vmatpush1.msra.mxu0 0.0
    %1467 = vmatprep.subr.mxu0 0.0
    %1468 = vmatpush1.msra.mxu0 0.0
    %1469 = vmatprep.subr.mxu0 0.0
    %1470 = vmatpush1.msra.mxu0 0.0
    %1471 = vmatprep.subr.mxu0 0.0
    %1472 = vmatpush1.msra.mxu0 0.0
    %1473 = vmatprep.subr.mxu0 0.0
    %1474 = vmatpush1.msra.mxu0 0.0
    %1475 = vmatprep.mubr.f32.mxu0 0.0
    %v1476 = vand.u32 %v1070, 4294901760
    %1477 = vmatmul.mubr.f32.gmra.mrb[0].mxu0 %v1476
    %v1478 = vpop.f32.mrb[0].mxu0
    %v1479 = vadd.f32 %v1396, %v1478
    %v1480 = vpop.f32.mrb[0].mxu0
    %1481 = vdwg.mxu0
    %1482 = vmatprep.subr.mxu0 0.0
    %v1483 = vand.u32 %v58, 4294901760
    %1484 = vmatpush1.msra.mxu0 %v1483
    %1485 = vmatprep.subr.mxu0 0.0
    %v1486 = vand.u32 %v59, 4294901760
    %1487 = vmatpush1.msra.mxu0 %v1486
    %1488 = vmatprep.subr.mxu0 0.0
    %v1489 = vand.u32 %v60, 4294901760
    %1490 = vmatpush1.msra.mxu0 %v1489
    %1491 = vmatprep.subr.mxu0 0.0
    %v1492 = vand.u32 %v61, 4294901760
    %1493 = vmatpush1.msra.mxu0 %v1492
    %1494 = vmatprep.subr.mxu0 0.0
    %1495 = vmatpush1.msra.mxu0 0.0
    %1496 = vmatprep.subr.mxu0 0.0
    %1497 = vmatpush1.msra.mxu0 0.0
    %1498 = vmatprep.subr.mxu0 0.0
    %1499 = vmatpush1.msra.mxu0 0.0
    %1500 = vmatprep.subr.mxu0 0.0
    %1501 = vmatpush1.msra.mxu0 0.0
    %1502 = vmatprep.subr.mxu0 0.0
    %1503 = vmatpush1.msra.mxu0 0.0
    %1504 = vmatprep.subr.mxu0 0.0
    %1505 = vmatpush1.msra.mxu0 0.0
    %1506 = vmatprep.subr.mxu0 0.0
    %1507 = vmatpush1.msra.mxu0 0.0
    %1508 = vmatprep.subr.mxu0 0.0
    %1509 = vmatpush1.msra.mxu0 0.0
    %1510 = vmatprep.subr.mxu0 0.0
    %1511 = vmatpush1.msra.mxu0 0.0
    %1512 = vmatprep.subr.mxu0 0.0
    %1513 = vmatpush1.msra.mxu0 0.0
    %1514 = vmatprep.subr.mxu0 0.0
    %1515 = vmatpush1.msra.mxu0 0.0
    %1516 = vmatprep.subr.mxu0 0.0
    %1517 = vmatpush1.msra.mxu0 0.0
    %1518 = vmatprep.subr.mxu0 0.0
    %1519 = vmatpush1.msra.mxu0 0.0
    %1520 = vmatprep.subr.mxu0 0.0
    %1521 = vmatpush1.msra.mxu0 0.0
    %1522 = vmatprep.subr.mxu0 0.0
    %1523 = vmatpush1.msra.mxu0 0.0
    %1524 = vmatprep.subr.mxu0 0.0
    %1525 = vmatpush1.msra.mxu0 0.0
    %1526 = vmatprep.subr.mxu0 0.0
    %1527 = vmatpush1.msra.mxu0 0.0
    %1528 = vmatprep.subr.mxu0 0.0
    %1529 = vmatpush1.msra.mxu0 0.0
    %1530 = vmatprep.subr.mxu0 0.0
    %1531 = vmatpush1.msra.mxu0 0.0
    %1532 = vmatprep.subr.mxu0 0.0
    %1533 = vmatpush1.msra.mxu0 0.0
    %1534 = vmatprep.subr.mxu0 0.0
    %1535 = vmatpush1.msra.mxu0 0.0
    %1536 = vmatprep.subr.mxu0 0.0
    %1537 = vmatpush1.msra.mxu0 0.0
    %1538 = vmatprep.subr.mxu0 0.0
    %1539 = vmatpush1.msra.mxu0 0.0
    %1540 = vmatprep.subr.mxu0 0.0
    %1541 = vmatpush1.msra.mxu0 0.0
    %1542 = vmatprep.subr.mxu0 0.0
    %1543 = vmatpush1.msra.mxu0 0.0
    %1544 = vmatprep.subr.mxu0 0.0
    %1545 = vmatpush1.msra.mxu0 0.0
    %1546 = vmatprep.subr.mxu0 0.0
    %1547 = vmatpush1.msra.mxu0 0.0
    %1548 = vmatprep.subr.mxu0 0.0
    %1549 = vmatpush1.msra.mxu0 0.0
    %1550 = vmatprep.mubr.f32.mxu0 0.0
    %v1551 = vand.u32 %v1070, 4294901760
    %1552 = vmatmul.mubr.f32.gmra.mrb[0].mxu0 %v1551
    %v1553 = vpop.f32.mrb[0].mxu0
    %v1554 = vadd.f32 %v1479, %v1553
    %v1555 = vpop.f32.mrb[0].mxu0
    %1556 = vdwg.mxu0
    %1558 = vrot.lane.b32.xlu0 %v1554, 96
    %v1559 = vpop.permute.xlu0 %1558
    %s1561 = scalar_lea.vmem %s4, 16
    %1562 = vst.msk [vmem:[%s1561] sm:$0xff] %vm558, %v1559
    %v1563 = vmul.f32 %v560, %v1066
    %v1564 = vadd.f32 %v1563, %v1554
    %s1565 = scalar_lea.vmem [#allocation5], 24
    %v1566 = vld [vmem:[%s1565] sm:$0xff]
    %v1567 = vadd.f32 %v1564, %v1566
    %v1568 = vtanh.pop %v1567
    %v1569 = vmax.f32 %v1568, 0.0
    %v1571 = vsel %vm65, %v1569, 0
    %1573 = vmatprep.subr.mxu0 0.0
    %v1574 = vand.u32 %v58, 4294901760
    %1575 = vmatpush1.msra.mxu0 %v1574
    %1576 = vmatprep.subr.mxu0 0.0
    %v1577 = vand.u32 %v59, 4294901760
    %1578 = vmatpush1.msra.mxu0 %v1577
    %1579 = vmatprep.subr.mxu0 0.0
    %v1580 = vand.u32 %v60, 4294901760
    %1581 = vmatpush1.msra.mxu0 %v1580
    %1582 = vmatprep.subr.mxu0 0.0
    %v1583 = vand.u32 %v61, 4294901760
    %1584 = vmatpush1.msra.mxu0 %v1583
    %1585 = vmatprep.subr.mxu0 0.0
    %1586 = vmatpush1.msra.mxu0 0.0
    %1587 = vmatprep.subr.mxu0 0.0
    %1588 = vmatpush1.msra.mxu0 0.0
    %1589 = vmatprep.subr.mxu0 0.0
    %1590 = vmatpush1.msra.mxu0 0.0
    %1591 = vmatprep.subr.mxu0 0.0
    %1592 = vmatpush1.msra.mxu0 0.0
    %1593 = vmatprep.subr.mxu0 0.0
    %1594 = vmatpush1.msra.mxu0 0.0
    %1595 = vmatprep.subr.mxu0 0.0
    %1596 = vmatpush1.msra.mxu0 0.0
    %1597 = vmatprep.subr.mxu0 0.0
    %1598 = vmatpush1.msra.mxu0 0.0
    %1599 = vmatprep.subr.mxu0 0.0
    %1600 = vmatpush1.msra.mxu0 0.0
    %1601 = vmatprep.subr.mxu0 0.0
    %1602 = vmatpush1.msra.mxu0 0.0
    %1603 = vmatprep.subr.mxu0 0.0
    %1604 = vmatpush1.msra.mxu0 0.0
    %1605 = vmatprep.subr.mxu0 0.0
    %1606 = vmatpush1.msra.mxu0 0.0
    %1607 = vmatprep.subr.mxu0 0.0
    %1608 = vmatpush1.msra.mxu0 0.0
    %1609 = vmatprep.subr.mxu0 0.0
    %1610 = vmatpush1.msra.mxu0 0.0
    %1611 = vmatprep.subr.mxu0 0.0
    %1612 = vmatpush1.msra.mxu0 0.0
    %1613 = vmatprep.subr.mxu0 0.0
    %1614 = vmatpush1.msra.mxu0 0.0
    %1615 = vmatprep.subr.mxu0 0.0
    %1616 = vmatpush1.msra.mxu0 0.0
    %1617 = vmatprep.subr.mxu0 0.0
    %1618 = vmatpush1.msra.mxu0 0.0
    %1619 = vmatprep.subr.mxu0 0.0
    %1620 = vmatpush1.msra.mxu0 0.0
    %1621 = vmatprep.subr.mxu0 0.0
    %1622 = vmatpush1.msra.mxu0 0.0
    %1623 = vmatprep.subr.mxu0 0.0
    %1624 = vmatpush1.msra.mxu0 0.0
    %1625 = vmatprep.subr.mxu0 0.0
    %1626 = vmatpush1.msra.mxu0 0.0
    %1627 = vmatprep.subr.mxu0 0.0
    %1628 = vmatpush1.msra.mxu0 0.0
    %1629 = vmatprep.subr.mxu0 0.0
    %1630 = vmatpush1.msra.mxu0 0.0
    %1631 = vmatprep.subr.mxu0 0.0
    %1632 = vmatpush1.msra.mxu0 0.0
    %1633 = vmatprep.subr.mxu0 0.0
    %1634 = vmatpush1.msra.mxu0 0.0
    %1635 = vmatprep.subr.mxu0 0.0
    %1636 = vmatpush1.msra.mxu0 0.0
    %1637 = vmatprep.subr.mxu0 0.0
    %1638 = vmatpush1.msra.mxu0 0.0
    %1639 = vmatprep.subr.mxu0 0.0
    %1640 = vmatpush1.msra.mxu0 0.0
    %1641 = vmatprep.mubr.f32.mxu0 0.0
    %v1642 = vand.u32 %v1571, 4294901760
    %v1643 = vsub.f32 %v1571, %v1642
    %v1644 = vand.u32 %v1643, 4294901760
    %v1645 = vsub.f32 %v1643, %v1644
    %v1646 = vand.u32 %v1645, 4294901760
    %1647 = vmatmul.mubr.f32.gmra.mrb[0].mxu0 %v1646
    %v1648 = vpop.f32.mrb[0].mxu0
    %v1649 = vadd.f32 0.0, %v1648
    %v1650 = vpop.f32.mrb[0].mxu0
    %1651 = vdwg.mxu0
    %1652 = vmatprep.subr.mxu0 0.0
    %v1653 = vand.u32 %v58, 4294901760
    %v1654 = vsub.f32 %v58, %v1653
    %v1655 = vand.u32 %v1654, 4294901760
    %v1656 = vsub.f32 %v1654, %v1655
    %v1657 = vand.u32 %v1656, 4294901760
    %1658 = vmatpush1.msra.mxu0 %v1657
    %1659 = vmatprep.subr.mxu0 0.0
    %v1660 = vand.u32 %v59, 4294901760
    %v1661 = vsub.f32 %v59, %v1660
    %v1662 = vand.u32 %v1661, 4294901760
    %v1663 = vsub.f32 %v1661, %v1662
    %v1664 = vand.u32 %v1663, 4294901760
    %1665 = vmatpush1.msra.mxu0 %v1664
    %1666 = vmatprep.subr.mxu0 0.0
    %v1667 = vand.u32 %v60, 4294901760
    %v1668 = vsub.f32 %v60, %v1667
    %v1669 = vand.u32 %v1668, 4294901760
    %v1670 = vsub.f32 %v1668, %v1669
    %v1671 = vand.u32 %v1670, 4294901760
    %1672 = vmatpush1.msra.mxu0 %v1671
    %1673 = vmatprep.subr.mxu0 0.0
    %v1674 = vand.u32 %v61, 4294901760
    %v1675 = vsub.f32 %v61, %v1674
    %v1676 = vand.u32 %v1675, 4294901760
    %v1677 = vsub.f32 %v1675, %v1676
    %v1678 = vand.u32 %v1677, 4294901760
    %1679 = vmatpush1.msra.mxu0 %v1678
    %1680 = vmatprep.subr.mxu0 0.0
    %1681 = vmatpush1.msra.mxu0 0.0
    %1682 = vmatprep.subr.mxu0 0.0
    %1683 = vmatpush1.msra.mxu0 0.0
    %1684 = vmatprep.subr.mxu0 0.0
    %1685 = vmatpush1.msra.mxu0 0.0
    %1686 = vmatprep.subr.mxu0 0.0
    %1687 = vmatpush1.msra.mxu0 0.0
    %1688 = vmatprep.subr.mxu0 0.0
    %1689 = vmatpush1.msra.mxu0 0.0
    %1690 = vmatprep.subr.mxu0 0.0
    %1691 = vmatpush1.msra.mxu0 0.0
    %1692 = vmatprep.subr.mxu0 0.0
    %1693 = vmatpush1.msra.mxu0 0.0
    %1694 = vmatprep.subr.mxu0 0.0
    %1695 = vmatpush1.msra.mxu0 0.0
    %1696 = vmatprep.subr.mxu0 0.0
    %1697 = vmatpush1.msra.mxu0 0.0
    %1698 = vmatprep.subr.mxu0 0.0
    %1699 = vmatpush1.msra.mxu0 0.0
    %1700 = vmatprep.subr.mxu0 0.0
    %1701 = vmatpush1.msra.mxu0 0.0
    %1702 = vmatprep.subr.mxu0 0.0
    %1703 = vmatpush1.msra.mxu0 0.0
    %1704 = vmatprep.subr.mxu0 0.0
    %1705 = vmatpush1.msra.mxu0 0.0
    %1706 = vmatprep.subr.mxu0 0.0
    %1707 = vmatpush1.msra.mxu0 0.0
    %1708 = vmatprep.subr.mxu0 0.0
    %1709 = vmatpush1.msra.mxu0 0.0
    %1710 = vmatprep.subr.mxu0 0.0
    %1711 = vmatpush1.msra.mxu0 0.0
    %1712 = vmatprep.subr.mxu0 0.0
    %1713 = vmatpush1.msra.mxu0 0.0
    %1714 = vmatprep.subr.mxu0 0.0
    %1715 = vmatpush1.msra.mxu0 0.0
    %1716 = vmatprep.subr.mxu0 0.0
    %1717 = vmatpush1.msra.mxu0 0.0
    %1718 = vmatprep.subr.mxu0 0.0
    %1719 = vmatpush1.msra.mxu0 0.0
    %1720 = vmatprep.subr.mxu0 0.0
    %1721 = vmatpush1.msra.mxu0 0.0
    %1722 = vmatprep.subr.mxu0 0.0
    %1723 = vmatpush1.msra.mxu0 0.0
    %1724 = vmatprep.subr.mxu0 0.0
    %1725 = vmatpush1.msra.mxu0 0.0
    %1726 = vmatprep.subr.mxu0 0.0
    %1727 = vmatpush1.msra.mxu0 0.0
    %1728 = vmatprep.subr.mxu0 0.0
    %1729 = vmatpush1.msra.mxu0 0.0
    %1730 = vmatprep.subr.mxu0 0.0
    %1731 = vmatpush1.msra.mxu0 0.0
    %1732 = vmatprep.subr.mxu0 0.0
    %1733 = vmatpush1.msra.mxu0 0.0
    %1734 = vmatprep.subr.mxu0 0.0
    %1735 = vmatpush1.msra.mxu0 0.0
    %1736 = vmatprep.mubr.f32.mxu0 0.0
    %v1737 = vand.u32 %v1571, 4294901760
    %1738 = vmatmul.mubr.f32.gmra.mrb[0].mxu0 %v1737
    %v1739 = vpop.f32.mrb[0].mxu0
    %v1740 = vadd.f32 %v1649, %v1739
    %v1741 = vpop.f32.mrb[0].mxu0
    %1742 = vdwg.mxu0
    %1743 = vmatprep.subr.mxu0 0.0
    %v1744 = vand.u32 %v58, 4294901760
    %v1745 = vsub.f32 %v58, %v1744
    %1746 = vmatpush1.msra.mxu0 %v1745
    %1747 = vmatprep.subr.mxu0 0.0
    %v1748 = vand.u32 %v59, 4294901760
    %v1749 = vsub.f32 %v59, %v1748
    %1750 = vmatpush1.msra.mxu0 %v1749
    %1751 = vmatprep.subr.mxu0 0.0
    %v1752 = vand.u32 %v60, 4294901760
    %v1753 = vsub.f32 %v60, %v1752
    %1754 = vmatpush1.msra.mxu0 %v1753
    %1755 = vmatprep.subr.mxu0 0.0
    %v1756 = vand.u32 %v61, 4294901760
    %v1757 = vsub.f32 %v61, %v1756
    %1758 = vmatpush1.msra.mxu0 %v1757
    %1759 = vmatprep.subr.mxu0 0.0
    %1760 = vmatpush1.msra.mxu0 0.0
    %1761 = vmatprep.subr.mxu0 0.0
    %1762 = vmatpush1.msra.mxu0 0.0
    %1763 = vmatprep.subr.mxu0 0.0
    %1764 = vmatpush1.msra.mxu0 0.0
    %1765 = vmatprep.subr.mxu0 0.0
    %1766 = vmatpush1.msra.mxu0 0.0
    %1767 = vmatprep.subr.mxu0 0.0
    %1768 = vmatpush1.msra.mxu0 0.0
    %1769 = vmatprep.subr.mxu0 0.0
    %1770 = vmatpush1.msra.mxu0 0.0
    %1771 = vmatprep.subr.mxu0 0.0
    %1772 = vmatpush1.msra.mxu0 0.0
    %1773 = vmatprep.subr.mxu0 0.0
    %1774 = vmatpush1.msra.mxu0 0.0
    %1775 = vmatprep.subr.mxu0 0.0
    %1776 = vmatpush1.msra.mxu0 0.0
    %1777 = vmatprep.subr.mxu0 0.0
    %1778 = vmatpush1.msra.mxu0 0.0
    %1779 = vmatprep.subr.mxu0 0.0
    %1780 = vmatpush1.msra.mxu0 0.0
    %1781 = vmatprep.subr.mxu0 0.0
    %1782 = vmatpush1.msra.mxu0 0.0
    %1783 = vmatprep.subr.mxu0 0.0
    %1784 = vmatpush1.msra.mxu0 0.0
    %1785 = vmatprep.subr.mxu0 0.0
    %1786 = vmatpush1.msra.mxu0 0.0
    %1787 = vmatprep.subr.mxu0 0.0
    %1788 = vmatpush1.msra.mxu0 0.0
    %1789 = vmatprep.subr.mxu0 0.0
    %1790 = vmatpush1.msra.mxu0 0.0
    %1791 = vmatprep.subr.mxu0 0.0
    %1792 = vmatpush1.msra.mxu0 0.0
    %1793 = vmatprep.subr.mxu0 0.0
    %1794 = vmatpush1.msra.mxu0 0.0
    %1795 = vmatprep.subr.mxu0 0.0
    %1796 = vmatpush1.msra.mxu0 0.0
    %1797 = vmatprep.subr.mxu0 0.0
    %1798 = vmatpush1.msra.mxu0 0.0
    %1799 = vmatprep.subr.mxu0 0.0
    %1800 = vmatpush1.msra.mxu0 0.0
    %1801 = vmatprep.subr.mxu0 0.0
    %1802 = vmatpush1.msra.mxu0 0.0
    %1803 = vmatprep.subr.mxu0 0.0
    %1804 = vmatpush1.msra.mxu0 0.0
    %1805 = vmatprep.subr.mxu0 0.0
    %1806 = vmatpush1.msra.mxu0 0.0
    %1807 = vmatprep.subr.mxu0 0.0
    %1808 = vmatpush1.msra.mxu0 0.0
    %1809 = vmatprep.subr.mxu0 0.0
    %1810 = vmatpush1.msra.mxu0 0.0
    %1811 = vmatprep.subr.mxu0 0.0
    %1812 = vmatpush1.msra.mxu0 0.0
    %1813 = vmatprep.subr.mxu0 0.0
    %1814 = vmatpush1.msra.mxu0 0.0
    %1815 = vmatprep.mubr.f32.mxu0 0.0
    %v1816 = vand.u32 %v1571, 4294901760
    %v1817 = vsub.f32 %v1571, %v1816
    %1818 = vmatmul.mubr.f32.gmra.mrb[0].mxu0 %v1817
    %v1819 = vpop.f32.mrb[0].mxu0
    %v1820 = vadd.f32 %v1740, %v1819
    %v1821 = vpop.f32.mrb[0].mxu0
    %1822 = vdwg.mxu0
    %1823 = vmatprep.subr.mxu0 0.0
    %v1824 = vand.u32 %v58, 4294901760
    %1825 = vmatpush1.msra.mxu0 %v1824
    %1826 = vmatprep.subr.mxu0 0.0
    %v1827 = vand.u32 %v59, 4294901760
    %1828 = vmatpush1.msra.mxu0 %v1827
    %1829 = vmatprep.subr.mxu0 0.0
    %v1830 = vand.u32 %v60, 4294901760
    %1831 = vmatpush1.msra.mxu0 %v1830
    %1832 = vmatprep.subr.mxu0 0.0
    %v1833 = vand.u32 %v61, 4294901760
    %1834 = vmatpush1.msra.mxu0 %v1833
    %1835 = vmatprep.subr.mxu0 0.0
    %1836 = vmatpush1.msra.mxu0 0.0
    %1837 = vmatprep.subr.mxu0 0.0
    %1838 = vmatpush1.msra.mxu0 0.0
    %1839 = vmatprep.subr.mxu0 0.0
    %1840 = vmatpush1.msra.mxu0 0.0
    %1841 = vmatprep.subr.mxu0 0.0
    %1842 = vmatpush1.msra.mxu0 0.0
    %1843 = vmatprep.subr.mxu0 0.0
    %1844 = vmatpush1.msra.mxu0 0.0
    %1845 = vmatprep.subr.mxu0 0.0
    %1846 = vmatpush1.msra.mxu0 0.0
    %1847 = vmatprep.subr.mxu0 0.0
    %1848 = vmatpush1.msra.mxu0 0.0
    %1849 = vmatprep.subr.mxu0 0.0
    %1850 = vmatpush1.msra.mxu0 0.0
    %1851 = vmatprep.subr.mxu0 0.0
    %1852 = vmatpush1.msra.mxu0 0.0
    %1853 = vmatprep.subr.mxu0 0.0
    %1854 = vmatpush1.msra.mxu0 0.0
    %1855 = vmatprep.subr.mxu0 0.0
    %1856 = vmatpush1.msra.mxu0 0.0
    %1857 = vmatprep.subr.mxu0 0.0
    %1858 = vmatpush1.msra.mxu0 0.0
    %1859 = vmatprep.subr.mxu0 0.0
    %1860 = vmatpush1.msra.mxu0 0.0
    %1861 = vmatprep.subr.mxu0 0.0
    %1862 = vmatpush1.msra.mxu0 0.0
    %1863 = vmatprep.subr.mxu0 0.0
    %1864 = vmatpush1.msra.mxu0 0.0
    %1865 = vmatprep.subr.mxu0 0.0
    %1866 = vmatpush1.msra.mxu0 0.0
    %1867 = vmatprep.subr.mxu0 0.0
    %1868 = vmatpush1.msra.mxu0 0.0
    %1869 = vmatprep.subr.mxu0 0.0
    %1870 = vmatpush1.msra.mxu0 0.0
    %1871 = vmatprep.subr.mxu0 0.0
    %1872 = vmatpush1.msra.mxu0 0.0
    %1873 = vmatprep.subr.mxu0 0.0
    %1874 = vmatpush1.msra.mxu0 0.0
    %1875 = vmatprep.subr.mxu0 0.0
    %1876 = vmatpush1.msra.mxu0 0.0
    %1877 = vmatprep.subr.mxu0 0.0
    %1878 = vmatpush1.msra.mxu0 0.0
    %1879 = vmatprep.subr.mxu0 0.0
    %1880 = vmatpush1.msra.mxu0 0.0
    %1881 = vmatprep.subr.mxu0 0.0
    %1882 = vmatpush1.msra.mxu0 0.0
    %1883 = vmatprep.subr.mxu0 0.0
    %1884 = vmatpush1.msra.mxu0 0.0
    %1885 = vmatprep.subr.mxu0 0.0
    %1886 = vmatpush1.msra.mxu0 0.0
    %1887 = vmatprep.subr.mxu0 0.0
    %1888 = vmatpush1.msra.mxu0 0.0
    %1889 = vmatprep.subr.mxu0 0.0
    %1890 = vmatpush1.msra.mxu0 0.0
    %1891 = vmatprep.mubr.f32.mxu0 0.0
    %v1892 = vand.u32 %v1571, 4294901760
    %v1893 = vsub.f32 %v1571, %v1892
    %v1894 = vand.u32 %v1893, 4294901760
    %1895 = vmatmul.mubr.f32.gmra.mrb[0].mxu0 %v1894
    %v1896 = vpop.f32.mrb[0].mxu0
    %v1897 = vadd.f32 %v1820, %v1896
    %v1898 = vpop.f32.mrb[0].mxu0
    %1899 = vdwg.mxu0
    %1900 = vmatprep.subr.mxu0 0.0
    %v1901 = vand.u32 %v58, 4294901760
    %v1902 = vsub.f32 %v58, %v1901
    %v1903 = vand.u32 %v1902, 4294901760
    %1904 = vmatpush1.msra.mxu0 %v1903
    %1905 = vmatprep.subr.mxu0 0.0
    %v1906 = vand.u32 %v59, 4294901760
    %v1907 = vsub.f32 %v59, %v1906
    %v1908 = vand.u32 %v1907, 4294901760
    %1909 = vmatpush1.msra.mxu0 %v1908
    %1910 = vmatprep.subr.mxu0 0.0
    %v1911 = vand.u32 %v60, 4294901760
    %v1912 = vsub.f32 %v60, %v1911
    %v1913 = vand.u32 %v1912, 4294901760
    %1914 = vmatpush1.msra.mxu0 %v1913
    %1915 = vmatprep.subr.mxu0 0.0
    %v1916 = vand.u32 %v61, 4294901760
    %v1917 = vsub.f32 %v61, %v1916
    %v1918 = vand.u32 %v1917, 4294901760
    %1919 = vmatpush1.msra.mxu0 %v1918
    %1920 = vmatprep.subr.mxu0 0.0
    %1921 = vmatpush1.msra.mxu0 0.0
    %1922 = vmatprep.subr.mxu0 0.0
    %1923 = vmatpush1.msra.mxu0 0.0
    %1924 = vmatprep.subr.mxu0 0.0
    %1925 = vmatpush1.msra.mxu0 0.0
    %1926 = vmatprep.subr.mxu0 0.0
    %1927 = vmatpush1.msra.mxu0 0.0
    %1928 = vmatprep.subr.mxu0 0.0
    %1929 = vmatpush1.msra.mxu0 0.0
    %1930 = vmatprep.subr.mxu0 0.0
    %1931 = vmatpush1.msra.mxu0 0.0
    %1932 = vmatprep.subr.mxu0 0.0
    %1933 = vmatpush1.msra.mxu0 0.0
    %1934 = vmatprep.subr.mxu0 0.0
    %1935 = vmatpush1.msra.mxu0 0.0
    %1936 = vmatprep.subr.mxu0 0.0
    %1937 = vmatpush1.msra.mxu0 0.0
    %1938 = vmatprep.subr.mxu0 0.0
    %1939 = vmatpush1.msra.mxu0 0.0
    %1940 = vmatprep.subr.mxu0 0.0
    %1941 = vmatpush1.msra.mxu0 0.0
    %1942 = vmatprep.subr.mxu0 0.0
    %1943 = vmatpush1.msra.mxu0 0.0
    %1944 = vmatprep.subr.mxu0 0.0
    %1945 = vmatpush1.msra.mxu0 0.0
    %1946 = vmatprep.subr.mxu0 0.0
    %1947 = vmatpush1.msra.mxu0 0.0
    %1948 = vmatprep.subr.mxu0 0.0
    %1949 = vmatpush1.msra.mxu0 0.0
    %1950 = vmatprep.subr.mxu0 0.0
    %1951 = vmatpush1.msra.mxu0 0.0
    %1952 = vmatprep.subr.mxu0 0.0
    %1953 = vmatpush1.msra.mxu0 0.0
    %1954 = vmatprep.subr.mxu0 0.0
    %1955 = vmatpush1.msra.mxu0 0.0
    %1956 = vmatprep.subr.mxu0 0.0
    %1957 = vmatpush1.msra.mxu0 0.0
    %1958 = vmatprep.subr.mxu0 0.0
    %1959 = vmatpush1.msra.mxu0 0.0
    %1960 = vmatprep.subr.mxu0 0.0
    %1961 = vmatpush1.msra.mxu0 0.0
    %1962 = vmatprep.subr.mxu0 0.0
    %1963 = vmatpush1.msra.mxu0 0.0
    %1964 = vmatprep.subr.mxu0 0.0
    %1965 = vmatpush1.msra.mxu0 0.0
    %1966 = vmatprep.subr.mxu0 0.0
    %1967 = vmatpush1.msra.mxu0 0.0
    %1968 = vmatprep.subr.mxu0 0.0
    %1969 = vmatpush1.msra.mxu0 0.0
    %1970 = vmatprep.subr.mxu0 0.0
    %1971 = vmatpush1.msra.mxu0 0.0
    %1972 = vmatprep.subr.mxu0 0.0
    %1973 = vmatpush1.msra.mxu0 0.0
    %1974 = vmatprep.subr.mxu0 0.0
    %1975 = vmatpush1.msra.mxu0 0.0
    %1976 = vmatprep.mubr.f32.mxu0 0.0
    %v1977 = vand.u32 %v1571, 4294901760
    %1978 = vmatmul.mubr.f32.gmra.mrb[0].mxu0 %v1977
    %v1979 = vpop.f32.mrb[0].mxu0
    %v1980 = vadd.f32 %v1897, %v1979
    %v1981 = vpop.f32.mrb[0].mxu0
    %1982 = vdwg.mxu0
    %1983 = vmatprep.subr.mxu0 0.0
    %v1984 = vand.u32 %v58, 4294901760
    %1985 = vmatpush1.msra.mxu0 %v1984
    %1986 = vmatprep.subr.mxu0 0.0
    %v1987 = vand.u32 %v59, 4294901760
    %1988 = vmatpush1.msra.mxu0 %v1987
    %1989 = vmatprep.subr.mxu0 0.0
    %v1990 = vand.u32 %v60, 4294901760
    %1991 = vmatpush1.msra.mxu0 %v1990
    %1992 = vmatprep.subr.mxu0 0.0
    %v1993 = vand.u32 %v61, 4294901760
    %1994 = vmatpush1.msra.mxu0 %v1993
    %1995 = vmatprep.subr.mxu0 0.0
    %1996 = vmatpush1.msra.mxu0 0.0
    %1997 = vmatprep.subr.mxu0 0.0
    %1998 = vmatpush1.msra.mxu0 0.0
    %1999 = vmatprep.subr.mxu0 0.0
    %2000 = vmatpush1.msra.mxu0 0.0
    %2001 = vmatprep.subr.mxu0 0.0
    %2002 = vmatpush1.msra.mxu0 0.0
    %2003 = vmatprep.subr.mxu0 0.0
    %2004 = vmatpush1.msra.mxu0 0.0
    %2005 = vmatprep.subr.mxu0 0.0
    %2006 = vmatpush1.msra.mxu0 0.0
    %2007 = vmatprep.subr.mxu0 0.0
    %2008 = vmatpush1.msra.mxu0 0.0
    %2009 = vmatprep.subr.mxu0 0.0
    %2010 = vmatpush1.msra.mxu0 0.0
    %2011 = vmatprep.subr.mxu0 0.0
    %2012 = vmatpush1.msra.mxu0 0.0
    %2013 = vmatprep.subr.mxu0 0.0
    %2014 = vmatpush1.msra.mxu0 0.0
    %2015 = vmatprep.subr.mxu0 0.0
    %2016 = vmatpush1.msra.mxu0 0.0
    %2017 = vmatprep.subr.mxu0 0.0
    %2018 = vmatpush1.msra.mxu0 0.0
    %2019 = vmatprep.subr.mxu0 0.0
    %2020 = vmatpush1.msra.mxu0 0.0
    %2021 = vmatprep.subr.mxu0 0.0
    %2022 = vmatpush1.msra.mxu0 0.0
    %2023 = vmatprep.subr.mxu0 0.0
    %2024 = vmatpush1.msra.mxu0 0.0
    %2025 = vmatprep.subr.mxu0 0.0
    %2026 = vmatpush1.msra.mxu0 0.0
    %2027 = vmatprep.subr.mxu0 0.0
    %2028 = vmatpush1.msra.mxu0 0.0
    %2029 = vmatprep.subr.mxu0 0.0
    %2030 = vmatpush1.msra.mxu0 0.0
    %2031 = vmatprep.subr.mxu0 0.0
    %2032 = vmatpush1.msra.mxu0 0.0
    %2033 = vmatprep.subr.mxu0 0.0
    %2034 = vmatpush1.msra.mxu0 0.0
    %2035 = vmatprep.subr.mxu0 0.0
    %2036 = vmatpush1.msra.mxu0 0.0
    %2037 = vmatprep.subr.mxu0 0.0
    %2038 = vmatpush1.msra.mxu0 0.0
    %2039 = vmatprep.subr.mxu0 0.0
    %2040 = vmatpush1.msra.mxu0 0.0
    %2041 = vmatprep.subr.mxu0 0.0
    %2042 = vmatpush1.msra.mxu0 0.0
    %2043 = vmatprep.subr.mxu0 0.0
    %2044 = vmatpush1.msra.mxu0 0.0
    %2045 = vmatprep.subr.mxu0 0.0
    %2046 = vmatpush1.msra.mxu0 0.0
    %2047 = vmatprep.subr.mxu0 0.0
    %2048 = vmatpush1.msra.mxu0 0.0
    %2049 = vmatprep.subr.mxu0 0.0
    %2050 = vmatpush1.msra.mxu0 0.0
    %2051 = vmatprep.mubr.f32.mxu0 0.0
    %v2052 = vand.u32 %v1571, 4294901760
    %2053 = vmatmul.mubr.f32.gmra.mrb[0].mxu0 %v2052
    %v2054 = vpop.f32.mrb[0].mxu0
    %v2055 = vadd.f32 %v1980, %v2054
    %v2056 = vpop.f32.mrb[0].mxu0
    %2057 = vdwg.mxu0
    %2059 = vrot.lane.b32.xlu0 %v2055, 96
    %v2060 = vpop.permute.xlu0 %2059
    %s2062 = scalar_lea.vmem %s4, 24
    %2063 = vst.msk [vmem:[%s2062] sm:$0xff] %vm558, %v2060
    %v2064 = vmul.f32 %v560, %v1567
    %v2065 = vadd.f32 %v2064, %v2055
    %s2066 = scalar_lea.vmem [#allocation5], 32
    %v2067 = vld [vmem:[%s2066] sm:$0xff]
    %v2068 = vadd.f32 %v2065, %v2067
    %v2069 = vtanh.pop %v2068
    %v2070 = vmax.f32 %v2069, 0.0
    %v2072 = vsel %vm65, %v2070, 0
    %2074 = vmatprep.subr.mxu0 0.0
    %v2075 = vand.u32 %v58, 4294901760
    %2076 = vmatpush1.msra.mxu0 %v2075
    %2077 = vmatprep.subr.mxu0 0.0
    %v2078 = vand.u32 %v59, 4294901760
    %2079 = vmatpush1.msra.mxu0 %v2078
    %2080 = vmatprep.subr.mxu0 0.0
    %v2081 = vand.u32 %v60, 4294901760
    %2082 = vmatpush1.msra.mxu0 %v2081
    %2083 = vmatprep.subr.mxu0 0.0
    %v2084 = vand.u32 %v61, 4294901760
    %2085 = vmatpush1.msra.mxu0 %v2084
    %2086 = vmatprep.subr.mxu0 0.0
    %2087 = vmatpush1.msra.mxu0 0.0
    %2088 = vmatprep.subr.mxu0 0.0
    %2089 = vmatpush1.msra.mxu0 0.0
    %2090 = vmatprep.subr.mxu0 0.0
    %2091 = vmatpush1.msra.mxu0 0.0
    %2092 = vmatprep.subr.mxu0 0.0
    %2093 = vmatpush1.msra.mxu0 0.0
    %2094 = vmatprep.subr.mxu0 0.0
    %2095 = vmatpush1.msra.mxu0 0.0
    %2096 = vmatprep.subr.mxu0 0.0
    %2097 = vmatpush1.msra.mxu0 0.0
    %2098 = vmatprep.subr.mxu0 0.0
    %2099 = vmatpush1.msra.mxu0 0.0
    %2100 = vmatprep.subr.mxu0 0.0
    %2101 = vmatpush1.msra.mxu0 0.0
    %2102 = vmatprep.subr.mxu0 0.0
    %2103 = vmatpush1.msra.mxu0 0.0
    %2104 = vmatprep.subr.mxu0 0.0
    %2105 = vmatpush1.msra.mxu0 0.0
    %2106 = vmatprep.subr.mxu0 0.0
    %2107 = vmatpush1.msra.mxu0 0.0
    %2108 = vmatprep.subr.mxu0 0.0
    %2109 = vmatpush1.msra.mxu0 0.0
    %2110 = vmatprep.subr.mxu0 0.0
    %2111 = vmatpush1.msra.mxu0 0.0
    %2112 = vmatprep.subr.mxu0 0.0
    %2113 = vmatpush1.msra.mxu0 0.0
    %2114 = vmatprep.subr.mxu0 0.0
    %2115 = vmatpush1.msra.mxu0 0.0
    %2116 = vmatprep.subr.mxu0 0.0
    %2117 = vmatpush1.msra.mxu0 0.0
    %2118 = vmatprep.subr.mxu0 0.0
    %2119 = vmatpush1.msra.mxu0 0.0
    %2120 = vmatprep.subr.mxu0 0.0
    %2121 = vmatpush1.msra.mxu0 0.0
    %2122 = vmatprep.subr.mxu0 0.0
    %2123 = vmatpush1.msra.mxu0 0.0
    %2124 = vmatprep.subr.mxu0 0.0
    %2125 = vmatpush1.msra.mxu0 0.0
    %2126 = vmatprep.subr.mxu0 0.0
    %2127 = vmatpush1.msra.mxu0 0.0
    %2128 = vmatprep.subr.mxu0 0.0
    %2129 = vmatpush1.msra.mxu0 0.0
    %2130 = vmatprep.subr.mxu0 0.0
    %2131 = vmatpush1.msra.mxu0 0.0
    %2132 = vmatprep.subr.mxu0 0.0
    %2133 = vmatpush1.msra.mxu0 0.0
    %2134 = vmatprep.subr.mxu0 0.0
    %2135 = vmatpush1.msra.mxu0 0.0
    %2136 = vmatprep.subr.mxu0 0.0
    %2137 = vmatpush1.msra.mxu0 0.0
    %2138 = vmatprep.subr.mxu0 0.0
    %2139 = vmatpush1.msra.mxu0 0.0
    %2140 = vmatprep.subr.mxu0 0.0
    %2141 = vmatpush1.msra.mxu0 0.0
    %2142 = vmatprep.mubr.f32.mxu0 0.0
    %v2143 = vand.u32 %v2072, 4294901760
    %v2144 = vsub.f32 %v2072, %v2143
    %v2145 = vand.u32 %v2144, 4294901760
    %v2146 = vsub.f32 %v2144, %v2145
    %v2147 = vand.u32 %v2146, 4294901760
    %2148 = vmatmul.mubr.f32.gmra.mrb[0].mxu0 %v2147
    %v2149 = vpop.f32.mrb[0].mxu0
    %v2150 = vadd.f32 0.0, %v2149
    %v2151 = vpop.f32.mrb[0].mxu0
    %2152 = vdwg.mxu0
    %2153 = vmatprep.subr.mxu0 0.0
    %v2154 = vand.u32 %v58, 4294901760
    %v2155 = vsub.f32 %v58, %v2154
    %v2156 = vand.u32 %v2155, 4294901760
    %v2157 = vsub.f32 %v2155, %v2156
    %v2158 = vand.u32 %v2157, 4294901760
    %2159 = vmatpush1.msra.mxu0 %v2158
    %2160 = vmatprep.subr.mxu0 0.0
    %v2161 = vand.u32 %v59, 4294901760
    %v2162 = vsub.f32 %v59, %v2161
    %v2163 = vand.u32 %v2162, 4294901760
    %v2164 = vsub.f32 %v2162, %v2163
    %v2165 = vand.u32 %v2164, 4294901760
    %2166 = vmatpush1.msra.mxu0 %v2165
    %2167 = vmatprep.subr.mxu0 0.0
    %v2168 = vand.u32 %v60, 4294901760
    %v2169 = vsub.f32 %v60, %v2168
    %v2170 = vand.u32 %v2169, 4294901760
    %v2171 = vsub.f32 %v2169, %v2170
    %v2172 = vand.u32 %v2171, 4294901760
    %2173 = vmatpush1.msra.mxu0 %v2172
    %2174 = vmatprep.subr.mxu0 0.0
    %v2175 = vand.u32 %v61, 4294901760
    %v2176 = vsub.f32 %v61, %v2175
    %v2177 = vand.u32 %v2176, 4294901760
    %v2178 = vsub.f32 %v2176, %v2177
    %v2179 = vand.u32 %v2178, 4294901760
    %2180 = vmatpush1.msra.mxu0 %v2179
    %2181 = vmatprep.subr.mxu0 0.0
    %2182 = vmatpush1.msra.mxu0 0.0
    %2183 = vmatprep.subr.mxu0 0.0
    %2184 = vmatpush1.msra.mxu0 0.0
    %2185 = vmatprep.subr.mxu0 0.0
    %2186 = vmatpush1.msra.mxu0 0.0
    %2187 = vmatprep.subr.mxu0 0.0
    %2188 = vmatpush1.msra.mxu0 0.0
    %2189 = vmatprep.subr.mxu0 0.0
    %2190 = vmatpush1.msra.mxu0 0.0
    %2191 = vmatprep.subr.mxu0 0.0
    %2192 = vmatpush1.msra.mxu0 0.0
    %2193 = vmatprep.subr.mxu0 0.0
    %2194 = vmatpush1.msra.mxu0 0.0
    %2195 = vmatprep.subr.mxu0 0.0
    %2196 = vmatpush1.msra.mxu0 0.0
    %2197 = vmatprep.subr.mxu0 0.0
    %2198 = vmatpush1.msra.mxu0 0.0
    %2199 = vmatprep.subr.mxu0 0.0
    %2200 = vmatpush1.msra.mxu0 0.0
    %2201 = vmatprep.subr.mxu0 0.0
    %2202 = vmatpush1.msra.mxu0 0.0
    %2203 = vmatprep.subr.mxu0 0.0
    %2204 = vmatpush1.msra.mxu0 0.0
    %2205 = vmatprep.subr.mxu0 0.0
    %2206 = vmatpush1.msra.mxu0 0.0
    %2207 = vmatprep.subr.mxu0 0.0
    %2208 = vmatpush1.msra.mxu0 0.0
    %2209 = vmatprep.subr.mxu0 0.0
    %2210 = vmatpush1.msra.mxu0 0.0
    %2211 = vmatprep.subr.mxu0 0.0
    %2212 = vmatpush1.msra.mxu0 0.0
    %2213 = vmatprep.subr.mxu0 0.0
    %2214 = vmatpush1.msra.mxu0 0.0
    %2215 = vmatprep.subr.mxu0 0.0
    %2216 = vmatpush1.msra.mxu0 0.0
    %2217 = vmatprep.subr.mxu0 0.0
    %2218 = vmatpush1.msra.mxu0 0.0
    %2219 = vmatprep.subr.mxu0 0.0
    %2220 = vmatpush1.msra.mxu0 0.0
    %2221 = vmatprep.subr.mxu0 0.0
    %2222 = vmatpush1.msra.mxu0 0.0
    %2223 = vmatprep.subr.mxu0 0.0
    %2224 = vmatpush1.msra.mxu0 0.0
    %2225 = vmatprep.subr.mxu0 0.0
    %2226 = vmatpush1.msra.mxu0 0.0
    %2227 = vmatprep.subr.mxu0 0.0
    %2228 = vmatpush1.msra.mxu0 0.0
    %2229 = vmatprep.subr.mxu0 0.0
    %2230 = vmatpush1.msra.mxu0 0.0
    %2231 = vmatprep.subr.mxu0 0.0
    %2232 = vmatpush1.msra.mxu0 0.0
    %2233 = vmatprep.subr.mxu0 0.0
    %2234 = vmatpush1.msra.mxu0 0.0
    %2235 = vmatprep.subr.mxu0 0.0
    %2236 = vmatpush1.msra.mxu0 0.0
    %2237 = vmatprep.mubr.f32.mxu0 0.0
    %v2238 = vand.u32 %v2072, 4294901760
    %2239 = vmatmul.mubr.f32.gmra.mrb[0].mxu0 %v2238
    %v2240 = vpop.f32.mrb[0].mxu0
    %v2241 = vadd.f32 %v2150, %v2240
    %v2242 = vpop.f32.mrb[0].mxu0
    %2243 = vdwg.mxu0
    %2244 = vmatprep.subr.mxu0 0.0
    %v2245 = vand.u32 %v58, 4294901760
    %v2246 = vsub.f32 %v58, %v2245
    %2247 = vmatpush1.msra.mxu0 %v2246
    %2248 = vmatprep.subr.mxu0 0.0
    %v2249 = vand.u32 %v59, 4294901760
    %v2250 = vsub.f32 %v59, %v2249
    %2251 = vmatpush1.msra.mxu0 %v2250
    %2252 = vmatprep.subr.mxu0 0.0
    %v2253 = vand.u32 %v60, 4294901760
    %v2254 = vsub.f32 %v60, %v2253
    %2255 = vmatpush1.msra.mxu0 %v2254
    %2256 = vmatprep.subr.mxu0 0.0
    %v2257 = vand.u32 %v61, 4294901760
    %v2258 = vsub.f32 %v61, %v2257
    %2259 = vmatpush1.msra.mxu0 %v2258
    %2260 = vmatprep.subr.mxu0 0.0
    %2261 = vmatpush1.msra.mxu0 0.0
    %2262 = vmatprep.subr.mxu0 0.0
    %2263 = vmatpush1.msra.mxu0 0.0
    %2264 = vmatprep.subr.mxu0 0.0
    %2265 = vmatpush1.msra.mxu0 0.0
    %2266 = vmatprep.subr.mxu0 0.0
    %2267 = vmatpush1.msra.mxu0 0.0
    %2268 = vmatprep.subr.mxu0 0.0
    %2269 = vmatpush1.msra.mxu0 0.0
    %2270 = vmatprep.subr.mxu0 0.0
    %2271 = vmatpush1.msra.mxu0 0.0
    %2272 = vmatprep.subr.mxu0 0.0
    %2273 = vmatpush1.msra.mxu0 0.0
    %2274 = vmatprep.subr.mxu0 0.0
    %2275 = vmatpush1.msra.mxu0 0.0
    %2276 = vmatprep.subr.mxu0 0.0
    %2277 = vmatpush1.msra.mxu0 0.0
    %2278 = vmatprep.subr.mxu0 0.0
    %2279 = vmatpush1.msra.mxu0 0.0
    %2280 = vmatprep.subr.mxu0 0.0
    %2281 = vmatpush1.msra.mxu0 0.0
    %2282 = vmatprep.subr.mxu0 0.0
    %2283 = vmatpush1.msra.mxu0 0.0
    %2284 = vmatprep.subr.mxu0 0.0
    %2285 = vmatpush1.msra.mxu0 0.0
    %2286 = vmatprep.subr.mxu0 0.0
    %2287 = vmatpush1.msra.mxu0 0.0
    %2288 = vmatprep.subr.mxu0 0.0
    %2289 = vmatpush1.msra.mxu0 0.0
    %2290 = vmatprep.subr.mxu0 0.0
    %2291 = vmatpush1.msra.mxu0 0.0
    %2292 = vmatprep.subr.mxu0 0.0
    %2293 = vmatpush1.msra.mxu0 0.0
    %2294 = vmatprep.subr.mxu0 0.0
    %2295 = vmatpush1.msra.mxu0 0.0
    %2296 = vmatprep.subr.mxu0 0.0
    %2297 = vmatpush1.msra.mxu0 0.0
    %2298 = vmatprep.subr.mxu0 0.0
    %2299 = vmatpush1.msra.mxu0 0.0
    %2300 = vmatprep.subr.mxu0 0.0
    %2301 = vmatpush1.msra.mxu0 0.0
    %2302 = vmatprep.subr.mxu0 0.0
    %2303 = vmatpush1.msra.mxu0 0.0
    %2304 = vmatprep.subr.mxu0 0.0
    %2305 = vmatpush1.msra.mxu0 0.0
    %2306 = vmatprep.subr.mxu0 0.0
    %2307 = vmatpush1.msra.mxu0 0.0
    %2308 = vmatprep.subr.mxu0 0.0
    %2309 = vmatpush1.msra.mxu0 0.0
    %2310 = vmatprep.subr.mxu0 0.0
    %2311 = vmatpush1.msra.mxu0 0.0
    %2312 = vmatprep.subr.mxu0 0.0
    %2313 = vmatpush1.msra.mxu0 0.0
    %2314 = vmatprep.subr.mxu0 0.0
    %2315 = vmatpush1.msra.mxu0 0.0
    %2316 = vmatprep.mubr.f32.mxu0 0.0
    %v2317 = vand.u32 %v2072, 4294901760
    %v2318 = vsub.f32 %v2072, %v2317
    %2319 = vmatmul.mubr.f32.gmra.mrb[0].mxu0 %v2318
    %v2320 = vpop.f32.mrb[0].mxu0
    %v2321 = vadd.f32 %v2241, %v2320
    %v2322 = vpop.f32.mrb[0].mxu0
    %2323 = vdwg.mxu0
    %2324 = vmatprep.subr.mxu0 0.0
    %v2325 = vand.u32 %v58, 4294901760
    %2326 = vmatpush1.msra.mxu0 %v2325
    %2327 = vmatprep.subr.mxu0 0.0
    %v2328 = vand.u32 %v59, 4294901760
    %2329 = vmatpush1.msra.mxu0 %v2328
    %2330 = vmatprep.subr.mxu0 0.0
    %v2331 = vand.u32 %v60, 4294901760
    %2332 = vmatpush1.msra.mxu0 %v2331
    %2333 = vmatprep.subr.mxu0 0.0
    %v2334 = vand.u32 %v61, 4294901760
    %2335 = vmatpush1.msra.mxu0 %v2334
    %2336 = vmatprep.subr.mxu0 0.0
    %2337 = vmatpush1.msra.mxu0 0.0
    %2338 = vmatprep.subr.mxu0 0.0
    %2339 = vmatpush1.msra.mxu0 0.0
    %2340 = vmatprep.subr.mxu0 0.0
    %2341 = vmatpush1.msra.mxu0 0.0
    %2342 = vmatprep.subr.mxu0 0.0
    %2343 = vmatpush1.msra.mxu0 0.0
    %2344 = vmatprep.subr.mxu0 0.0
    %2345 = vmatpush1.msra.mxu0 0.0
    %2346 = vmatprep.subr.mxu0 0.0
    %2347 = vmatpush1.msra.mxu0 0.0
    %2348 = vmatprep.subr.mxu0 0.0
    %2349 = vmatpush1.msra.mxu0 0.0
    %2350 = vmatprep.subr.mxu0 0.0
    %2351 = vmatpush1.msra.mxu0 0.0
    %2352 = vmatprep.subr.mxu0 0.0
    %2353 = vmatpush1.msra.mxu0 0.0
    %2354 = vmatprep.subr.mxu0 0.0
    %2355 = vmatpush1.msra.mxu0 0.0
    %2356 = vmatprep.subr.mxu0 0.0
    %2357 = vmatpush1.msra.mxu0 0.0
    %2358 = vmatprep.subr.mxu0 0.0
    %2359 = vmatpush1.msra.mxu0 0.0
    %2360 = vmatprep.subr.mxu0 0.0
    %2361 = vmatpush1.msra.mxu0 0.0
    %2362 = vmatprep.subr.mxu0 0.0
    %2363 = vmatpush1.msra.mxu0 0.0
    %2364 = vmatprep.subr.mxu0 0.0
    %2365 = vmatpush1.msra.mxu0 0.0
    %2366 = vmatprep.subr.mxu0 0.0
    %2367 = vmatpush1.msra.mxu0 0.0
    %2368 = vmatprep.subr.mxu0 0.0
    %2369 = vmatpush1.msra.mxu0 0.0
    %2370 = vmatprep.subr.mxu0 0.0
    %2371 = vmatpush1.msra.mxu0 0.0
    %2372 = vmatprep.subr.mxu0 0.0
    %2373 = vmatpush1.msra.mxu0 0.0
    %2374 = vmatprep.subr.mxu0 0.0
    %2375 = vmatpush1.msra.mxu0 0.0
    %2376 = vmatprep.subr.mxu0 0.0
    %2377 = vmatpush1.msra.mxu0 0.0
    %2378 = vmatprep.subr.mxu0 0.0
    %2379 = vmatpush1.msra.mxu0 0.0
    %2380 = vmatprep.subr.mxu0 0.0
    %2381 = vmatpush1.msra.mxu0 0.0
    %2382 = vmatprep.subr.mxu0 0.0
    %2383 = vmatpush1.msra.mxu0 0.0
    %2384 = vmatprep.subr.mxu0 0.0
    %2385 = vmatpush1.msra.mxu0 0.0
    %2386 = vmatprep.subr.mxu0 0.0
    %2387 = vmatpush1.msra.mxu0 0.0
    %2388 = vmatprep.subr.mxu0 0.0
    %2389 = vmatpush1.msra.mxu0 0.0
    %2390 = vmatprep.subr.mxu0 0.0
    %2391 = vmatpush1.msra.mxu0 0.0
    %2392 = vmatprep.mubr.f32.mxu0 0.0
    %v2393 = vand.u32 %v2072, 4294901760
    %v2394 = vsub.f32 %v2072, %v2393
    %v2395 = vand.u32 %v2394, 4294901760
    %2396 = vmatmul.mubr.f32.gmra.mrb[0].mxu0 %v2395
    %v2397 = vpop.f32.mrb[0].mxu0
    %v2398 = vadd.f32 %v2321, %v2397
    %v2399 = vpop.f32.mrb[0].mxu0
    %2400 = vdwg.mxu0
    %2401 = vmatprep.subr.mxu0 0.0
    %v2402 = vand.u32 %v58, 4294901760
    %v2403 = vsub.f32 %v58, %v2402
    %v2404 = vand.u32 %v2403, 4294901760
    %2405 = vmatpush1.msra.mxu0 %v2404
    %2406 = vmatprep.subr.mxu0 0.0
    %v2407 = vand.u32 %v59, 4294901760
    %v2408 = vsub.f32 %v59, %v2407
    %v2409 = vand.u32 %v2408, 4294901760
    %2410 = vmatpush1.msra.mxu0 %v2409
    %2411 = vmatprep.subr.mxu0 0.0
    %v2412 = vand.u32 %v60, 4294901760
    %v2413 = vsub.f32 %v60, %v2412
    %v2414 = vand.u32 %v2413, 4294901760
    %2415 = vmatpush1.msra.mxu0 %v2414
    %2416 = vmatprep.subr.mxu0 0.0
    %v2417 = vand.u32 %v61, 4294901760
    %v2418 = vsub.f32 %v61, %v2417
    %v2419 = vand.u32 %v2418, 4294901760
    %2420 = vmatpush1.msra.mxu0 %v2419
    %2421 = vmatprep.subr.mxu0 0.0
    %2422 = vmatpush1.msra.mxu0 0.0
    %2423 = vmatprep.subr.mxu0 0.0
    %2424 = vmatpush1.msra.mxu0 0.0
    %2425 = vmatprep.subr.mxu0 0.0
    %2426 = vmatpush1.msra.mxu0 0.0
    %2427 = vmatprep.subr.mxu0 0.0
    %2428 = vmatpush1.msra.mxu0 0.0
    %2429 = vmatprep.subr.mxu0 0.0
    %2430 = vmatpush1.msra.mxu0 0.0
    %2431 = vmatprep.subr.mxu0 0.0
    %2432 = vmatpush1.msra.mxu0 0.0
    %2433 = vmatprep.subr.mxu0 0.0
    %2434 = vmatpush1.msra.mxu0 0.0
    %2435 = vmatprep.subr.mxu0 0.0
    %2436 = vmatpush1.msra.mxu0 0.0
    %2437 = vmatprep.subr.mxu0 0.0
    %2438 = vmatpush1.msra.mxu0 0.0
    %2439 = vmatprep.subr.mxu0 0.0
    %2440 = vmatpush1.msra.mxu0 0.0
    %2441 = vmatprep.subr.mxu0 0.0
    %2442 = vmatpush1.msra.mxu0 0.0
    %2443 = vmatprep.subr.mxu0 0.0
    %2444 = vmatpush1.msra.mxu0 0.0
    %2445 = vmatprep.subr.mxu0 0.0
    %2446 = vmatpush1.msra.mxu0 0.0
    %2447 = vmatprep.subr.mxu0 0.0
    %2448 = vmatpush1.msra.mxu0 0.0
    %2449 = vmatprep.subr.mxu0 0.0
    %2450 = vmatpush1.msra.mxu0 0.0
    %2451 = vmatprep.subr.mxu0 0.0
    %2452 = vmatpush1.msra.mxu0 0.0
    %2453 = vmatprep.subr.mxu0 0.0
    %2454 = vmatpush1.msra.mxu0 0.0
    %2455 = vmatprep.subr.mxu0 0.0
    %2456 = vmatpush1.msra.mxu0 0.0
    %2457 = vmatprep.subr.mxu0 0.0
    %2458 = vmatpush1.msra.mxu0 0.0
    %2459 = vmatprep.subr.mxu0 0.0
    %2460 = vmatpush1.msra.mxu0 0.0
    %2461 = vmatprep.subr.mxu0 0.0
    %2462 = vmatpush1.msra.mxu0 0.0
    %2463 = vmatprep.subr.mxu0 0.0
    %2464 = vmatpush1.msra.mxu0 0.0
    %2465 = vmatprep.subr.mxu0 0.0
    %2466 = vmatpush1.msra.mxu0 0.0
    %2467 = vmatprep.subr.mxu0 0.0
    %2468 = vmatpush1.msra.mxu0 0.0
    %2469 = vmatprep.subr.mxu0 0.0
    %2470 = vmatpush1.msra.mxu0 0.0
    %2471 = vmatprep.subr.mxu0 0.0
    %2472 = vmatpush1.msra.mxu0 0.0
    %2473 = vmatprep.subr.mxu0 0.0
    %2474 = vmatpush1.msra.mxu0 0.0
    %2475 = vmatprep.subr.mxu0 0.0
    %2476 = vmatpush1.msra.mxu0 0.0
    %2477 = vmatprep.mubr.f32.mxu0 0.0
    %v2478 = vand.u32 %v2072, 4294901760
    %2479 = vmatmul.mubr.f32.gmra.mrb[0].mxu0 %v2478
    %v2480 = vpop.f32.mrb[0].mxu0
    %v2481 = vadd.f32 %v2398, %v2480
    %v2482 = vpop.f32.mrb[0].mxu0
    %2483 = vdwg.mxu0
    %2484 = vmatprep.subr.mxu0 0.0
    %v2485 = vand.u32 %v58, 4294901760
    %2486 = vmatpush1.msra.mxu0 %v2485
    %2487 = vmatprep.subr.mxu0 0.0
    %v2488 = vand.u32 %v59, 4294901760
    %2489 = vmatpush1.msra.mxu0 %v2488
    %2490 = vmatprep.subr.mxu0 0.0
    %v2491 = vand.u32 %v60, 4294901760
    %2492 = vmatpush1.msra.mxu0 %v2491
    %2493 = vmatprep.subr.mxu0 0.0
    %v2494 = vand.u32 %v61, 4294901760
    %2495 = vmatpush1.msra.mxu0 %v2494
    %2496 = vmatprep.subr.mxu0 0.0
    %2497 = vmatpush1.msra.mxu0 0.0
    %2498 = vmatprep.subr.mxu0 0.0
    %2499 = vmatpush1.msra.mxu0 0.0
    %2500 = vmatprep.subr.mxu0 0.0
    %2501 = vmatpush1.msra.mxu0 0.0
    %2502 = vmatprep.subr.mxu0 0.0
    %2503 = vmatpush1.msra.mxu0 0.0
    %2504 = vmatprep.subr.mxu0 0.0
    %2505 = vmatpush1.msra.mxu0 0.0
    %2506 = vmatprep.subr.mxu0 0.0
    %2507 = vmatpush1.msra.mxu0 0.0
    %2508 = vmatprep.subr.mxu0 0.0
    %2509 = vmatpush1.msra.mxu0 0.0
    %2510 = vmatprep.subr.mxu0 0.0
    %2511 = vmatpush1.msra.mxu0 0.0
    %2512 = vmatprep.subr.mxu0 0.0
    %2513 = vmatpush1.msra.mxu0 0.0
    %2514 = vmatprep.subr.mxu0 0.0
    %2515 = vmatpush1.msra.mxu0 0.0
    %2516 = vmatprep.subr.mxu0 0.0
    %2517 = vmatpush1.msra.mxu0 0.0
    %2518 = vmatprep.subr.mxu0 0.0
    %2519 = vmatpush1.msra.mxu0 0.0
    %2520 = vmatprep.subr.mxu0 0.0
    %2521 = vmatpush1.msra.mxu0 0.0
    %2522 = vmatprep.subr.mxu0 0.0
    %2523 = vmatpush1.msra.mxu0 0.0
    %2524 = vmatprep.subr.mxu0 0.0
    %2525 = vmatpush1.msra.mxu0 0.0
    %2526 = vmatprep.subr.mxu0 0.0
    %2527 = vmatpush1.msra.mxu0 0.0
    %2528 = vmatprep.subr.mxu0 0.0
    %2529 = vmatpush1.msra.mxu0 0.0
    %2530 = vmatprep.subr.mxu0 0.0
    %2531 = vmatpush1.msra.mxu0 0.0
    %2532 = vmatprep.subr.mxu0 0.0
    %2533 = vmatpush1.msra.mxu0 0.0
    %2534 = vmatprep.subr.mxu0 0.0
    %2535 = vmatpush1.msra.mxu0 0.0
    %2536 = vmatprep.subr.mxu0 0.0
    %2537 = vmatpush1.msra.mxu0 0.0
    %2538 = vmatprep.subr.mxu0 0.0
    %2539 = vmatpush1.msra.mxu0 0.0
    %2540 = vmatprep.subr.mxu0 0.0
    %2541 = vmatpush1.msra.mxu0 0.0
    %2542 = vmatprep.subr.mxu0 0.0
    %2543 = vmatpush1.msra.mxu0 0.0
    %2544 = vmatprep.subr.mxu0 0.0
    %2545 = vmatpush1.msra.mxu0 0.0
    %2546 = vmatprep.subr.mxu0 0.0
    %2547 = vmatpush1.msra.mxu0 0.0
    %2548 = vmatprep.subr.mxu0 0.0
    %2549 = vmatpush1.msra.mxu0 0.0
    %2550 = vmatprep.subr.mxu0 0.0
    %2551 = vmatpush1.msra.mxu0 0.0
    %2552 = vmatprep.mubr.f32.mxu0 0.0
    %v2553 = vand.u32 %v2072, 4294901760
    %2554 = vmatmul.mubr.f32.gmra.mrb[0].mxu0 %v2553
    %v2555 = vpop.f32.mrb[0].mxu0
    %v2556 = vadd.f32 %v2481, %v2555
    %v2557 = vpop.f32.mrb[0].mxu0
    %2558 = vdwg.mxu0
    %2560 = vrot.lane.b32.xlu0 %v2556, 96
    %v2561 = vpop.permute.xlu0 %2560
    %s2563 = scalar_lea.vmem %s4, 32
    %2564 = vst.msk [vmem:[%s2563] sm:$0xff] %vm558, %v2561
    %v2565 = vmul.f32 %v560, %v2068
    %v2566 = vadd.f32 %v2565, %v2556
    %s2567 = scalar_lea.vmem [#allocation5], 40
    %v2568 = vld [vmem:[%s2567] sm:$0xff]
    %v2569 = vadd.f32 %v2566, %v2568
    %v2570 = vtanh.pop %v2569
    %v2571 = vmax.f32 %v2570, 0.0
    %v2573 = vsel %vm65, %v2571, 0
    %2575 = vmatprep.subr.mxu0 0.0
    %v2576 = vand.u32 %v58, 4294901760
    %2577 = vmatpush1.msra.mxu0 %v2576
    %2578 = vmatprep.subr.mxu0 0.0
    %v2579 = vand.u32 %v59, 4294901760
    %2580 = vmatpush1.msra.mxu0 %v2579
    %2581 = vmatprep.subr.mxu0 0.0
    %v2582 = vand.u32 %v60, 4294901760
    %2583 = vmatpush1.msra.mxu0 %v2582
    %2584 = vmatprep.subr.mxu0 0.0
    %v2585 = vand.u32 %v61, 4294901760
    %2586 = vmatpush1.msra.mxu0 %v2585
    %2587 = vmatprep.subr.mxu0 0.0
    %2588 = vmatpush1.msra.mxu0 0.0
    %2589 = vmatprep.subr.mxu0 0.0
    %2590 = vmatpush1.msra.mxu0 0.0
    %2591 = vmatprep.subr.mxu0 0.0
    %2592 = vmatpush1.msra.mxu0 0.0
    %2593 = vmatprep.subr.mxu0 0.0
    %2594 = vmatpush1.msra.mxu0 0.0
    %2595 = vmatprep.subr.mxu0 0.0
    %2596 = vmatpush1.msra.mxu0 0.0
    %2597 = vmatprep.subr.mxu0 0.0
    %2598 = vmatpush1.msra.mxu0 0.0
    %2599 = vmatprep.subr.mxu0 0.0
    %2600 = vmatpush1.msra.mxu0 0.0
    %2601 = vmatprep.subr.mxu0 0.0
    %2602 = vmatpush1.msra.mxu0 0.0
    %2603 = vmatprep.subr.mxu0 0.0
    %2604 = vmatpush1.msra.mxu0 0.0
    %2605 = vmatprep.subr.mxu0 0.0
    %2606 = vmatpush1.msra.mxu0 0.0
    %2607 = vmatprep.subr.mxu0 0.0
    %2608 = vmatpush1.msra.mxu0 0.0
    %2609 = vmatprep.subr.mxu0 0.0
    %2610 = vmatpush1.msra.mxu0 0.0
    %2611 = vmatprep.subr.mxu0 0.0
    %2612 = vmatpush1.msra.mxu0 0.0
    %2613 = vmatprep.subr.mxu0 0.0
    %2614 = vmatpush1.msra.mxu0 0.0
    %2615 = vmatprep.subr.mxu0 0.0
    %2616 = vmatpush1.msra.mxu0 0.0
    %2617 = vmatprep.subr.mxu0 0.0
    %2618 = vmatpush1.msra.mxu0 0.0
    %2619 = vmatprep.subr.mxu0 0.0
    %2620 = vmatpush1.msra.mxu0 0.0
    %2621 = vmatprep.subr.mxu0 0.0
    %2622 = vmatpush1.msra.mxu0 0.0
    %2623 = vmatprep.subr.mxu0 0.0
    %2624 = vmatpush1.msra.mxu0 0.0
    %2625 = vmatprep.subr.mxu0 0.0
    %2626 = vmatpush1.msra.mxu0 0.0
    %2627 = vmatprep.subr.mxu0 0.0
    %2628 = vmatpush1.msra.mxu0 0.0
    %2629 = vmatprep.subr.mxu0 0.0
    %2630 = vmatpush1.msra.mxu0 0.0
    %2631 = vmatprep.subr.mxu0 0.0
    %2632 = vmatpush1.msra.mxu0 0.0
    %2633 = vmatprep.subr.mxu0 0.0
    %2634 = vmatpush1.msra.mxu0 0.0
    %2635 = vmatprep.subr.mxu0 0.0
    %2636 = vmatpush1.msra.mxu0 0.0
    %2637 = vmatprep.subr.mxu0 0.0
    %2638 = vmatpush1.msra.mxu0 0.0
    %2639 = vmatprep.subr.mxu0 0.0
    %2640 = vmatpush1.msra.mxu0 0.0
    %2641 = vmatprep.subr.mxu0 0.0
    %2642 = vmatpush1.msra.mxu0 0.0
    %2643 = vmatprep.mubr.f32.mxu0 0.0
    %v2644 = vand.u32 %v2573, 4294901760
    %v2645 = vsub.f32 %v2573, %v2644
    %v2646 = vand.u32 %v2645, 4294901760
    %v2647 = vsub.f32 %v2645, %v2646
    %v2648 = vand.u32 %v2647, 4294901760
    %2649 = vmatmul.mubr.f32.gmra.mrb[0].mxu0 %v2648
    %v2650 = vpop.f32.mrb[0].mxu0
    %v2651 = vadd.f32 0.0, %v2650
    %v2652 = vpop.f32.mrb[0].mxu0
    %2653 = vdwg.mxu0
    %2654 = vmatprep.subr.mxu0 0.0
    %v2655 = vand.u32 %v58, 4294901760
    %v2656 = vsub.f32 %v58, %v2655
    %v2657 = vand.u32 %v2656, 4294901760
    %v2658 = vsub.f32 %v2656, %v2657
    %v2659 = vand.u32 %v2658, 4294901760
    %2660 = vmatpush1.msra.mxu0 %v2659
    %2661 = vmatprep.subr.mxu0 0.0
    %v2662 = vand.u32 %v59, 4294901760
    %v2663 = vsub.f32 %v59, %v2662
    %v2664 = vand.u32 %v2663, 4294901760
    %v2665 = vsub.f32 %v2663, %v2664
    %v2666 = vand.u32 %v2665, 4294901760
    %2667 = vmatpush1.msra.mxu0 %v2666
    %2668 = vmatprep.subr.mxu0 0.0
    %v2669 = vand.u32 %v60, 4294901760
    %v2670 = vsub.f32 %v60, %v2669
    %v2671 = vand.u32 %v2670, 4294901760
    %v2672 = vsub.f32 %v2670, %v2671
    %v2673 = vand.u32 %v2672, 4294901760
    %2674 = vmatpush1.msra.mxu0 %v2673
    %2675 = vmatprep.subr.mxu0 0.0
    %v2676 = vand.u32 %v61, 4294901760
    %v2677 = vsub.f32 %v61, %v2676
    %v2678 = vand.u32 %v2677, 4294901760
    %v2679 = vsub.f32 %v2677, %v2678
    %v2680 = vand.u32 %v2679, 4294901760
    %2681 = vmatpush1.msra.mxu0 %v2680
    %2682 = vmatprep.subr.mxu0 0.0
    %2683 = vmatpush1.msra.mxu0 0.0
    %2684 = vmatprep.subr.mxu0 0.0
    %2685 = vmatpush1.msra.mxu0 0.0
    %2686 = vmatprep.subr.mxu0 0.0
    %2687 = vmatpush1.msra.mxu0 0.0
    %2688 = vmatprep.subr.mxu0 0.0
    %2689 = vmatpush1.msra.mxu0 0.0
    %2690 = vmatprep.subr.mxu0 0.0
    %2691 = vmatpush1.msra.mxu0 0.0
    %2692 = vmatprep.subr.mxu0 0.0
    %2693 = vmatpush1.msra.mxu0 0.0
    %2694 = vmatprep.subr.mxu0 0.0
    %2695 = vmatpush1.msra.mxu0 0.0
    %2696 = vmatprep.subr.mxu0 0.0
    %2697 = vmatpush1.msra.mxu0 0.0
    %2698 = vmatprep.subr.mxu0 0.0
    %2699 = vmatpush1.msra.mxu0 0.0
    %2700 = vmatprep.subr.mxu0 0.0
    %2701 = vmatpush1.msra.mxu0 0.0
    %2702 = vmatprep.subr.mxu0 0.0
    %2703 = vmatpush1.msra.mxu0 0.0
    %2704 = vmatprep.subr.mxu0 0.0
    %2705 = vmatpush1.msra.mxu0 0.0
    %2706 = vmatprep.subr.mxu0 0.0
    %2707 = vmatpush1.msra.mxu0 0.0
    %2708 = vmatprep.subr.mxu0 0.0
    %2709 = vmatpush1.msra.mxu0 0.0
    %2710 = vmatprep.subr.mxu0 0.0
    %2711 = vmatpush1.msra.mxu0 0.0
    %2712 = vmatprep.subr.mxu0 0.0
    %2713 = vmatpush1.msra.mxu0 0.0
    %2714 = vmatprep.subr.mxu0 0.0
    %2715 = vmatpush1.msra.mxu0 0.0
    %2716 = vmatprep.subr.mxu0 0.0
    %2717 = vmatpush1.msra.mxu0 0.0
    %2718 = vmatprep.subr.mxu0 0.0
    %2719 = vmatpush1.msra.mxu0 0.0
    %2720 = vmatprep.subr.mxu0 0.0
    %2721 = vmatpush1.msra.mxu0 0.0
    %2722 = vmatprep.subr.mxu0 0.0
    %2723 = vmatpush1.msra.mxu0 0.0
    %2724 = vmatprep.subr.mxu0 0.0
    %2725 = vmatpush1.msra.mxu0 0.0
    %2726 = vmatprep.subr.mxu0 0.0
    %2727 = vmatpush1.msra.mxu0 0.0
    %2728 = vmatprep.subr.mxu0 0.0
    %2729 = vmatpush1.msra.mxu0 0.0
    %2730 = vmatprep.subr.mxu0 0.0
    %2731 = vmatpush1.msra.mxu0 0.0
    %2732 = vmatprep.subr.mxu0 0.0
    %2733 = vmatpush1.msra.mxu0 0.0
    %2734 = vmatprep.subr.mxu0 0.0
    %2735 = vmatpush1.msra.mxu0 0.0
    %2736 = vmatprep.subr.mxu0 0.0
    %2737 = vmatpush1.msra.mxu0 0.0
    %2738 = vmatprep.mubr.f32.mxu0 0.0
    %v2739 = vand.u32 %v2573, 4294901760
    %2740 = vmatmul.mubr.f32.gmra.mrb[0].mxu0 %v2739
    %v2741 = vpop.f32.mrb[0].mxu0
    %v2742 = vadd.f32 %v2651, %v2741
    %v2743 = vpop.f32.mrb[0].mxu0
    %2744 = vdwg.mxu0
    %2745 = vmatprep.subr.mxu0 0.0
    %v2746 = vand.u32 %v58, 4294901760
    %v2747 = vsub.f32 %v58, %v2746
    %2748 = vmatpush1.msra.mxu0 %v2747
    %2749 = vmatprep.subr.mxu0 0.0
    %v2750 = vand.u32 %v59, 4294901760
    %v2751 = vsub.f32 %v59, %v2750
    %2752 = vmatpush1.msra.mxu0 %v2751
    %2753 = vmatprep.subr.mxu0 0.0
    %v2754 = vand.u32 %v60, 4294901760
    %v2755 = vsub.f32 %v60, %v2754
    %2756 = vmatpush1.msra.mxu0 %v2755
    %2757 = vmatprep.subr.mxu0 0.0
    %v2758 = vand.u32 %v61, 4294901760
    %v2759 = vsub.f32 %v61, %v2758
    %2760 = vmatpush1.msra.mxu0 %v2759
    %2761 = vmatprep.subr.mxu0 0.0
    %2762 = vmatpush1.msra.mxu0 0.0
    %2763 = vmatprep.subr.mxu0 0.0
    %2764 = vmatpush1.msra.mxu0 0.0
    %2765 = vmatprep.subr.mxu0 0.0
    %2766 = vmatpush1.msra.mxu0 0.0
    %2767 = vmatprep.subr.mxu0 0.0
    %2768 = vmatpush1.msra.mxu0 0.0
    %2769 = vmatprep.subr.mxu0 0.0
    %2770 = vmatpush1.msra.mxu0 0.0
    %2771 = vmatprep.subr.mxu0 0.0
    %2772 = vmatpush1.msra.mxu0 0.0
    %2773 = vmatprep.subr.mxu0 0.0
    %2774 = vmatpush1.msra.mxu0 0.0
    %2775 = vmatprep.subr.mxu0 0.0
    %2776 = vmatpush1.msra.mxu0 0.0
    %2777 = vmatprep.subr.mxu0 0.0
    %2778 = vmatpush1.msra.mxu0 0.0
    %2779 = vmatprep.subr.mxu0 0.0
    %2780 = vmatpush1.msra.mxu0 0.0
    %2781 = vmatprep.subr.mxu0 0.0
    %2782 = vmatpush1.msra.mxu0 0.0
    %2783 = vmatprep.subr.mxu0 0.0
    %2784 = vmatpush1.msra.mxu0 0.0
    %2785 = vmatprep.subr.mxu0 0.0
    %2786 = vmatpush1.msra.mxu0 0.0
    %2787 = vmatprep.subr.mxu0 0.0
    %2788 = vmatpush1.msra.mxu0 0.0
    %2789 = vmatprep.subr.mxu0 0.0
    %2790 = vmatpush1.msra.mxu0 0.0
    %2791 = vmatprep.subr.mxu0 0.0
    %2792 = vmatpush1.msra.mxu0 0.0
    %2793 = vmatprep.subr.mxu0 0.0
    %2794 = vmatpush1.msra.mxu0 0.0
    %2795 = vmatprep.subr.mxu0 0.0
    %2796 = vmatpush1.msra.mxu0 0.0
    %2797 = vmatprep.subr.mxu0 0.0
    %2798 = vmatpush1.msra.mxu0 0.0
    %2799 = vmatprep.subr.mxu0 0.0
    %2800 = vmatpush1.msra.mxu0 0.0
    %2801 = vmatprep.subr.mxu0 0.0
    %2802 = vmatpush1.msra.mxu0 0.0
    %2803 = vmatprep.subr.mxu0 0.0
    %2804 = vmatpush1.msra.mxu0 0.0
    %2805 = vmatprep.subr.mxu0 0.0
    %2806 = vmatpush1.msra.mxu0 0.0
    %2807 = vmatprep.subr.mxu0 0.0
    %2808 = vmatpush1.msra.mxu0 0.0
    %2809 = vmatprep.subr.mxu0 0.0
    %2810 = vmatpush1.msra.mxu0 0.0
    %2811 = vmatprep.subr.mxu0 0.0
    %2812 = vmatpush1.msra.mxu0 0.0
    %2813 = vmatprep.subr.mxu0 0.0
    %2814 = vmatpush1.msra.mxu0 0.0
    %2815 = vmatprep.subr.mxu0 0.0
    %2816 = vmatpush1.msra.mxu0 0.0
    %2817 = vmatprep.mubr.f32.mxu0 0.0
    %v2818 = vand.u32 %v2573, 4294901760
    %v2819 = vsub.f32 %v2573, %v2818
    %2820 = vmatmul.mubr.f32.gmra.mrb[0].mxu0 %v2819
    %v2821 = vpop.f32.mrb[0].mxu0
    %v2822 = vadd.f32 %v2742, %v2821
    %v2823 = vpop.f32.mrb[0].mxu0
    %2824 = vdwg.mxu0
    %2825 = vmatprep.subr.mxu0 0.0
    %v2826 = vand.u32 %v58, 4294901760
    %2827 = vmatpush1.msra.mxu0 %v2826
    %2828 = vmatprep.subr.mxu0 0.0
    %v2829 = vand.u32 %v59, 4294901760
    %2830 = vmatpush1.msra.mxu0 %v2829
    %2831 = vmatprep.subr.mxu0 0.0
    %v2832 = vand.u32 %v60, 4294901760
    %2833 = vmatpush1.msra.mxu0 %v2832
    %2834 = vmatprep.subr.mxu0 0.0
    %v2835 = vand.u32 %v61, 4294901760
    %2836 = vmatpush1.msra.mxu0 %v2835
    %2837 = vmatprep.subr.mxu0 0.0
    %2838 = vmatpush1.msra.mxu0 0.0
    %2839 = vmatprep.subr.mxu0 0.0
    %2840 = vmatpush1.msra.mxu0 0.0
    %2841 = vmatprep.subr.mxu0 0.0
    %2842 = vmatpush1.msra.mxu0 0.0
    %2843 = vmatprep.subr.mxu0 0.0
    %2844 = vmatpush1.msra.mxu0 0.0
    %2845 = vmatprep.subr.mxu0 0.0
    %2846 = vmatpush1.msra.mxu0 0.0
    %2847 = vmatprep.subr.mxu0 0.0
    %2848 = vmatpush1.msra.mxu0 0.0
    %2849 = vmatprep.subr.mxu0 0.0
    %2850 = vmatpush1.msra.mxu0 0.0
    %2851 = vmatprep.subr.mxu0 0.0
    %2852 = vmatpush1.msra.mxu0 0.0
    %2853 = vmatprep.subr.mxu0 0.0
    %2854 = vmatpush1.msra.mxu0 0.0
    %2855 = vmatprep.subr.mxu0 0.0
    %2856 = vmatpush1.msra.mxu0 0.0
    %2857 = vmatprep.subr.mxu0 0.0
    %2858 = vmatpush1.msra.mxu0 0.0
    %2859 = vmatprep.subr.mxu0 0.0
    %2860 = vmatpush1.msra.mxu0 0.0
    %2861 = vmatprep.subr.mxu0 0.0
    %2862 = vmatpush1.msra.mxu0 0.0
    %2863 = vmatprep.subr.mxu0 0.0
    %2864 = vmatpush1.msra.mxu0 0.0
    %2865 = vmatprep.subr.mxu0 0.0
    %2866 = vmatpush1.msra.mxu0 0.0
    %2867 = vmatprep.subr.mxu0 0.0
    %2868 = vmatpush1.msra.mxu0 0.0
    %2869 = vmatprep.subr.mxu0 0.0
    %2870 = vmatpush1.msra.mxu0 0.0
    %2871 = vmatprep.subr.mxu0 0.0
    %2872 = vmatpush1.msra.mxu0 0.0
    %2873 = vmatprep.subr.mxu0 0.0
    %2874 = vmatpush1.msra.mxu0 0.0
    %2875 = vmatprep.subr.mxu0 0.0
    %2876 = vmatpush1.msra.mxu0 0.0
    %2877 = vmatprep.subr.mxu0 0.0
    %2878 = vmatpush1.msra.mxu0 0.0
    %2879 = vmatprep.subr.mxu0 0.0
    %2880 = vmatpush1.msra.mxu0 0.0
    %2881 = vmatprep.subr.mxu0 0.0
    %2882 = vmatpush1.msra.mxu0 0.0
    %2883 = vmatprep.subr.mxu0 0.0
    %2884 = vmatpush1.msra.mxu0 0.0
    %2885 = vmatprep.subr.mxu0 0.0
    %2886 = vmatpush1.msra.mxu0 0.0
    %2887 = vmatprep.subr.mxu0 0.0
    %2888 = vmatpush1.msra.mxu0 0.0
    %2889 = vmatprep.subr.mxu0 0.0
    %2890 = vmatpush1.msra.mxu0 0.0
    %2891 = vmatprep.subr.mxu0 0.0
    %2892 = vmatpush1.msra.mxu0 0.0
    %2893 = vmatprep.mubr.f32.mxu0 0.0
    %v2894 = vand.u32 %v2573, 4294901760
    %v2895 = vsub.f32 %v2573, %v2894
    %v2896 = vand.u32 %v2895, 4294901760
    %2897 = vmatmul.mubr.f32.gmra.mrb[0].mxu0 %v2896
    %v2898 = vpop.f32.mrb[0].mxu0
    %v2899 = vadd.f32 %v2822, %v2898
    %v2900 = vpop.f32.mrb[0].mxu0
    %2901 = vdwg.mxu0
    %2902 = vmatprep.subr.mxu0 0.0
    %v2903 = vand.u32 %v58, 4294901760
    %v2904 = vsub.f32 %v58, %v2903
    %v2905 = vand.u32 %v2904, 4294901760
    %2906 = vmatpush1.msra.mxu0 %v2905
    %2907 = vmatprep.subr.mxu0 0.0
    %v2908 = vand.u32 %v59, 4294901760
    %v2909 = vsub.f32 %v59, %v2908
    %v2910 = vand.u32 %v2909, 4294901760
    %2911 = vmatpush1.msra.mxu0 %v2910
    %2912 = vmatprep.subr.mxu0 0.0
    %v2913 = vand.u32 %v60, 4294901760
    %v2914 = vsub.f32 %v60, %v2913
    %v2915 = vand.u32 %v2914, 4294901760
    %2916 = vmatpush1.msra.mxu0 %v2915
    %2917 = vmatprep.subr.mxu0 0.0
    %v2918 = vand.u32 %v61, 4294901760
    %v2919 = vsub.f32 %v61, %v2918
    %v2920 = vand.u32 %v2919, 4294901760
    %2921 = vmatpush1.msra.mxu0 %v2920
    %2922 = vmatprep.subr.mxu0 0.0
    %2923 = vmatpush1.msra.mxu0 0.0
    %2924 = vmatprep.subr.mxu0 0.0
    %2925 = vmatpush1.msra.mxu0 0.0
    %2926 = vmatprep.subr.mxu0 0.0
    %2927 = vmatpush1.msra.mxu0 0.0
    %2928 = vmatprep.subr.mxu0 0.0
    %2929 = vmatpush1.msra.mxu0 0.0
    %2930 = vmatprep.subr.mxu0 0.0
    %2931 = vmatpush1.msra.mxu0 0.0
    %2932 = vmatprep.subr.mxu0 0.0
    %2933 = vmatpush1.msra.mxu0 0.0
    %2934 = vmatprep.subr.mxu0 0.0
    %2935 = vmatpush1.msra.mxu0 0.0
    %2936 = vmatprep.subr.mxu0 0.0
    %2937 = vmatpush1.msra.mxu0 0.0
    %2938 = vmatprep.subr.mxu0 0.0
    %2939 = vmatpush1.msra.mxu0 0.0
    %2940 = vmatprep.subr.mxu0 0.0
    %2941 = vmatpush1.msra.mxu0 0.0
    %2942 = vmatprep.subr.mxu0 0.0
    %2943 = vmatpush1.msra.mxu0 0.0
    %2944 = vmatprep.subr.mxu0 0.0
    %2945 = vmatpush1.msra.mxu0 0.0
    %2946 = vmatprep.subr.mxu0 0.0
    %2947 = vmatpush1.msra.mxu0 0.0
    %2948 = vmatprep.subr.mxu0 0.0
    %2949 = vmatpush1.msra.mxu0 0.0
    %2950 = vmatprep.subr.mxu0 0.0
    %2951 = vmatpush1.msra.mxu0 0.0
    %2952 = vmatprep.subr.mxu0 0.0
    %2953 = vmatpush1.msra.mxu0 0.0
    %2954 = vmatprep.subr.mxu0 0.0
    %2955 = vmatpush1.msra.mxu0 0.0
    %2956 = vmatprep.subr.mxu0 0.0
    %2957 = vmatpush1.msra.mxu0 0.0
    %2958 = vmatprep.subr.mxu0 0.0
    %2959 = vmatpush1.msra.mxu0 0.0
    %2960 = vmatprep.subr.mxu0 0.0
    %2961 = vmatpush1.msra.mxu0 0.0
    %2962 = vmatprep.subr.mxu0 0.0
    %2963 = vmatpush1.msra.mxu0 0.0
    %2964 = vmatprep.subr.mxu0 0.0
    %2965 = vmatpush1.msra.mxu0 0.0
    %2966 = vmatprep.subr.mxu0 0.0
    %2967 = vmatpush1.msra.mxu0 0.0
    %2968 = vmatprep.subr.mxu0 0.0
    %2969 = vmatpush1.msra.mxu0 0.0
    %2970 = vmatprep.subr.mxu0 0.0
    %2971 = vmatpush1.msra.mxu0 0.0
    %2972 = vmatprep.subr.mxu0 0.0
    %2973 = vmatpush1.msra.mxu0 0.0
    %2974 = vmatprep.subr.mxu0 0.0
    %2975 = vmatpush1.msra.mxu0 0.0
    %2976 = vmatprep.subr.mxu0 0.0
    %2977 = vmatpush1.msra.mxu0 0.0
    %2978 = vmatprep.mubr.f32.mxu0 0.0
    %v2979 = vand.u32 %v2573, 4294901760
    %2980 = vmatmul.mubr.f32.gmra.mrb[0].mxu0 %v2979
    %v2981 = vpop.f32.mrb[0].mxu0
    %v2982 = vadd.f32 %v2899, %v2981
    %v2983 = vpop.f32.mrb[0].mxu0
    %2984 = vdwg.mxu0
    %2985 = vmatprep.subr.mxu0 0.0
    %v2986 = vand.u32 %v58, 4294901760
    %2987 = vmatpush1.msra.mxu0 %v2986
    %2988 = vmatprep.subr.mxu0 0.0
    %v2989 = vand.u32 %v59, 4294901760
    %2990 = vmatpush1.msra.mxu0 %v2989
    %2991 = vmatprep.subr.mxu0 0.0
    %v2992 = vand.u32 %v60, 4294901760
    %2993 = vmatpush1.msra.mxu0 %v2992
    %2994 = vmatprep.subr.mxu0 0.0
    %v2995 = vand.u32 %v61, 4294901760
    %2996 = vmatpush1.msra.mxu0 %v2995
    %2997 = vmatprep.subr.mxu0 0.0
    %2998 = vmatpush1.msra.mxu0 0.0
    %2999 = vmatprep.subr.mxu0 0.0
    %3000 = vmatpush1.msra.mxu0 0.0
    %3001 = vmatprep.subr.mxu0 0.0
    %3002 = vmatpush1.msra.mxu0 0.0
    %3003 = vmatprep.subr.mxu0 0.0
    %3004 = vmatpush1.msra.mxu0 0.0
    %3005 = vmatprep.subr.mxu0 0.0
    %3006 = vmatpush1.msra.mxu0 0.0
    %3007 = vmatprep.subr.mxu0 0.0
    %3008 = vmatpush1.msra.mxu0 0.0
    %3009 = vmatprep.subr.mxu0 0.0
    %3010 = vmatpush1.msra.mxu0 0.0
    %3011 = vmatprep.subr.mxu0 0.0
    %3012 = vmatpush1.msra.mxu0 0.0
    %3013 = vmatprep.subr.mxu0 0.0
    %3014 = vmatpush1.msra.mxu0 0.0
    %3015 = vmatprep.subr.mxu0 0.0
    %3016 = vmatpush1.msra.mxu0 0.0
    %3017 = vmatprep.subr.mxu0 0.0
    %3018 = vmatpush1.msra.mxu0 0.0
    %3019 = vmatprep.subr.mxu0 0.0
    %3020 = vmatpush1.msra.mxu0 0.0
    %3021 = vmatprep.subr.mxu0 0.0
    %3022 = vmatpush1.msra.mxu0 0.0
    %3023 = vmatprep.subr.mxu0 0.0
    %3024 = vmatpush1.msra.mxu0 0.0
    %3025 = vmatprep.subr.mxu0 0.0
    %3026 = vmatpush1.msra.mxu0 0.0
    %3027 = vmatprep.subr.mxu0 0.0
    %3028 = vmatpush1.msra.mxu0 0.0
    %3029 = vmatprep.subr.mxu0 0.0
    %3030 = vmatpush1.msra.mxu0 0.0
    %3031 = vmatprep.subr.mxu0 0.0
    %3032 = vmatpush1.msra.mxu0 0.0
    %3033 = vmatprep.subr.mxu0 0.0
    %3034 = vmatpush1.msra.mxu0 0.0
    %3035 = vmatprep.subr.mxu0 0.0
    %3036 = vmatpush1.msra.mxu0 0.0
    %3037 = vmatprep.subr.mxu0 0.0
    %3038 = vmatpush1.msra.mxu0 0.0
    %3039 = vmatprep.subr.mxu0 0.0
    %3040 = vmatpush1.msra.mxu0 0.0
    %3041 = vmatprep.subr.mxu0 0.0
    %3042 = vmatpush1.msra.mxu0 0.0
    %3043 = vmatprep.subr.mxu0 0.0
    %3044 = vmatpush1.msra.mxu0 0.0
    %3045 = vmatprep.subr.mxu0 0.0
    %3046 = vmatpush1.msra.mxu0 0.0
    %3047 = vmatprep.subr.mxu0 0.0
    %3048 = vmatpush1.msra.mxu0 0.0
    %3049 = vmatprep.subr.mxu0 0.0
    %3050 = vmatpush1.msra.mxu0 0.0
    %3051 = vmatprep.subr.mxu0 0.0
    %3052 = vmatpush1.msra.mxu0 0.0
    %3053 = vmatprep.mubr.f32.mxu0 0.0
    %v3054 = vand.u32 %v2573, 4294901760
    %3055 = vmatmul.mubr.f32.gmra.mrb[0].mxu0 %v3054
    %v3056 = vpop.f32.mrb[0].mxu0
    %v3057 = vadd.f32 %v2982, %v3056
    %v3058 = vpop.f32.mrb[0].mxu0
    %3059 = vdwg.mxu0
    %3061 = vrot.lane.b32.xlu0 %v3057, 96
    %v3062 = vpop.permute.xlu0 %3061
    %s3064 = scalar_lea.vmem %s4, 40
    %3065 = vst.msk [vmem:[%s3064] sm:$0xff] %vm558, %v3062
    %v3066 = vmul.f32 %v560, %v2569
    %v3067 = vadd.f32 %v3066, %v3057
    %s3068 = scalar_lea.vmem [#allocation5], 48
    %v3069 = vld [vmem:[%s3068] sm:$0xff]
    %v3070 = vadd.f32 %v3067, %v3069
    %v3071 = vtanh.pop %v3070
    %v3072 = vmax.f32 %v3071, 0.0
    %v3074 = vsel %vm65, %v3072, 0
    %3076 = vmatprep.subr.mxu0 0.0
    %v3077 = vand.u32 %v58, 4294901760
    %3078 = vmatpush1.msra.mxu0 %v3077
    %3079 = vmatprep.subr.mxu0 0.0
    %v3080 = vand.u32 %v59, 4294901760
    %3081 = vmatpush1.msra.mxu0 %v3080
    %3082 = vmatprep.subr.mxu0 0.0
    %v3083 = vand.u32 %v60, 4294901760
    %3084 = vmatpush1.msra.mxu0 %v3083
    %3085 = vmatprep.subr.mxu0 0.0
    %v3086 = vand.u32 %v61, 4294901760
    %3087 = vmatpush1.msra.mxu0 %v3086
    %3088 = vmatprep.subr.mxu0 0.0
    %3089 = vmatpush1.msra.mxu0 0.0
    %3090 = vmatprep.subr.mxu0 0.0
    %3091 = vmatpush1.msra.mxu0 0.0
    %3092 = vmatprep.subr.mxu0 0.0
    %3093 = vmatpush1.msra.mxu0 0.0
    %3094 = vmatprep.subr.mxu0 0.0
    %3095 = vmatpush1.msra.mxu0 0.0
    %3096 = vmatprep.subr.mxu0 0.0
    %3097 = vmatpush1.msra.mxu0 0.0
    %3098 = vmatprep.subr.mxu0 0.0
    %3099 = vmatpush1.msra.mxu0 0.0
    %3100 = vmatprep.subr.mxu0 0.0
    %3101 = vmatpush1.msra.mxu0 0.0
    %3102 = vmatprep.subr.mxu0 0.0
    %3103 = vmatpush1.msra.mxu0 0.0
    %3104 = vmatprep.subr.mxu0 0.0
    %3105 = vmatpush1.msra.mxu0 0.0
    %3106 = vmatprep.subr.mxu0 0.0
    %3107 = vmatpush1.msra.mxu0 0.0
    %3108 = vmatprep.subr.mxu0 0.0
    %3109 = vmatpush1.msra.mxu0 0.0
    %3110 = vmatprep.subr.mxu0 0.0
    %3111 = vmatpush1.msra.mxu0 0.0
    %3112 = vmatprep.subr.mxu0 0.0
    %3113 = vmatpush1.msra.mxu0 0.0
    %3114 = vmatprep.subr.mxu0 0.0
    %3115 = vmatpush1.msra.mxu0 0.0
    %3116 = vmatprep.subr.mxu0 0.0
    %3117 = vmatpush1.msra.mxu0 0.0
    %3118 = vmatprep.subr.mxu0 0.0
    %3119 = vmatpush1.msra.mxu0 0.0
    %3120 = vmatprep.subr.mxu0 0.0
    %3121 = vmatpush1.msra.mxu0 0.0
    %3122 = vmatprep.subr.mxu0 0.0
    %3123 = vmatpush1.msra.mxu0 0.0
    %3124 = vmatprep.subr.mxu0 0.0
    %3125 = vmatpush1.msra.mxu0 0.0
    %3126 = vmatprep.subr.mxu0 0.0
    %3127 = vmatpush1.msra.mxu0 0.0
    %3128 = vmatprep.subr.mxu0 0.0
    %3129 = vmatpush1.msra.mxu0 0.0
    %3130 = vmatprep.subr.mxu0 0.0
    %3131 = vmatpush1.msra.mxu0 0.0
    %3132 = vmatprep.subr.mxu0 0.0
    %3133 = vmatpush1.msra.mxu0 0.0
    %3134 = vmatprep.subr.mxu0 0.0
    %3135 = vmatpush1.msra.mxu0 0.0
    %3136 = vmatprep.subr.mxu0 0.0
    %3137 = vmatpush1.msra.mxu0 0.0
    %3138 = vmatprep.subr.mxu0 0.0
    %3139 = vmatpush1.msra.mxu0 0.0
    %3140 = vmatprep.subr.mxu0 0.0
    %3141 = vmatpush1.msra.mxu0 0.0
    %3142 = vmatprep.subr.mxu0 0.0
    %3143 = vmatpush1.msra.mxu0 0.0
    %3144 = vmatprep.mubr.f32.mxu0 0.0
    %v3145 = vand.u32 %v3074, 4294901760
    %v3146 = vsub.f32 %v3074, %v3145
    %v3147 = vand.u32 %v3146, 4294901760
    %v3148 = vsub.f32 %v3146, %v3147
    %v3149 = vand.u32 %v3148, 4294901760
    %3150 = vmatmul.mubr.f32.gmra.mrb[0].mxu0 %v3149
    %v3151 = vpop.f32.mrb[0].mxu0
    %v3152 = vadd.f32 0.0, %v3151
    %v3153 = vpop.f32.mrb[0].mxu0
    %3154 = vdwg.mxu0
    %3155 = vmatprep.subr.mxu0 0.0
    %v3156 = vand.u32 %v58, 4294901760
    %v3157 = vsub.f32 %v58, %v3156
    %v3158 = vand.u32 %v3157, 4294901760
    %v3159 = vsub.f32 %v3157, %v3158
    %v3160 = vand.u32 %v3159, 4294901760
    %3161 = vmatpush1.msra.mxu0 %v3160
    %3162 = vmatprep.subr.mxu0 0.0
    %v3163 = vand.u32 %v59, 4294901760
    %v3164 = vsub.f32 %v59, %v3163
    %v3165 = vand.u32 %v3164, 4294901760
    %v3166 = vsub.f32 %v3164, %v3165
    %v3167 = vand.u32 %v3166, 4294901760
    %3168 = vmatpush1.msra.mxu0 %v3167
    %3169 = vmatprep.subr.mxu0 0.0
    %v3170 = vand.u32 %v60, 4294901760
    %v3171 = vsub.f32 %v60, %v3170
    %v3172 = vand.u32 %v3171, 4294901760
    %v3173 = vsub.f32 %v3171, %v3172
    %v3174 = vand.u32 %v3173, 4294901760
    %3175 = vmatpush1.msra.mxu0 %v3174
    %3176 = vmatprep.subr.mxu0 0.0
    %v3177 = vand.u32 %v61, 4294901760
    %v3178 = vsub.f32 %v61, %v3177
    %v3179 = vand.u32 %v3178, 4294901760
    %v3180 = vsub.f32 %v3178, %v3179
    %v3181 = vand.u32 %v3180, 4294901760
    %3182 = vmatpush1.msra.mxu0 %v3181
    %3183 = vmatprep.subr.mxu0 0.0
    %3184 = vmatpush1.msra.mxu0 0.0
    %3185 = vmatprep.subr.mxu0 0.0
    %3186 = vmatpush1.msra.mxu0 0.0
    %3187 = vmatprep.subr.mxu0 0.0
    %3188 = vmatpush1.msra.mxu0 0.0
    %3189 = vmatprep.subr.mxu0 0.0
    %3190 = vmatpush1.msra.mxu0 0.0
    %3191 = vmatprep.subr.mxu0 0.0
    %3192 = vmatpush1.msra.mxu0 0.0
    %3193 = vmatprep.subr.mxu0 0.0
    %3194 = vmatpush1.msra.mxu0 0.0
    %3195 = vmatprep.subr.mxu0 0.0
    %3196 = vmatpush1.msra.mxu0 0.0
    %3197 = vmatprep.subr.mxu0 0.0
    %3198 = vmatpush1.msra.mxu0 0.0
    %3199 = vmatprep.subr.mxu0 0.0
    %3200 = vmatpush1.msra.mxu0 0.0
    %3201 = vmatprep.subr.mxu0 0.0
    %3202 = vmatpush1.msra.mxu0 0.0
    %3203 = vmatprep.subr.mxu0 0.0
    %3204 = vmatpush1.msra.mxu0 0.0
    %3205 = vmatprep.subr.mxu0 0.0
    %3206 = vmatpush1.msra.mxu0 0.0
    %3207 = vmatprep.subr.mxu0 0.0
    %3208 = vmatpush1.msra.mxu0 0.0
    %3209 = vmatprep.subr.mxu0 0.0
    %3210 = vmatpush1.msra.mxu0 0.0
    %3211 = vmatprep.subr.mxu0 0.0
    %3212 = vmatpush1.msra.mxu0 0.0
    %3213 = vmatprep.subr.mxu0 0.0
    %3214 = vmatpush1.msra.mxu0 0.0
    %3215 = vmatprep.subr.mxu0 0.0
    %3216 = vmatpush1.msra.mxu0 0.0
    %3217 = vmatprep.subr.mxu0 0.0
    %3218 = vmatpush1.msra.mxu0 0.0
    %3219 = vmatprep.subr.mxu0 0.0
    %3220 = vmatpush1.msra.mxu0 0.0
    %3221 = vmatprep.subr.mxu0 0.0
    %3222 = vmatpush1.msra.mxu0 0.0
    %3223 = vmatprep.subr.mxu0 0.0
    %3224 = vmatpush1.msra.mxu0 0.0
    %3225 = vmatprep.subr.mxu0 0.0
    %3226 = vmatpush1.msra.mxu0 0.0
    %3227 = vmatprep.subr.mxu0 0.0
    %3228 = vmatpush1.msra.mxu0 0.0
    %3229 = vmatprep.subr.mxu0 0.0
    %3230 = vmatpush1.msra.mxu0 0.0
    %3231 = vmatprep.subr.mxu0 0.0
    %3232 = vmatpush1.msra.mxu0 0.0
    %3233 = vmatprep.subr.mxu0 0.0
    %3234 = vmatpush1.msra.mxu0 0.0
    %3235 = vmatprep.subr.mxu0 0.0
    %3236 = vmatpush1.msra.mxu0 0.0
    %3237 = vmatprep.subr.mxu0 0.0
    %3238 = vmatpush1.msra.mxu0 0.0
    %3239 = vmatprep.mubr.f32.mxu0 0.0
    %v3240 = vand.u32 %v3074, 4294901760
    %3241 = vmatmul.mubr.f32.gmra.mrb[0].mxu0 %v3240
    %v3242 = vpop.f32.mrb[0].mxu0
    %v3243 = vadd.f32 %v3152, %v3242
    %v3244 = vpop.f32.mrb[0].mxu0
    %3245 = vdwg.mxu0
    %3246 = vmatprep.subr.mxu0 0.0
    %v3247 = vand.u32 %v58, 4294901760
    %v3248 = vsub.f32 %v58, %v3247
    %3249 = vmatpush1.msra.mxu0 %v3248
    %3250 = vmatprep.subr.mxu0 0.0
    %v3251 = vand.u32 %v59, 4294901760
    %v3252 = vsub.f32 %v59, %v3251
    %3253 = vmatpush1.msra.mxu0 %v3252
    %3254 = vmatprep.subr.mxu0 0.0
    %v3255 = vand.u32 %v60, 4294901760
    %v3256 = vsub.f32 %v60, %v3255
    %3257 = vmatpush1.msra.mxu0 %v3256
    %3258 = vmatprep.subr.mxu0 0.0
    %v3259 = vand.u32 %v61, 4294901760
    %v3260 = vsub.f32 %v61, %v3259
    %3261 = vmatpush1.msra.mxu0 %v3260
    %3262 = vmatprep.subr.mxu0 0.0
    %3263 = vmatpush1.msra.mxu0 0.0
    %3264 = vmatprep.subr.mxu0 0.0
    %3265 = vmatpush1.msra.mxu0 0.0
    %3266 = vmatprep.subr.mxu0 0.0
    %3267 = vmatpush1.msra.mxu0 0.0
    %3268 = vmatprep.subr.mxu0 0.0
    %3269 = vmatpush1.msra.mxu0 0.0
    %3270 = vmatprep.subr.mxu0 0.0
    %3271 = vmatpush1.msra.mxu0 0.0
    %3272 = vmatprep.subr.mxu0 0.0
    %3273 = vmatpush1.msra.mxu0 0.0
    %3274 = vmatprep.subr.mxu0 0.0
    %3275 = vmatpush1.msra.mxu0 0.0
    %3276 = vmatprep.subr.mxu0 0.0
    %3277 = vmatpush1.msra.mxu0 0.0
    %3278 = vmatprep.subr.mxu0 0.0
    %3279 = vmatpush1.msra.mxu0 0.0
    %3280 = vmatprep.subr.mxu0 0.0
    %3281 = vmatpush1.msra.mxu0 0.0
    %3282 = vmatprep.subr.mxu0 0.0
    %3283 = vmatpush1.msra.mxu0 0.0
    %3284 = vmatprep.subr.mxu0 0.0
    %3285 = vmatpush1.msra.mxu0 0.0
    %3286 = vmatprep.subr.mxu0 0.0
    %3287 = vmatpush1.msra.mxu0 0.0
    %3288 = vmatprep.subr.mxu0 0.0
    %3289 = vmatpush1.msra.mxu0 0.0
    %3290 = vmatprep.subr.mxu0 0.0
    %3291 = vmatpush1.msra.mxu0 0.0
    %3292 = vmatprep.subr.mxu0 0.0
    %3293 = vmatpush1.msra.mxu0 0.0
    %3294 = vmatprep.subr.mxu0 0.0
    %3295 = vmatpush1.msra.mxu0 0.0
    %3296 = vmatprep.subr.mxu0 0.0
    %3297 = vmatpush1.msra.mxu0 0.0
    %3298 = vmatprep.subr.mxu0 0.0
    %3299 = vmatpush1.msra.mxu0 0.0
    %3300 = vmatprep.subr.mxu0 0.0
    %3301 = vmatpush1.msra.mxu0 0.0
    %3302 = vmatprep.subr.mxu0 0.0
    %3303 = vmatpush1.msra.mxu0 0.0
    %3304 = vmatprep.subr.mxu0 0.0
    %3305 = vmatpush1.msra.mxu0 0.0
    %3306 = vmatprep.subr.mxu0 0.0
    %3307 = vmatpush1.msra.mxu0 0.0
    %3308 = vmatprep.subr.mxu0 0.0
    %3309 = vmatpush1.msra.mxu0 0.0
    %3310 = vmatprep.subr.mxu0 0.0
    %3311 = vmatpush1.msra.mxu0 0.0
    %3312 = vmatprep.subr.mxu0 0.0
    %3313 = vmatpush1.msra.mxu0 0.0
    %3314 = vmatprep.subr.mxu0 0.0
    %3315 = vmatpush1.msra.mxu0 0.0
    %3316 = vmatprep.subr.mxu0 0.0
    %3317 = vmatpush1.msra.mxu0 0.0
    %3318 = vmatprep.mubr.f32.mxu0 0.0
    %v3319 = vand.u32 %v3074, 4294901760
    %v3320 = vsub.f32 %v3074, %v3319
    %3321 = vmatmul.mubr.f32.gmra.mrb[0].mxu0 %v3320
    %v3322 = vpop.f32.mrb[0].mxu0
    %v3323 = vadd.f32 %v3243, %v3322
    %v3324 = vpop.f32.mrb[0].mxu0
    %3325 = vdwg.mxu0
    %3326 = vmatprep.subr.mxu0 0.0
    %v3327 = vand.u32 %v58, 4294901760
    %3328 = vmatpush1.msra.mxu0 %v3327
    %3329 = vmatprep.subr.mxu0 0.0
    %v3330 = vand.u32 %v59, 4294901760
    %3331 = vmatpush1.msra.mxu0 %v3330
    %3332 = vmatprep.subr.mxu0 0.0
    %v3333 = vand.u32 %v60, 4294901760
    %3334 = vmatpush1.msra.mxu0 %v3333
    %3335 = vmatprep.subr.mxu0 0.0
    %v3336 = vand.u32 %v61, 4294901760
    %3337 = vmatpush1.msra.mxu0 %v3336
    %3338 = vmatprep.subr.mxu0 0.0
    %3339 = vmatpush1.msra.mxu0 0.0
    %3340 = vmatprep.subr.mxu0 0.0
    %3341 = vmatpush1.msra.mxu0 0.0
    %3342 = vmatprep.subr.mxu0 0.0
    %3343 = vmatpush1.msra.mxu0 0.0
    %3344 = vmatprep.subr.mxu0 0.0
    %3345 = vmatpush1.msra.mxu0 0.0
    %3346 = vmatprep.subr.mxu0 0.0
    %3347 = vmatpush1.msra.mxu0 0.0
    %3348 = vmatprep.subr.mxu0 0.0
    %3349 = vmatpush1.msra.mxu0 0.0
    %3350 = vmatprep.subr.mxu0 0.0
    %3351 = vmatpush1.msra.mxu0 0.0
    %3352 = vmatprep.subr.mxu0 0.0
    %3353 = vmatpush1.msra.mxu0 0.0
    %3354 = vmatprep.subr.mxu0 0.0
    %3355 = vmatpush1.msra.mxu0 0.0
    %3356 = vmatprep.subr.mxu0 0.0
    %3357 = vmatpush1.msra.mxu0 0.0
    %3358 = vmatprep.subr.mxu0 0.0
    %3359 = vmatpush1.msra.mxu0 0.0
    %3360 = vmatprep.subr.mxu0 0.0
    %3361 = vmatpush1.msra.mxu0 0.0
    %3362 = vmatprep.subr.mxu0 0.0
    %3363 = vmatpush1.msra.mxu0 0.0
    %3364 = vmatprep.subr.mxu0 0.0
    %3365 = vmatpush1.msra.mxu0 0.0
    %3366 = vmatprep.subr.mxu0 0.0
    %3367 = vmatpush1.msra.mxu0 0.0
    %3368 = vmatprep.subr.mxu0 0.0
    %3369 = vmatpush1.msra.mxu0 0.0
    %3370 = vmatprep.subr.mxu0 0.0
    %3371 = vmatpush1.msra.mxu0 0.0
    %3372 = vmatprep.subr.mxu0 0.0
    %3373 = vmatpush1.msra.mxu0 0.0
    %3374 = vmatprep.subr.mxu0 0.0
    %3375 = vmatpush1.msra.mxu0 0.0
    %3376 = vmatprep.subr.mxu0 0.0
    %3377 = vmatpush1.msra.mxu0 0.0
    %3378 = vmatprep.subr.mxu0 0.0
    %3379 = vmatpush1.msra.mxu0 0.0
    %3380 = vmatprep.subr.mxu0 0.0
    %3381 = vmatpush1.msra.mxu0 0.0
    %3382 = vmatprep.subr.mxu0 0.0
    %3383 = vmatpush1.msra.mxu0 0.0
    %3384 = vmatprep.subr.mxu0 0.0
    %3385 = vmatpush1.msra.mxu0 0.0
    %3386 = vmatprep.subr.mxu0 0.0
    %3387 = vmatpush1.msra.mxu0 0.0
    %3388 = vmatprep.subr.mxu0 0.0
    %3389 = vmatpush1.msra.mxu0 0.0
    %3390 = vmatprep.subr.mxu0 0.0
    %3391 = vmatpush1.msra.mxu0 0.0
    %3392 = vmatprep.subr.mxu0 0.0
    %3393 = vmatpush1.msra.mxu0 0.0
    %3394 = vmatprep.mubr.f32.mxu0 0.0
    %v3395 = vand.u32 %v3074, 4294901760
    %v3396 = vsub.f32 %v3074, %v3395
    %v3397 = vand.u32 %v3396, 4294901760
    %3398 = vmatmul.mubr.f32.gmra.mrb[0].mxu0 %v3397
    %v3399 = vpop.f32.mrb[0].mxu0
    %v3400 = vadd.f32 %v3323, %v3399
    %v3401 = vpop.f32.mrb[0].mxu0
    %3402 = vdwg.mxu0
    %3403 = vmatprep.subr.mxu0 0.0
    %v3404 = vand.u32 %v58, 4294901760
    %v3405 = vsub.f32 %v58, %v3404
    %v3406 = vand.u32 %v3405, 4294901760
    %3407 = vmatpush1.msra.mxu0 %v3406
    %3408 = vmatprep.subr.mxu0 0.0
    %v3409 = vand.u32 %v59, 4294901760
    %v3410 = vsub.f32 %v59, %v3409
    %v3411 = vand.u32 %v3410, 4294901760
    %3412 = vmatpush1.msra.mxu0 %v3411
    %3413 = vmatprep.subr.mxu0 0.0
    %v3414 = vand.u32 %v60, 4294901760
    %v3415 = vsub.f32 %v60, %v3414
    %v3416 = vand.u32 %v3415, 4294901760
    %3417 = vmatpush1.msra.mxu0 %v3416
    %3418 = vmatprep.subr.mxu0 0.0
    %v3419 = vand.u32 %v61, 4294901760
    %v3420 = vsub.f32 %v61, %v3419
    %v3421 = vand.u32 %v3420, 4294901760
    %3422 = vmatpush1.msra.mxu0 %v3421
    %3423 = vmatprep.subr.mxu0 0.0
    %3424 = vmatpush1.msra.mxu0 0.0
    %3425 = vmatprep.subr.mxu0 0.0
    %3426 = vmatpush1.msra.mxu0 0.0
    %3427 = vmatprep.subr.mxu0 0.0
    %3428 = vmatpush1.msra.mxu0 0.0
    %3429 = vmatprep.subr.mxu0 0.0
    %3430 = vmatpush1.msra.mxu0 0.0
    %3431 = vmatprep.subr.mxu0 0.0
    %3432 = vmatpush1.msra.mxu0 0.0
    %3433 = vmatprep.subr.mxu0 0.0
    %3434 = vmatpush1.msra.mxu0 0.0
    %3435 = vmatprep.subr.mxu0 0.0
    %3436 = vmatpush1.msra.mxu0 0.0
    %3437 = vmatprep.subr.mxu0 0.0
    %3438 = vmatpush1.msra.mxu0 0.0
    %3439 = vmatprep.subr.mxu0 0.0
    %3440 = vmatpush1.msra.mxu0 0.0
    %3441 = vmatprep.subr.mxu0 0.0
    %3442 = vmatpush1.msra.mxu0 0.0
    %3443 = vmatprep.subr.mxu0 0.0
    %3444 = vmatpush1.msra.mxu0 0.0
    %3445 = vmatprep.subr.mxu0 0.0
    %3446 = vmatpush1.msra.mxu0 0.0
    %3447 = vmatprep.subr.mxu0 0.0
    %3448 = vmatpush1.msra.mxu0 0.0
    %3449 = vmatprep.subr.mxu0 0.0
    %3450 = vmatpush1.msra.mxu0 0.0
    %3451 = vmatprep.subr.mxu0 0.0
    %3452 = vmatpush1.msra.mxu0 0.0
    %3453 = vmatprep.subr.mxu0 0.0
    %3454 = vmatpush1.msra.mxu0 0.0
    %3455 = vmatprep.subr.mxu0 0.0
    %3456 = vmatpush1.msra.mxu0 0.0
    %3457 = vmatprep.subr.mxu0 0.0
    %3458 = vmatpush1.msra.mxu0 0.0
    %3459 = vmatprep.subr.mxu0 0.0
    %3460 = vmatpush1.msra.mxu0 0.0
    %3461 = vmatprep.subr.mxu0 0.0
    %3462 = vmatpush1.msra.mxu0 0.0
    %3463 = vmatprep.subr.mxu0 0.0
    %3464 = vmatpush1.msra.mxu0 0.0
    %3465 = vmatprep.subr.mxu0 0.0
    %3466 = vmatpush1.msra.mxu0 0.0
    %3467 = vmatprep.subr.mxu0 0.0
    %3468 = vmatpush1.msra.mxu0 0.0
    %3469 = vmatprep.subr.mxu0 0.0
    %3470 = vmatpush1.msra.mxu0 0.0
    %3471 = vmatprep.subr.mxu0 0.0
    %3472 = vmatpush1.msra.mxu0 0.0
    %3473 = vmatprep.subr.mxu0 0.0
    %3474 = vmatpush1.msra.mxu0 0.0
    %3475 = vmatprep.subr.mxu0 0.0
    %3476 = vmatpush1.msra.mxu0 0.0
    %3477 = vmatprep.subr.mxu0 0.0
    %3478 = vmatpush1.msra.mxu0 0.0
    %3479 = vmatprep.mubr.f32.mxu0 0.0
    %v3480 = vand.u32 %v3074, 4294901760
    %3481 = vmatmul.mubr.f32.gmra.mrb[0].mxu0 %v3480
    %v3482 = vpop.f32.mrb[0].mxu0
    %v3483 = vadd.f32 %v3400, %v3482
    %v3484 = vpop.f32.mrb[0].mxu0
    %3485 = vdwg.mxu0
    %3486 = vmatprep.subr.mxu0 0.0
    %v3487 = vand.u32 %v58, 4294901760
    %3488 = vmatpush1.msra.mxu0 %v3487
    %3489 = vmatprep.subr.mxu0 0.0
    %v3490 = vand.u32 %v59, 4294901760
    %3491 = vmatpush1.msra.mxu0 %v3490
    %3492 = vmatprep.subr.mxu0 0.0
    %v3493 = vand.u32 %v60, 4294901760
    %3494 = vmatpush1.msra.mxu0 %v3493
    %3495 = vmatprep.subr.mxu0 0.0
    %v3496 = vand.u32 %v61, 4294901760
    %3497 = vmatpush1.msra.mxu0 %v3496
    %3498 = vmatprep.subr.mxu0 0.0
    %3499 = vmatpush1.msra.mxu0 0.0
    %3500 = vmatprep.subr.mxu0 0.0
    %3501 = vmatpush1.msra.mxu0 0.0
    %3502 = vmatprep.subr.mxu0 0.0
    %3503 = vmatpush1.msra.mxu0 0.0
    %3504 = vmatprep.subr.mxu0 0.0
    %3505 = vmatpush1.msra.mxu0 0.0
    %3506 = vmatprep.subr.mxu0 0.0
    %3507 = vmatpush1.msra.mxu0 0.0
    %3508 = vmatprep.subr.mxu0 0.0
    %3509 = vmatpush1.msra.mxu0 0.0
    %3510 = vmatprep.subr.mxu0 0.0
    %3511 = vmatpush1.msra.mxu0 0.0
    %3512 = vmatprep.subr.mxu0 0.0
    %3513 = vmatpush1.msra.mxu0 0.0
    %3514 = vmatprep.subr.mxu0 0.0
    %3515 = vmatpush1.msra.mxu0 0.0
    %3516 = vmatprep.subr.mxu0 0.0
    %3517 = vmatpush1.msra.mxu0 0.0
    %3518 = vmatprep.subr.mxu0 0.0
    %3519 = vmatpush1.msra.mxu0 0.0
    %3520 = vmatprep.subr.mxu0 0.0
    %3521 = vmatpush1.msra.mxu0 0.0
    %3522 = vmatprep.subr.mxu0 0.0
    %3523 = vmatpush1.msra.mxu0 0.0
    %3524 = vmatprep.subr.mxu0 0.0
    %3525 = vmatpush1.msra.mxu0 0.0
    %3526 = vmatprep.subr.mxu0 0.0
    %3527 = vmatpush1.msra.mxu0 0.0
    %3528 = vmatprep.subr.mxu0 0.0
    %3529 = vmatpush1.msra.mxu0 0.0
    %3530 = vmatprep.subr.mxu0 0.0
    %3531 = vmatpush1.msra.mxu0 0.0
    %3532 = vmatprep.subr.mxu0 0.0
    %3533 = vmatpush1.msra.mxu0 0.0
    %3534 = vmatprep.subr.mxu0 0.0
    %3535 = vmatpush1.msra.mxu0 0.0
    %3536 = vmatprep.subr.mxu0 0.0
    %3537 = vmatpush1.msra.mxu0 0.0
    %3538 = vmatprep.subr.mxu0 0.0
    %3539 = vmatpush1.msra.mxu0 0.0
    %3540 = vmatprep.subr.mxu0 0.0
    %3541 = vmatpush1.msra.mxu0 0.0
    %3542 = vmatprep.subr.mxu0 0.0
    %3543 = vmatpush1.msra.mxu0 0.0
    %3544 = vmatprep.subr.mxu0 0.0
    %3545 = vmatpush1.msra.mxu0 0.0
    %3546 = vmatprep.subr.mxu0 0.0
    %3547 = vmatpush1.msra.mxu0 0.0
    %3548 = vmatprep.subr.mxu0 0.0
    %3549 = vmatpush1.msra.mxu0 0.0
    %3550 = vmatprep.subr.mxu0 0.0
    %3551 = vmatpush1.msra.mxu0 0.0
    %3552 = vmatprep.subr.mxu0 0.0
    %3553 = vmatpush1.msra.mxu0 0.0
    %3554 = vmatprep.mubr.f32.mxu0 0.0
    %v3555 = vand.u32 %v3074, 4294901760
    %3556 = vmatmul.mubr.f32.gmra.mrb[0].mxu0 %v3555
    %v3557 = vpop.f32.mrb[0].mxu0
    %v3558 = vadd.f32 %v3483, %v3557
    %v3559 = vpop.f32.mrb[0].mxu0
    %3560 = vdwg.mxu0
    %3562 = vrot.lane.b32.xlu0 %v3558, 96
    %v3563 = vpop.permute.xlu0 %3562
    %s3565 = scalar_lea.vmem %s4, 48
    %3566 = vst.msk [vmem:[%s3565] sm:$0xff] %vm558, %v3563
    %v3567 = vmul.f32 %v560, %v3070
    %v3568 = vadd.f32 %v3567, %v3558
    %s3569 = scalar_lea.vmem [#allocation5], 56
    %v3570 = vld [vmem:[%s3569] sm:$0xff]
    %v3571 = vadd.f32 %v3568, %v3570
    %v3572 = vtanh.pop %v3571
    %v3573 = vmax.f32 %v3572, 0.0
    %v3575 = vsel %vm65, %v3573, 0
    %3577 = vmatprep.subr.mxu0 0.0
    %v3578 = vand.u32 %v58, 4294901760
    %3579 = vmatpush1.msra.mxu0 %v3578
    %3580 = vmatprep.subr.mxu0 0.0
    %v3581 = vand.u32 %v59, 4294901760
    %3582 = vmatpush1.msra.mxu0 %v3581
    %3583 = vmatprep.subr.mxu0 0.0
    %v3584 = vand.u32 %v60, 4294901760
    %3585 = vmatpush1.msra.mxu0 %v3584
    %3586 = vmatprep.subr.mxu0 0.0
    %v3587 = vand.u32 %v61, 4294901760
    %3588 = vmatpush1.msra.mxu0 %v3587
    %3589 = vmatprep.subr.mxu0 0.0
    %3590 = vmatpush1.msra.mxu0 0.0
    %3591 = vmatprep.subr.mxu0 0.0
    %3592 = vmatpush1.msra.mxu0 0.0
    %3593 = vmatprep.subr.mxu0 0.0
    %3594 = vmatpush1.msra.mxu0 0.0
    %3595 = vmatprep.subr.mxu0 0.0
    %3596 = vmatpush1.msra.mxu0 0.0
    %3597 = vmatprep.subr.mxu0 0.0
    %3598 = vmatpush1.msra.mxu0 0.0
    %3599 = vmatprep.subr.mxu0 0.0
    %3600 = vmatpush1.msra.mxu0 0.0
    %3601 = vmatprep.subr.mxu0 0.0
    %3602 = vmatpush1.msra.mxu0 0.0
    %3603 = vmatprep.subr.mxu0 0.0
    %3604 = vmatpush1.msra.mxu0 0.0
    %3605 = vmatprep.subr.mxu0 0.0
    %3606 = vmatpush1.msra.mxu0 0.0
    %3607 = vmatprep.subr.mxu0 0.0
    %3608 = vmatpush1.msra.mxu0 0.0
    %3609 = vmatprep.subr.mxu0 0.0
    %3610 = vmatpush1.msra.mxu0 0.0
    %3611 = vmatprep.subr.mxu0 0.0
    %3612 = vmatpush1.msra.mxu0 0.0
    %3613 = vmatprep.subr.mxu0 0.0
    %3614 = vmatpush1.msra.mxu0 0.0
    %3615 = vmatprep.subr.mxu0 0.0
    %3616 = vmatpush1.msra.mxu0 0.0
    %3617 = vmatprep.subr.mxu0 0.0
    %3618 = vmatpush1.msra.mxu0 0.0
    %3619 = vmatprep.subr.mxu0 0.0
    %3620 = vmatpush1.msra.mxu0 0.0
    %3621 = vmatprep.subr.mxu0 0.0
    %3622 = vmatpush1.msra.mxu0 0.0
    %3623 = vmatprep.subr.mxu0 0.0
    %3624 = vmatpush1.msra.mxu0 0.0
    %3625 = vmatprep.subr.mxu0 0.0
    %3626 = vmatpush1.msra.mxu0 0.0
    %3627 = vmatprep.subr.mxu0 0.0
    %3628 = vmatpush1.msra.mxu0 0.0
    %3629 = vmatprep.subr.mxu0 0.0
    %3630 = vmatpush1.msra.mxu0 0.0
    %3631 = vmatprep.subr.mxu0 0.0
    %3632 = vmatpush1.msra.mxu0 0.0
    %3633 = vmatprep.subr.mxu0 0.0
    %3634 = vmatpush1.msra.mxu0 0.0
    %3635 = vmatprep.subr.mxu0 0.0
    %3636 = vmatpush1.msra.mxu0 0.0
    %3637 = vmatprep.subr.mxu0 0.0
    %3638 = vmatpush1.msra.mxu0 0.0
    %3639 = vmatprep.subr.mxu0 0.0
    %3640 = vmatpush1.msra.mxu0 0.0
    %3641 = vmatprep.subr.mxu0 0.0
    %3642 = vmatpush1.msra.mxu0 0.0
    %3643 = vmatprep.subr.mxu0 0.0
    %3644 = vmatpush1.msra.mxu0 0.0
    %3645 = vmatprep.mubr.f32.mxu0 0.0
    %v3646 = vand.u32 %v3575, 4294901760
    %v3647 = vsub.f32 %v3575, %v3646
    %v3648 = vand.u32 %v3647, 4294901760
    %v3649 = vsub.f32 %v3647, %v3648
    %v3650 = vand.u32 %v3649, 4294901760
    %3651 = vmatmul.mubr.f32.gmra.mrb[0].mxu0 %v3650
    %v3652 = vpop.f32.mrb[0].mxu0
    %v3653 = vadd.f32 0.0, %v3652
    %v3654 = vpop.f32.mrb[0].mxu0
    %3655 = vdwg.mxu0
    %3656 = vmatprep.subr.mxu0 0.0
    %v3657 = vand.u32 %v58, 4294901760
    %v3658 = vsub.f32 %v58, %v3657
    %v3659 = vand.u32 %v3658, 4294901760
    %v3660 = vsub.f32 %v3658, %v3659
    %v3661 = vand.u32 %v3660, 4294901760
    %3662 = vmatpush1.msra.mxu0 %v3661
    %3663 = vmatprep.subr.mxu0 0.0
    %v3664 = vand.u32 %v59, 4294901760
    %v3665 = vsub.f32 %v59, %v3664
    %v3666 = vand.u32 %v3665, 4294901760
    %v3667 = vsub.f32 %v3665, %v3666
    %v3668 = vand.u32 %v3667, 4294901760
    %3669 = vmatpush1.msra.mxu0 %v3668
    %3670 = vmatprep.subr.mxu0 0.0
    %v3671 = vand.u32 %v60, 4294901760
    %v3672 = vsub.f32 %v60, %v3671
    %v3673 = vand.u32 %v3672, 4294901760
    %v3674 = vsub.f32 %v3672, %v3673
    %v3675 = vand.u32 %v3674, 4294901760
    %3676 = vmatpush1.msra.mxu0 %v3675
    %3677 = vmatprep.subr.mxu0 0.0
    %v3678 = vand.u32 %v61, 4294901760
    %v3679 = vsub.f32 %v61, %v3678
    %v3680 = vand.u32 %v3679, 4294901760
    %v3681 = vsub.f32 %v3679, %v3680
    %v3682 = vand.u32 %v3681, 4294901760
    %3683 = vmatpush1.msra.mxu0 %v3682
    %3684 = vmatprep.subr.mxu0 0.0
    %3685 = vmatpush1.msra.mxu0 0.0
    %3686 = vmatprep.subr.mxu0 0.0
    %3687 = vmatpush1.msra.mxu0 0.0
    %3688 = vmatprep.subr.mxu0 0.0
    %3689 = vmatpush1.msra.mxu0 0.0
    %3690 = vmatprep.subr.mxu0 0.0
    %3691 = vmatpush1.msra.mxu0 0.0
    %3692 = vmatprep.subr.mxu0 0.0
    %3693 = vmatpush1.msra.mxu0 0.0
    %3694 = vmatprep.subr.mxu0 0.0
    %3695 = vmatpush1.msra.mxu0 0.0
    %3696 = vmatprep.subr.mxu0 0.0
    %3697 = vmatpush1.msra.mxu0 0.0
    %3698 = vmatprep.subr.mxu0 0.0
    %3699 = vmatpush1.msra.mxu0 0.0
    %3700 = vmatprep.subr.mxu0 0.0
    %3701 = vmatpush1.msra.mxu0 0.0
    %3702 = vmatprep.subr.mxu0 0.0
    %3703 = vmatpush1.msra.mxu0 0.0
    %3704 = vmatprep.subr.mxu0 0.0
    %3705 = vmatpush1.msra.mxu0 0.0
    %3706 = vmatprep.subr.mxu0 0.0
    %3707 = vmatpush1.msra.mxu0 0.0
    %3708 = vmatprep.subr.mxu0 0.0
    %3709 = vmatpush1.msra.mxu0 0.0
    %3710 = vmatprep.subr.mxu0 0.0
    %3711 = vmatpush1.msra.mxu0 0.0
    %3712 = vmatprep.subr.mxu0 0.0
    %3713 = vmatpush1.msra.mxu0 0.0
    %3714 = vmatprep.subr.mxu0 0.0
    %3715 = vmatpush1.msra.mxu0 0.0
    %3716 = vmatprep.subr.mxu0 0.0
    %3717 = vmatpush1.msra.mxu0 0.0
    %3718 = vmatprep.subr.mxu0 0.0
    %3719 = vmatpush1.msra.mxu0 0.0
    %3720 = vmatprep.subr.mxu0 0.0
    %3721 = vmatpush1.msra.mxu0 0.0
    %3722 = vmatprep.subr.mxu0 0.0
    %3723 = vmatpush1.msra.mxu0 0.0
    %3724 = vmatprep.subr.mxu0 0.0
    %3725 = vmatpush1.msra.mxu0 0.0
    %3726 = vmatprep.subr.mxu0 0.0
    %3727 = vmatpush1.msra.mxu0 0.0
    %3728 = vmatprep.subr.mxu0 0.0
    %3729 = vmatpush1.msra.mxu0 0.0
    %3730 = vmatprep.subr.mxu0 0.0
    %3731 = vmatpush1.msra.mxu0 0.0
    %3732 = vmatprep.subr.mxu0 0.0
    %3733 = vmatpush1.msra.mxu0 0.0
    %3734 = vmatprep.subr.mxu0 0.0
    %3735 = vmatpush1.msra.mxu0 0.0
    %3736 = vmatprep.subr.mxu0 0.0
    %3737 = vmatpush1.msra.mxu0 0.0
    %3738 = vmatprep.subr.mxu0 0.0
    %3739 = vmatpush1.msra.mxu0 0.0
    %3740 = vmatprep.mubr.f32.mxu0 0.0
    %v3741 = vand.u32 %v3575, 4294901760
    %3742 = vmatmul.mubr.f32.gmra.mrb[0].mxu0 %v3741
    %v3743 = vpop.f32.mrb[0].mxu0
    %v3744 = vadd.f32 %v3653, %v3743
    %v3745 = vpop.f32.mrb[0].mxu0
    %3746 = vdwg.mxu0
    %3747 = vmatprep.subr.mxu0 0.0
    %v3748 = vand.u32 %v58, 4294901760
    %v3749 = vsub.f32 %v58, %v3748
    %3750 = vmatpush1.msra.mxu0 %v3749
    %3751 = vmatprep.subr.mxu0 0.0
    %v3752 = vand.u32 %v59, 4294901760
    %v3753 = vsub.f32 %v59, %v3752
    %3754 = vmatpush1.msra.mxu0 %v3753
    %3755 = vmatprep.subr.mxu0 0.0
    %v3756 = vand.u32 %v60, 4294901760
    %v3757 = vsub.f32 %v60, %v3756
    %3758 = vmatpush1.msra.mxu0 %v3757
    %3759 = vmatprep.subr.mxu0 0.0
    %v3760 = vand.u32 %v61, 4294901760
    %v3761 = vsub.f32 %v61, %v3760
    %3762 = vmatpush1.msra.mxu0 %v3761
    %3763 = vmatprep.subr.mxu0 0.0
    %3764 = vmatpush1.msra.mxu0 0.0
    %3765 = vmatprep.subr.mxu0 0.0
    %3766 = vmatpush1.msra.mxu0 0.0
    %3767 = vmatprep.subr.mxu0 0.0
    %3768 = vmatpush1.msra.mxu0 0.0
    %3769 = vmatprep.subr.mxu0 0.0
    %3770 = vmatpush1.msra.mxu0 0.0
    %3771 = vmatprep.subr.mxu0 0.0
    %3772 = vmatpush1.msra.mxu0 0.0
    %3773 = vmatprep.subr.mxu0 0.0
    %3774 = vmatpush1.msra.mxu0 0.0
    %3775 = vmatprep.subr.mxu0 0.0
    %3776 = vmatpush1.msra.mxu0 0.0
    %3777 = vmatprep.subr.mxu0 0.0
    %3778 = vmatpush1.msra.mxu0 0.0
    %3779 = vmatprep.subr.mxu0 0.0
    %3780 = vmatpush1.msra.mxu0 0.0
    %3781 = vmatprep.subr.mxu0 0.0
    %3782 = vmatpush1.msra.mxu0 0.0
    %3783 = vmatprep.subr.mxu0 0.0
    %3784 = vmatpush1.msra.mxu0 0.0
    %3785 = vmatprep.subr.mxu0 0.0
    %3786 = vmatpush1.msra.mxu0 0.0
    %3787 = vmatprep.subr.mxu0 0.0
    %3788 = vmatpush1.msra.mxu0 0.0
    %3789 = vmatprep.subr.mxu0 0.0
    %3790 = vmatpush1.msra.mxu0 0.0
    %3791 = vmatprep.subr.mxu0 0.0
    %3792 = vmatpush1.msra.mxu0 0.0
    %3793 = vmatprep.subr.mxu0 0.0
    %3794 = vmatpush1.msra.mxu0 0.0
    %3795 = vmatprep.subr.mxu0 0.0
    %3796 = vmatpush1.msra.mxu0 0.0
    %3797 = vmatprep.subr.mxu0 0.0
    %3798 = vmatpush1.msra.mxu0 0.0
    %3799 = vmatprep.subr.mxu0 0.0
    %3800 = vmatpush1.msra.mxu0 0.0
    %3801 = vmatprep.subr.mxu0 0.0
    %3802 = vmatpush1.msra.mxu0 0.0
    %3803 = vmatprep.subr.mxu0 0.0
    %3804 = vmatpush1.msra.mxu0 0.0
    %3805 = vmatprep.subr.mxu0 0.0
    %3806 = vmatpush1.msra.mxu0 0.0
    %3807 = vmatprep.subr.mxu0 0.0
    %3808 = vmatpush1.msra.mxu0 0.0
    %3809 = vmatprep.subr.mxu0 0.0
    %3810 = vmatpush1.msra.mxu0 0.0
    %3811 = vmatprep.subr.mxu0 0.0
    %3812 = vmatpush1.msra.mxu0 0.0
    %3813 = vmatprep.subr.mxu0 0.0
    %3814 = vmatpush1.msra.mxu0 0.0
    %3815 = vmatprep.subr.mxu0 0.0
    %3816 = vmatpush1.msra.mxu0 0.0
    %3817 = vmatprep.subr.mxu0 0.0
    %3818 = vmatpush1.msra.mxu0 0.0
    %3819 = vmatprep.mubr.f32.mxu0 0.0
    %v3820 = vand.u32 %v3575, 4294901760
    %v3821 = vsub.f32 %v3575, %v3820
    %3822 = vmatmul.mubr.f32.gmra.mrb[0].mxu0 %v3821
    %v3823 = vpop.f32.mrb[0].mxu0
    %v3824 = vadd.f32 %v3744, %v3823
    %v3825 = vpop.f32.mrb[0].mxu0
    %3826 = vdwg.mxu0
    %3827 = vmatprep.subr.mxu0 0.0
    %v3828 = vand.u32 %v58, 4294901760
    %3829 = vmatpush1.msra.mxu0 %v3828
    %3830 = vmatprep.subr.mxu0 0.0
    %v3831 = vand.u32 %v59, 4294901760
    %3832 = vmatpush1.msra.mxu0 %v3831
    %3833 = vmatprep.subr.mxu0 0.0
    %v3834 = vand.u32 %v60, 4294901760
    %3835 = vmatpush1.msra.mxu0 %v3834
    %3836 = vmatprep.subr.mxu0 0.0
    %v3837 = vand.u32 %v61, 4294901760
    %3838 = vmatpush1.msra.mxu0 %v3837
    %3839 = vmatprep.subr.mxu0 0.0
    %3840 = vmatpush1.msra.mxu0 0.0
    %3841 = vmatprep.subr.mxu0 0.0
    %3842 = vmatpush1.msra.mxu0 0.0
    %3843 = vmatprep.subr.mxu0 0.0
    %3844 = vmatpush1.msra.mxu0 0.0
    %3845 = vmatprep.subr.mxu0 0.0
    %3846 = vmatpush1.msra.mxu0 0.0
    %3847 = vmatprep.subr.mxu0 0.0
    %3848 = vmatpush1.msra.mxu0 0.0
    %3849 = vmatprep.subr.mxu0 0.0
    %3850 = vmatpush1.msra.mxu0 0.0
    %3851 = vmatprep.subr.mxu0 0.0
    %3852 = vmatpush1.msra.mxu0 0.0
    %3853 = vmatprep.subr.mxu0 0.0
    %3854 = vmatpush1.msra.mxu0 0.0
    %3855 = vmatprep.subr.mxu0 0.0
    %3856 = vmatpush1.msra.mxu0 0.0
    %3857 = vmatprep.subr.mxu0 0.0
    %3858 = vmatpush1.msra.mxu0 0.0
    %3859 = vmatprep.subr.mxu0 0.0
    %3860 = vmatpush1.msra.mxu0 0.0
    %3861 = vmatprep.subr.mxu0 0.0
    %3862 = vmatpush1.msra.mxu0 0.0
    %3863 = vmatprep.subr.mxu0 0.0
    %3864 = vmatpush1.msra.mxu0 0.0
    %3865 = vmatprep.subr.mxu0 0.0
    %3866 = vmatpush1.msra.mxu0 0.0
    %3867 = vmatprep.subr.mxu0 0.0
    %3868 = vmatpush1.msra.mxu0 0.0
    %3869 = vmatprep.subr.mxu0 0.0
    %3870 = vmatpush1.msra.mxu0 0.0
    %3871 = vmatprep.subr.mxu0 0.0
    %3872 = vmatpush1.msra.mxu0 0.0
    %3873 = vmatprep.subr.mxu0 0.0
    %3874 = vmatpush1.msra.mxu0 0.0
    %3875 = vmatprep.subr.mxu0 0.0
    %3876 = vmatpush1.msra.mxu0 0.0
    %3877 = vmatprep.subr.mxu0 0.0
    %3878 = vmatpush1.msra.mxu0 0.0
    %3879 = vmatprep.subr.mxu0 0.0
    %3880 = vmatpush1.msra.mxu0 0.0
    %3881 = vmatprep.subr.mxu0 0.0
    %3882 = vmatpush1.msra.mxu0 0.0
    %3883 = vmatprep.subr.mxu0 0.0
    %3884 = vmatpush1.msra.mxu0 0.0
    %3885 = vmatprep.subr.mxu0 0.0
    %3886 = vmatpush1.msra.mxu0 0.0
    %3887 = vmatprep.subr.mxu0 0.0
    %3888 = vmatpush1.msra.mxu0 0.0
    %3889 = vmatprep.subr.mxu0 0.0
    %3890 = vmatpush1.msra.mxu0 0.0
    %3891 = vmatprep.subr.mxu0 0.0
    %3892 = vmatpush1.msra.mxu0 0.0
    %3893 = vmatprep.subr.mxu0 0.0
    %3894 = vmatpush1.msra.mxu0 0.0
    %3895 = vmatprep.mubr.f32.mxu0 0.0
    %v3896 = vand.u32 %v3575, 4294901760
    %v3897 = vsub.f32 %v3575, %v3896
    %v3898 = vand.u32 %v3897, 4294901760
    %3899 = vmatmul.mubr.f32.gmra.mrb[0].mxu0 %v3898
    %v3900 = vpop.f32.mrb[0].mxu0
    %v3901 = vadd.f32 %v3824, %v3900
    %v3902 = vpop.f32.mrb[0].mxu0
    %3903 = vdwg.mxu0
    %3904 = vmatprep.subr.mxu0 0.0
    %v3905 = vand.u32 %v58, 4294901760
    %v3906 = vsub.f32 %v58, %v3905
    %v3907 = vand.u32 %v3906, 4294901760
    %3908 = vmatpush1.msra.mxu0 %v3907
    %3909 = vmatprep.subr.mxu0 0.0
    %v3910 = vand.u32 %v59, 4294901760
    %v3911 = vsub.f32 %v59, %v3910
    %v3912 = vand.u32 %v3911, 4294901760
    %3913 = vmatpush1.msra.mxu0 %v3912
    %3914 = vmatprep.subr.mxu0 0.0
    %v3915 = vand.u32 %v60, 4294901760
    %v3916 = vsub.f32 %v60, %v3915
    %v3917 = vand.u32 %v3916, 4294901760
    %3918 = vmatpush1.msra.mxu0 %v3917
    %3919 = vmatprep.subr.mxu0 0.0
    %v3920 = vand.u32 %v61, 4294901760
    %v3921 = vsub.f32 %v61, %v3920
    %v3922 = vand.u32 %v3921, 4294901760
    %3923 = vmatpush1.msra.mxu0 %v3922
    %3924 = vmatprep.subr.mxu0 0.0
    %3925 = vmatpush1.msra.mxu0 0.0
    %3926 = vmatprep.subr.mxu0 0.0
    %3927 = vmatpush1.msra.mxu0 0.0
    %3928 = vmatprep.subr.mxu0 0.0
    %3929 = vmatpush1.msra.mxu0 0.0
    %3930 = vmatprep.subr.mxu0 0.0
    %3931 = vmatpush1.msra.mxu0 0.0
    %3932 = vmatprep.subr.mxu0 0.0
    %3933 = vmatpush1.msra.mxu0 0.0
    %3934 = vmatprep.subr.mxu0 0.0
    %3935 = vmatpush1.msra.mxu0 0.0
    %3936 = vmatprep.subr.mxu0 0.0
    %3937 = vmatpush1.msra.mxu0 0.0
    %3938 = vmatprep.subr.mxu0 0.0
    %3939 = vmatpush1.msra.mxu0 0.0
    %3940 = vmatprep.subr.mxu0 0.0
    %3941 = vmatpush1.msra.mxu0 0.0
    %3942 = vmatprep.subr.mxu0 0.0
    %3943 = vmatpush1.msra.mxu0 0.0
    %3944 = vmatprep.subr.mxu0 0.0
    %3945 = vmatpush1.msra.mxu0 0.0
    %3946 = vmatprep.subr.mxu0 0.0
    %3947 = vmatpush1.msra.mxu0 0.0
    %3948 = vmatprep.subr.mxu0 0.0
    %3949 = vmatpush1.msra.mxu0 0.0
    %3950 = vmatprep.subr.mxu0 0.0
    %3951 = vmatpush1.msra.mxu0 0.0
    %3952 = vmatprep.subr.mxu0 0.0
    %3953 = vmatpush1.msra.mxu0 0.0
    %3954 = vmatprep.subr.mxu0 0.0
    %3955 = vmatpush1.msra.mxu0 0.0
    %3956 = vmatprep.subr.mxu0 0.0
    %3957 = vmatpush1.msra.mxu0 0.0
    %3958 = vmatprep.subr.mxu0 0.0
    %3959 = vmatpush1.msra.mxu0 0.0
    %3960 = vmatprep.subr.mxu0 0.0
    %3961 = vmatpush1.msra.mxu0 0.0
    %3962 = vmatprep.subr.mxu0 0.0
    %3963 = vmatpush1.msra.mxu0 0.0
    %3964 = vmatprep.subr.mxu0 0.0
    %3965 = vmatpush1.msra.mxu0 0.0
    %3966 = vmatprep.subr.mxu0 0.0
    %3967 = vmatpush1.msra.mxu0 0.0
    %3968 = vmatprep.subr.mxu0 0.0
    %3969 = vmatpush1.msra.mxu0 0.0
    %3970 = vmatprep.subr.mxu0 0.0
    %3971 = vmatpush1.msra.mxu0 0.0
    %3972 = vmatprep.subr.mxu0 0.0
    %3973 = vmatpush1.msra.mxu0 0.0
    %3974 = vmatprep.subr.mxu0 0.0
    %3975 = vmatpush1.msra.mxu0 0.0
    %3976 = vmatprep.subr.mxu0 0.0
    %3977 = vmatpush1.msra.mxu0 0.0
    %3978 = vmatprep.subr.mxu0 0.0
    %3979 = vmatpush1.msra.mxu0 0.0
    %3980 = vmatprep.mubr.f32.mxu0 0.0
    %v3981 = vand.u32 %v3575, 4294901760
    %3982 = vmatmul.mubr.f32.gmra.mrb[0].mxu0 %v3981
    %v3983 = vpop.f32.mrb[0].mxu0
    %v3984 = vadd.f32 %v3901, %v3983
    %v3985 = vpop.f32.mrb[0].mxu0
    %3986 = vdwg.mxu0
    %3987 = vmatprep.subr.mxu0 0.0
    %v3988 = vand.u32 %v58, 4294901760
    %3989 = vmatpush1.msra.mxu0 %v3988
    %3990 = vmatprep.subr.mxu0 0.0
    %v3991 = vand.u32 %v59, 4294901760
    %3992 = vmatpush1.msra.mxu0 %v3991
    %3993 = vmatprep.subr.mxu0 0.0
    %v3994 = vand.u32 %v60, 4294901760
    %3995 = vmatpush1.msra.mxu0 %v3994
    %3996 = vmatprep.subr.mxu0 0.0
    %v3997 = vand.u32 %v61, 4294901760
    %3998 = vmatpush1.msra.mxu0 %v3997
    %3999 = vmatprep.subr.mxu0 0.0
    %4000 = vmatpush1.msra.mxu0 0.0
    %4001 = vmatprep.subr.mxu0 0.0
    %4002 = vmatpush1.msra.mxu0 0.0
    %4003 = vmatprep.subr.mxu0 0.0
    %4004 = vmatpush1.msra.mxu0 0.0
    %4005 = vmatprep.subr.mxu0 0.0
    %4006 = vmatpush1.msra.mxu0 0.0
    %4007 = vmatprep.subr.mxu0 0.0
    %4008 = vmatpush1.msra.mxu0 0.0
    %4009 = vmatprep.subr.mxu0 0.0
    %4010 = vmatpush1.msra.mxu0 0.0
    %4011 = vmatprep.subr.mxu0 0.0
    %4012 = vmatpush1.msra.mxu0 0.0
    %4013 = vmatprep.subr.mxu0 0.0
    %4014 = vmatpush1.msra.mxu0 0.0
    %4015 = vmatprep.subr.mxu0 0.0
    %4016 = vmatpush1.msra.mxu0 0.0
    %4017 = vmatprep.subr.mxu0 0.0
    %4018 = vmatpush1.msra.mxu0 0.0
    %4019 = vmatprep.subr.mxu0 0.0
    %4020 = vmatpush1.msra.mxu0 0.0
    %4021 = vmatprep.subr.mxu0 0.0
    %4022 = vmatpush1.msra.mxu0 0.0
    %4023 = vmatprep.subr.mxu0 0.0
    %4024 = vmatpush1.msra.mxu0 0.0
    %4025 = vmatprep.subr.mxu0 0.0
    %4026 = vmatpush1.msra.mxu0 0.0
    %4027 = vmatprep.subr.mxu0 0.0
    %4028 = vmatpush1.msra.mxu0 0.0
    %4029 = vmatprep.subr.mxu0 0.0
    %4030 = vmatpush1.msra.mxu0 0.0
    %4031 = vmatprep.subr.mxu0 0.0
    %4032 = vmatpush1.msra.mxu0 0.0
    %4033 = vmatprep.subr.mxu0 0.0
    %4034 = vmatpush1.msra.mxu0 0.0
    %4035 = vmatprep.subr.mxu0 0.0
    %4036 = vmatpush1.msra.mxu0 0.0
    %4037 = vmatprep.subr.mxu0 0.0
    %4038 = vmatpush1.msra.mxu0 0.0
    %4039 = vmatprep.subr.mxu0 0.0
    %4040 = vmatpush1.msra.mxu0 0.0
    %4041 = vmatprep.subr.mxu0 0.0
    %4042 = vmatpush1.msra.mxu0 0.0
    %4043 = vmatprep.subr.mxu0 0.0
    %4044 = vmatpush1.msra.mxu0 0.0
    %4045 = vmatprep.subr.mxu0 0.0
    %4046 = vmatpush1.msra.mxu0 0.0
    %4047 = vmatprep.subr.mxu0 0.0
    %4048 = vmatpush1.msra.mxu0 0.0
    %4049 = vmatprep.subr.mxu0 0.0
    %4050 = vmatpush1.msra.mxu0 0.0
    %4051 = vmatprep.subr.mxu0 0.0
    %4052 = vmatpush1.msra.mxu0 0.0
    %4053 = vmatprep.subr.mxu0 0.0
    %4054 = vmatpush1.msra.mxu0 0.0
    %4055 = vmatprep.mubr.f32.mxu0 0.0
    %v4056 = vand.u32 %v3575, 4294901760
    %4057 = vmatmul.mubr.f32.gmra.mrb[0].mxu0 %v4056
    %v4058 = vpop.f32.mrb[0].mxu0
    %v4059 = vadd.f32 %v3984, %v4058
    %v4060 = vpop.f32.mrb[0].mxu0
    %4061 = vdwg.mxu0
    %4063 = vrot.lane.b32.xlu0 %v4059, 96
    %v4064 = vpop.permute.xlu0 %4063
    %s4066 = scalar_lea.vmem %s4, 56
    %4067 = vst.msk [vmem:[%s4066] sm:$0xff] %vm558, %v4064
    // Predicated region
    $region30: #{tpu_custom_call.1} parent=1 // pred_check
      _
    $region31: #{tpu_custom_call.1} parent=1 // pred_check_branch
      %4069 = sbr.rel (0) target = $region33
    $region32: #{tpu_custom_call.1} parent=1 // pred_region
      _
    $region33: #{tpu_custom_call.1} parent=1 // pred_fallthru
      _
    // Predicated region
    $region34: #{tpu_custom_call.1} parent=1 // pred_check
      _
    $region35: #{tpu_custom_call.1} parent=1 // pred_check_branch
      %4071 = sbr.rel (0) target = $region37
    $region36: #{tpu_custom_call.1} parent=1 // pred_region
      _
    $region37: #{tpu_custom_call.1} parent=1 // pred_fallthru
      _
    %4072 = vsyncpa [#allocation4], 1
    %4073 = vsyncpa [#allocation6], 1

</llo_original>
